<compile_context>
chip_gen: v5e
topology: v5e:2x2
jax: 0.10.0
libtpu: 0.0.40
codegen_flags: <defaults>
</compile_context>

<pallas_src>
import jax
import jax.numpy as jnp
from jax.experimental import pallas as pl
from jax.experimental.pallas import tpu as pltpu

# ----- model hyper-parameters (small, consistent with the module signature) -----
VOCAB = 50            # vocab_size
VOCAB_PAD = 128       # lane-dense fc output width (sliced back to VOCAB in wrapper)
D_MODEL = 32          # embedding_dim
N_HEADS = 4           # num_heads
HEAD_DIM = D_MODEL // N_HEADS
N_LAYERS = 2          # num_layers
HIDDEN = 64           # hidden_dim (dim_feedforward)
SEQ = 8               # seq_length
BATCH = 2
LN_EPS = 1e-5         # PyTorch LayerNorm default
SCALE = 1.0 / (HEAD_DIM ** 0.5)
EMB_ROWS_PAD = ((VOCAB + 7) // 8) * 8                 # 56: 8-aligned embedding region
SLAB_LANES = 128


# ---------------------------------------------------------------------------
# Static slab layout: every tensor at an 8-row-aligned offset in one (R, 128) buffer.
# ---------------------------------------------------------------------------
def _build_layout():
    layout, cur = {}, 0

    def add(name, r, c):
        nonlocal cur
        layout[name] = (cur, r, c)
        cur += ((r + 7) // 8) * 8

    add('emb', VOCAB, D_MODEL)                  # rows 50..55 of the region stay zero
    add('pos', SEQ, D_MODEL)
    add('fc_w', D_MODEL, VOCAB_PAD)
    add('fc_b', 1, VOCAB_PAD)
    add('ca_kv_w', D_MODEL, 2 * N_LAYERS * D_MODEL)   # both layers' K|V, lane-dense 128
    add('ca_kv_b', 1, 2 * N_LAYERS * D_MODEL)
    for l in range(N_LAYERS):
        add(f'sa_w_{l}', D_MODEL, 3 * D_MODEL)        # fused QKV in_proj (in, out)
        add(f'sa_b_{l}', 1, 3 * D_MODEL)
        add(f'sa_ow_{l}', D_MODEL, D_MODEL)
        add(f'sa_ob_{l}', 1, D_MODEL)
        add(f'ca_qw_{l}', D_MODEL, D_MODEL)           # cross-attn Q projection only
        add(f'ca_qb_{l}', 1, D_MODEL)
        add(f'ca_ow_{l}', D_MODEL, D_MODEL)
        add(f'ca_ob_{l}', 1, D_MODEL)
        add(f'ln_{l}', 6, D_MODEL)                    # ln1_g,ln1_b,ln2_g,ln2_b,ln3_g,ln3_b
        add(f'w1_{l}', D_MODEL, HIDDEN)
        add(f'b1_{l}', 1, HIDDEN)
        add(f'w2_{l}', HIDDEN, D_MODEL)
        add(f'b2_{l}', 1, D_MODEL)
    return layout, cur


LAYOUT, SLAB_ROWS = _build_layout()


# ---------------------------------------------------------------------------
# In-kernel math helpers (traced inside the fused Pallas kernel body)
# ---------------------------------------------------------------------------
def _layernorm(v, g, b):
    mu = jnp.mean(v, axis=-1, keepdims=True)
    c = v - mu
    var = jnp.mean(c * c, axis=-1, keepdims=True)
    return c * jax.lax.rsqrt(var + LN_EPS) * g + b


def _attention(q_scaled, k, v, out_w, out_b):
    """Multi-head attention on (M, D) activations, M = B*S.

    Heads and batch are merged into ONE batch axis (order h-major, b-minor) so the
    score / softmax / PV path is a single batched einsum each. q is pre-scaled by
    1/sqrt(head_dim). The output projection folds each head's sublane slice of out_w
    (identical to concat-then-project, with no lane-axis concatenation).
    """
    m = q_scaled.shape[0]
    b = m // SEQ

    def split_heads(t):                                  # (M, D) -> (H*B, S, hd)
        parts = [t[:, h * HEAD_DIM:(h + 1) * HEAD_DIM].reshape(b, SEQ, HEAD_DIM)
                 for h in range(N_HEADS)]
        return jnp.concatenate(parts, axis=0)

    qh, kh, vh = split_heads(q_scaled), split_heads(k), split_heads(v)
    s = jnp.einsum('bqd,bkd->bqk', qh, kh, preferred_element_type=jnp.float32)
    s = s - jnp.max(s, axis=-1, keepdims=True)
    p = jnp.exp(s)
    p = p * pl.reciprocal(jnp.sum(p, axis=-1, keepdims=True), approx=True)
    o = jnp.einsum('bqk,bkd->bqd', p, vh, preferred_element_type=jnp.float32)  # (H*B,S,hd)

    acc = None
    for h in range(N_HEADS):                             # tiny static unroll (projection)
        oh = o[h * b:(h + 1) * b].reshape(m, HEAD_DIM)
        part = jnp.dot(oh, out_w[h * HEAD_DIM:(h + 1) * HEAD_DIM, :],
                       preferred_element_type=jnp.float32)
        acc = part if acc is None else acc + part
    return acc + out_b


# ---------------------------------------------------------------------------
# Fused Pallas kernel: embedding + pos-enc + N_LAYERS decoder layers + fc, all from
# one VMEM-resident weight slab. Single grid-less invocation.
# ---------------------------------------------------------------------------
def fused_forward_kernel(tok_ref, w_ref, out_ref):
    m = tok_ref.shape[0]                 # B*S
    b = m // SEQ

    def W(name):
        off, r, c = LAYOUT[name]
        return w_ref[off:off + r, :c]

    # ---- embedding gather (one-hot MXU matmul) + positional encoding ----
    tok = tok_ref[...]                                                  # (M, 1) int32
    col = jax.lax.broadcasted_iota(jnp.int32, (m, EMB_ROWS_PAD), 1)
    onehot = (col == tok).astype(jnp.float32)                           # (M, 56)
    off_e = LAYOUT['emb'][0]
    emb_tab = w_ref[off_e:off_e + EMB_ROWS_PAD, :D_MODEL]               # zero-padded rows
    x = jnp.dot(onehot, emb_tab, preferred_element_type=jnp.float32)    # (M, D)
    x = (x.reshape(b, SEQ, D_MODEL) + W('pos')).reshape(m, D_MODEL)
    mem = x                              # memory == embedded input (see header note)

    # ---- hoisted, layer-invariant cross-attention K/V (both layers, one matmul) ----
    kv_all = jnp.dot(mem, W('ca_kv_w'),
                     preferred_element_type=jnp.float32) + W('ca_kv_b')  # (M, 128)

    for l in range(N_LAYERS):            # static unroll over the 2 decoder layers
        ln = W(f'ln_{l}')                # (6, D): gamma/beta rows for norm1/2/3
        # ---- self-attention block (post-norm residual), fused QKV matmul ----
        qkv = jnp.dot(x, W(f'sa_w_{l}'),
                      preferred_element_type=jnp.float32) + W(f'sa_b_{l}')
        sa = _attention(qkv[:, :D_MODEL] * SCALE,
                        qkv[:, D_MODEL:2 * D_MODEL],
                        qkv[:, 2 * D_MODEL:],
                        W(f'sa_ow_{l}'), W(f'sa_ob_{l}'))
        x = _layernorm(x + sa, ln[0:1], ln[1:2])
        # ---- cross-attention block (memory == embedded sequence; K/V precomputed) ----
        cq = (jnp.dot(x, W(f'ca_qw_{l}'),
                      preferred_element_type=jnp.float32) + W(f'ca_qb_{l}')) * SCALE
        ck = kv_all[:, 2 * l * D_MODEL:(2 * l + 1) * D_MODEL]
        cv = kv_all[:, (2 * l + 1) * D_MODEL:(2 * l + 2) * D_MODEL]
        ca = _attention(cq, ck, cv, W(f'ca_ow_{l}'), W(f'ca_ob_{l}'))
        x = _layernorm(x + ca, ln[2:3], ln[3:4])
        # ---- last layer: only the last-token rows feed fc -> narrow FFN/LN3 ----
        if l == N_LAYERS - 1:
            x = x.reshape(b, SEQ, D_MODEL)[:, SEQ - 1, :]               # (B, D)
        # ---- feed-forward block: linear2(relu(linear1(x))) ----
        h = jnp.dot(x, W(f'w1_{l}'), preferred_element_type=jnp.float32) + W(f'b1_{l}')
        h = jnp.maximum(h, 0.0)
        ff = jnp.dot(h, W(f'w2_{l}'), preferred_element_type=jnp.float32) + W(f'b2_{l}')
        x = _layernorm(x + ff, ln[4:5], ln[5:6])

    # eval mode: self.dropout(0.3) and all in-layer dropouts are identity.
    logits = jnp.dot(x, W('fc_w'), preferred_element_type=jnp.float32) + W('fc_b')
    out_ref[...] = logits.astype(out_ref.dtype)          # (B, 128) lane-dense store


# ---------------------------------------------------------------------------
# pallas_call wrapper (single grid-less call, two input DMAs: tokens + weight slab)
# ---------------------------------------------------------------------------
@jax.jit
def mr_teddy_td_forward(tokens, slab):
    b, s = tokens.shape
    tok2d = tokens.reshape(b * s, 1).astype(jnp.int32)     # (M, 1) for in-kernel gather
    vmem = pltpu.MemorySpace.VMEM
    logits_pad = pl.pallas_call(
        fused_forward_kernel,
        out_shape=jax.ShapeDtypeStruct((b, VOCAB_PAD), jnp.float32),
        in_specs=[pl.BlockSpec(memory_space=vmem),
                  pl.BlockSpec(memory_space=vmem)],
        out_specs=pl.BlockSpec(memory_space=vmem),
    )(tok2d, slab)
    return logits_pad[:, :VOCAB]                           # (B, VOCAB)


# ---------------------------------------------------------------------------
# Parameter construction (PyTorch layout) + one-time packing into the kernel slab
# ---------------------------------------------------------------------------
def init_params(key):
    def nrm(k, shape, scale=0.02):
        return (scale * jax.random.normal(k, shape)).astype(jnp.float32)

    keys = iter(jax.random.split(key, 8 + N_LAYERS * 16))
    params = {
        'embedding': nrm(next(keys), (VOCAB, D_MODEL), 1.0),
        'pos_enc': nrm(next(keys), (1, SEQ, D_MODEL)),
        'fc_w': nrm(next(keys), (VOCAB, D_MODEL)),            # PyTorch (out, in)
        'fc_b': nrm(next(keys), (1, VOCAB)),
        'layers': [],
    }
    for _ in range(N_LAYERS):
        layer = (
            nrm(next(keys), (3 * D_MODEL, D_MODEL)),   # 0  self-attn in_proj weight
            nrm(next(keys), (1, 3 * D_MODEL)),         # 1  self-attn in_proj bias
            nrm(next(keys), (D_MODEL, D_MODEL)),       # 2  self-attn out_proj weight
            nrm(next(keys), (1, D_MODEL)),             # 3  self-attn out_proj bias
            nrm(next(keys), (3 * D_MODEL, D_MODEL)),   # 4  cross-attn in_proj weight
            nrm(next(keys), (1, 3 * D_MODEL)),         # 5  cross-attn in_proj bias
            nrm(next(keys), (D_MODEL, D_MODEL)),       # 6  cross-attn out_proj weight
            nrm(next(keys), (1, D_MODEL)),             # 7  cross-attn out_proj bias
            jnp.ones((1, D_MODEL), jnp.float32),       # 8  norm1 gamma
            jnp.zeros((1, D_MODEL), jnp.float32),      # 9  norm1 beta
            jnp.ones((1, D_MODEL), jnp.float32),       # 10 norm2 gamma
            jnp.zeros((1, D_MODEL), jnp.float32),      # 11 norm2 beta
            jnp.ones((1, D_MODEL), jnp.float32),       # 12 norm3 gamma
            jnp.zeros((1, D_MODEL), jnp.float32),      # 13 norm3 beta
            nrm(next(keys), (HIDDEN, D_MODEL)),        # 14 linear1 weight
            nrm(next(keys), (1, HIDDEN)),              # 15 linear1 bias
            nrm(next(keys), (D_MODEL, HIDDEN)),        # 16 linear2 weight
            nrm(next(keys), (1, D_MODEL)),             # 17 linear2 bias
        )
        params['layers'].append(layer)
    return params


def pack_params(params):
    """Pack every tensor (weights pre-transposed to (in, out)) into one f32
    (SLAB_ROWS, 128) slab at the static, 8-row-aligned offsets in LAYOUT."""
    slab = jnp.zeros((SLAB_ROWS, SLAB_LANES), jnp.float32)

    def put(s, name, arr):
        off, r, c = LAYOUT[name]
        assert arr.shape == (r, c), (name, arr.shape, (r, c))
        return s.at[off:off + r, :c].set(arr.astype(jnp.float32))

    slab = put(slab, 'emb', params['embedding'])
    slab = put(slab, 'pos', params['pos_enc'][0])
    slab = put(slab, 'fc_w', jnp.pad(params['fc_w'].T, ((0, 0), (0, VOCAB_PAD - VOCAB))))
    slab = put(slab, 'fc_b', jnp.pad(params['fc_b'], ((0, 0), (0, VOCAB_PAD - VOCAB))))

    # hoisted cross-attn K/V weights: both layers' (K|V) columns concatenated lane-dense
    kvw = jnp.concatenate([params['layers'][l][4].T[:, D_MODEL:] for l in range(N_LAYERS)],
                          axis=1)
    kvb = jnp.concatenate([params['layers'][l][5][:, D_MODEL:] for l in range(N_LAYERS)],
                          axis=1)
    slab = put(slab, 'ca_kv_w', kvw)
    slab = put(slab, 'ca_kv_b', kvb)

    for l in range(N_LAYERS):
        L = params['layers'][l]
        slab = put(slab, f'sa_w_{l}', L[0].T)
        slab = put(slab, f'sa_b_{l}', L[1])
        slab = put(slab, f'sa_ow_{l}', L[2].T)
        slab = put(slab, f'sa_ob_{l}', L[3])
        slab = put(slab, f'ca_qw_{l}', L[4].T[:, :D_MODEL])
        slab = put(slab, f'ca_qb_{l}', L[5][:, :D_MODEL])
        slab = put(slab, f'ca_ow_{l}', L[6].T)
        slab = put(slab, f'ca_ob_{l}', L[7])
        slab = put(slab, f'ln_{l}',
                   jnp.concatenate([L[8], L[9], L[10], L[11], L[12], L[13]], axis=0))
        slab = put(slab, f'w1_{l}', L[14].T)
        slab = put(slab, f'b1_{l}', L[15])
        slab = put(slab, f'w2_{l}', L[16].T)
        slab = put(slab, f'b2_{l}', L[17])
    return slab


if __name__ == "__main__":
    key = jax.random.PRNGKey(0)
    pkey, tkey = jax.random.split(key)
    params = init_params(pkey)
    slab = pack_params(params)
    tokens = jax.random.randint(tkey, (BATCH, SEQ), 0, VOCAB, dtype=jnp.int32)

    logits = mr_teddy_td_forward(tokens, slab)
    logits = jax.block_until_ready(logits)

    assert logits.shape == (BATCH, VOCAB), logits.shape
    assert logits.dtype == jnp.float32
    assert bool(jnp.all(jnp.isfinite(logits)))
    print("KERNEL_OK")
</pallas_src>

<mosaic_0001>
module attributes {stable_mosaic.version = 11 : i64} {
  func.func @fused_forward_kernel(%arg0: memref<16x1xi32, #tpu.memory_space<vmem>>, %arg1: memref<704x128xf32, #tpu.memory_space<vmem>>, %arg2: memref<2x128xf32, #tpu.memory_space<vmem>>) attributes {dimension_semantics = [], scalar_prefetch = 0 : i64, scratch_operands = 0 : i64, tpu.core_type = #tpu.core_type<tc>} {
    %c0 = arith.constant 0 : index
    %c0_0 = arith.constant 0 : index
    %0 = vector.load %arg0[%c0, %c0_0] : memref<16x1xi32, #tpu.memory_space<vmem>>, vector<16x1xi32>
    %1 = tpu.iota {dimensions = array<i32: 1>} : vector<16x56xi32>
    %2 = vector.broadcast %0 : vector<16x1xi32> to vector<16x56xi32>
    %3 = arith.cmpi eq, %1, %2 : vector<16x56xi32>
    %4 = arith.extui %3 : vector<16x56xi1> to vector<16x56xi32>
    %5 = arith.sitofp %4 : vector<16x56xi32> to vector<16x56xf32>
    %c0_1 = arith.constant 0 : index
    %c0_2 = arith.constant 0 : index
    %6 = vector.load %arg1[%c0_1, %c0_2] : memref<704x128xf32, #tpu.memory_space<vmem>>, vector<56x32xf32>
    %cst = arith.constant dense<0.000000e+00> : vector<16x32xf32>
    %7 = tpu.matmul %5, %6, %cst {dimension_numbers = #tpu.dot_dimension_numbers<[1], [0], [0], [1], [0, 0, 1, 1], [], []>} : vector<16x56xf32>, vector<56x32xf32>, vector<16x32xf32> -> vector<16x32xf32>
    %8 = vector.shape_cast %7 : vector<16x32xf32> to vector<2x8x32xf32>
    %c56 = arith.constant 56 : index
    %c0_3 = arith.constant 0 : index
    %9 = vector.load %arg1[%c56, %c0_3] : memref<704x128xf32, #tpu.memory_space<vmem>>, vector<8x32xf32>
    %10 = vector.shape_cast %9 : vector<8x32xf32> to vector<1x8x32xf32>
    %11 = vector.broadcast %10 : vector<1x8x32xf32> to vector<2x8x32xf32>
    %12 = arith.addf %8, %11 : vector<2x8x32xf32>
    %13 = vector.shape_cast %12 : vector<2x8x32xf32> to vector<16x32xf32>
    %c104 = arith.constant 104 : index
    %c0_4 = arith.constant 0 : index
    %14 = vector.load %arg1[%c104, %c0_4] : memref<704x128xf32, #tpu.memory_space<vmem>>, vector<32x128xf32>
    %cst_5 = arith.constant dense<0.000000e+00> : vector<16x128xf32>
    %15 = tpu.matmul %13, %14, %cst_5 {dimension_numbers = #tpu.dot_dimension_numbers<[1], [0], [0], [1], [0, 0, 1, 1], [], []>} : vector<16x32xf32>, vector<32x128xf32>, vector<16x128xf32> -> vector<16x128xf32>
    %c136 = arith.constant 136 : index
    %c0_6 = arith.constant 0 : index
    %16 = vector.load %arg1[%c136, %c0_6] : memref<704x128xf32, #tpu.memory_space<vmem>>, vector<1x128xf32>
    %17 = vector.broadcast %16 : vector<1x128xf32> to vector<16x128xf32>
    %18 = arith.addf %15, %17 : vector<16x128xf32>
    %c304 = arith.constant 304 : index
    %c0_7 = arith.constant 0 : index
    %19 = vector.load %arg1[%c304, %c0_7] : memref<704x128xf32, #tpu.memory_space<vmem>>, vector<6x32xf32>
    %c144 = arith.constant 144 : index
    %c0_8 = arith.constant 0 : index
    %20 = vector.load %arg1[%c144, %c0_8] : memref<704x128xf32, #tpu.memory_space<vmem>>, vector<32x96xf32>
    %cst_9 = arith.constant dense<0.000000e+00> : vector<16x96xf32>
    %21 = tpu.matmul %13, %20, %cst_9 {dimension_numbers = #tpu.dot_dimension_numbers<[1], [0], [0], [1], [0, 0, 1, 1], [], []>} : vector<16x32xf32>, vector<32x96xf32>, vector<16x96xf32> -> vector<16x96xf32>
    %c176 = arith.constant 176 : index
    %c0_10 = arith.constant 0 : index
    %22 = vector.load %arg1[%c176, %c0_10] : memref<704x128xf32, #tpu.memory_space<vmem>>, vector<1x96xf32>
    %23 = vector.broadcast %22 : vector<1x96xf32> to vector<16x96xf32>
    %24 = arith.addf %21, %23 : vector<16x96xf32>
    %25 = vector.extract_strided_slice %24 {offsets = [0, 0], sizes = [16, 32], strides = [1, 1]} : vector<16x96xf32> to vector<16x32xf32>
    %cst_11 = arith.constant 0.353553385 : f32
    %26 = vector.broadcast %cst_11 : f32 to vector<16x32xf32>
    %27 = arith.mulf %25, %26 : vector<16x32xf32>
    %28 = vector.extract_strided_slice %24 {offsets = [0, 32], sizes = [16, 32], strides = [1, 1]} : vector<16x96xf32> to vector<16x32xf32>
    %29 = vector.extract_strided_slice %24 {offsets = [0, 64], sizes = [16, 32], strides = [1, 1]} : vector<16x96xf32> to vector<16x32xf32>
    %c184 = arith.constant 184 : index
    %c0_12 = arith.constant 0 : index
    %30 = vector.load %arg1[%c184, %c0_12] : memref<704x128xf32, #tpu.memory_space<vmem>>, vector<32x32xf32>
    %c216 = arith.constant 216 : index
    %c0_13 = arith.constant 0 : index
    %31 = vector.load %arg1[%c216, %c0_13] : memref<704x128xf32, #tpu.memory_space<vmem>>, vector<1x32xf32>
    %32 = vector.extract_strided_slice %27 {offsets = [0, 0], sizes = [16, 8], strides = [1, 1]} : vector<16x32xf32> to vector<16x8xf32>
    %33 = vector.shape_cast %32 : vector<16x8xf32> to vector<2x8x8xf32>
    %34 = vector.extract_strided_slice %27 {offsets = [0, 8], sizes = [16, 8], strides = [1, 1]} : vector<16x32xf32> to vector<16x8xf32>
    %35 = vector.shape_cast %34 : vector<16x8xf32> to vector<2x8x8xf32>
    %36 = vector.extract_strided_slice %27 {offsets = [0, 16], sizes = [16, 8], strides = [1, 1]} : vector<16x32xf32> to vector<16x8xf32>
    %37 = vector.shape_cast %36 : vector<16x8xf32> to vector<2x8x8xf32>
    %38 = vector.extract_strided_slice %27 {offsets = [0, 24], sizes = [16, 8], strides = [1, 1]} : vector<16x32xf32> to vector<16x8xf32>
    %39 = vector.shape_cast %38 : vector<16x8xf32> to vector<2x8x8xf32>
    %40 = tpu.concatenate %33, %35, %37, %39 in 0 : vector<2x8x8xf32>, vector<2x8x8xf32>, vector<2x8x8xf32>, vector<2x8x8xf32> -> vector<8x8x8xf32>
    %41 = vector.extract_strided_slice %28 {offsets = [0, 0], sizes = [16, 8], strides = [1, 1]} : vector<16x32xf32> to vector<16x8xf32>
    %42 = vector.shape_cast %41 : vector<16x8xf32> to vector<2x8x8xf32>
    %43 = vector.extract_strided_slice %28 {offsets = [0, 8], sizes = [16, 8], strides = [1, 1]} : vector<16x32xf32> to vector<16x8xf32>
    %44 = vector.shape_cast %43 : vector<16x8xf32> to vector<2x8x8xf32>
    %45 = vector.extract_strided_slice %28 {offsets = [0, 16], sizes = [16, 8], strides = [1, 1]} : vector<16x32xf32> to vector<16x8xf32>
    %46 = vector.shape_cast %45 : vector<16x8xf32> to vector<2x8x8xf32>
    %47 = vector.extract_strided_slice %28 {offsets = [0, 24], sizes = [16, 8], strides = [1, 1]} : vector<16x32xf32> to vector<16x8xf32>
    %48 = vector.shape_cast %47 : vector<16x8xf32> to vector<2x8x8xf32>
    %49 = tpu.concatenate %42, %44, %46, %48 in 0 : vector<2x8x8xf32>, vector<2x8x8xf32>, vector<2x8x8xf32>, vector<2x8x8xf32> -> vector<8x8x8xf32>
    %50 = vector.extract_strided_slice %29 {offsets = [0, 0], sizes = [16, 8], strides = [1, 1]} : vector<16x32xf32> to vector<16x8xf32>
    %51 = vector.shape_cast %50 : vector<16x8xf32> to vector<2x8x8xf32>
    %52 = vector.extract_strided_slice %29 {offsets = [0, 8], sizes = [16, 8], strides = [1, 1]} : vector<16x32xf32> to vector<16x8xf32>
    %53 = vector.shape_cast %52 : vector<16x8xf32> to vector<2x8x8xf32>
    %54 = vector.extract_strided_slice %29 {offsets = [0, 16], sizes = [16, 8], strides = [1, 1]} : vector<16x32xf32> to vector<16x8xf32>
    %55 = vector.shape_cast %54 : vector<16x8xf32> to vector<2x8x8xf32>
    %56 = vector.extract_strided_slice %29 {offsets = [0, 24], sizes = [16, 8], strides = [1, 1]} : vector<16x32xf32> to vector<16x8xf32>
    %57 = vector.shape_cast %56 : vector<16x8xf32> to vector<2x8x8xf32>
    %58 = tpu.concatenate %51, %53, %55, %57 in 0 : vector<2x8x8xf32>, vector<2x8x8xf32>, vector<2x8x8xf32>, vector<2x8x8xf32> -> vector<8x8x8xf32>
    "tpu.trace_start"() <{level = 10 : i32, message = "bqd,bkd->bqk"}> : () -> ()
    %cst_14 = arith.constant dense<0.000000e+00> : vector<8x8x8xf32>
    %59 = tpu.matmul %40, %49, %cst_14 {dimension_numbers = #tpu.dot_dimension_numbers<[2], [2], [1], [1], [0, 0, 0, 1, 1, 1], [0], [0]>} : vector<8x8x8xf32>, vector<8x8x8xf32>, vector<8x8x8xf32> -> vector<8x8x8xf32>
    "tpu.trace_stop"() : () -> ()
    %cst_15 = arith.constant dense<0xFF800000> : vector<8x8xf32>
    %60 = vector.multi_reduction <maximumf>, %59, %cst_15 [2] : vector<8x8x8xf32> to vector<8x8xf32>
    %61 = vector.shape_cast %60 : vector<8x8xf32> to vector<8x8x1xf32>
    %62 = vector.broadcast %61 : vector<8x8x1xf32> to vector<8x8x8xf32>
    %63 = arith.subf %59, %62 : vector<8x8x8xf32>
    %64 = math.exp %63 : vector<8x8x8xf32>
    %cst_16 = arith.constant dense<0.000000e+00> : vector<8x8xf32>
    %65 = vector.multi_reduction <add>, %64, %cst_16 [2] : vector<8x8x8xf32> to vector<8x8xf32>
    %66 = vector.shape_cast %65 : vector<8x8xf32> to vector<8x8x1xf32>
    %67 = tpu.reciprocal %66 {approx = true} : vector<8x8x1xf32> -> vector<8x8x1xf32>
    %68 = vector.broadcast %67 : vector<8x8x1xf32> to vector<8x8x8xf32>
    %69 = arith.mulf %64, %68 : vector<8x8x8xf32>
    "tpu.trace_start"() <{level = 10 : i32, message = "bqk,bkd->bqd"}> : () -> ()
    %cst_17 = arith.constant dense<0.000000e+00> : vector<8x8x8xf32>
    %70 = tpu.matmul %69, %58, %cst_17 {dimension_numbers = #tpu.dot_dimension_numbers<[2], [1], [1], [2], [0, 0, 0, 1, 1, 2], [0], [0]>} : vector<8x8x8xf32>, vector<8x8x8xf32>, vector<8x8x8xf32> -> vector<8x8x8xf32>
    "tpu.trace_stop"() : () -> ()
    %71 = vector.extract_strided_slice %70 {offsets = [0, 0, 0], sizes = [2, 8, 8], strides = [1, 1, 1]} : vector<8x8x8xf32> to vector<2x8x8xf32>
    %72 = vector.shape_cast %71 : vector<2x8x8xf32> to vector<16x8xf32>
    %73 = vector.extract_strided_slice %30 {offsets = [0, 0], sizes = [8, 32], strides = [1, 1]} : vector<32x32xf32> to vector<8x32xf32>
    %cst_18 = arith.constant dense<0.000000e+00> : vector<16x32xf32>
    %74 = tpu.matmul %72, %73, %cst_18 {dimension_numbers = #tpu.dot_dimension_numbers<[1], [0], [0], [1], [0, 0, 1, 1], [], []>} : vector<16x8xf32>, vector<8x32xf32>, vector<16x32xf32> -> vector<16x32xf32>
    %75 = vector.extract_strided_slice %70 {offsets = [2, 0, 0], sizes = [2, 8, 8], strides = [1, 1, 1]} : vector<8x8x8xf32> to vector<2x8x8xf32>
    %76 = vector.shape_cast %75 : vector<2x8x8xf32> to vector<16x8xf32>
    %77 = vector.extract_strided_slice %30 {offsets = [8, 0], sizes = [8, 32], strides = [1, 1]} : vector<32x32xf32> to vector<8x32xf32>
    %cst_19 = arith.constant dense<0.000000e+00> : vector<16x32xf32>
    %78 = tpu.matmul %76, %77, %cst_19 {dimension_numbers = #tpu.dot_dimension_numbers<[1], [0], [0], [1], [0, 0, 1, 1], [], []>} : vector<16x8xf32>, vector<8x32xf32>, vector<16x32xf32> -> vector<16x32xf32>
    %79 = arith.addf %74, %78 : vector<16x32xf32>
    %80 = vector.extract_strided_slice %70 {offsets = [4, 0, 0], sizes = [2, 8, 8], strides = [1, 1, 1]} : vector<8x8x8xf32> to vector<2x8x8xf32>
    %81 = vector.shape_cast %80 : vector<2x8x8xf32> to vector<16x8xf32>
    %82 = vector.extract_strided_slice %30 {offsets = [16, 0], sizes = [8, 32], strides = [1, 1]} : vector<32x32xf32> to vector<8x32xf32>
    %cst_20 = arith.constant dense<0.000000e+00> : vector<16x32xf32>
    %83 = tpu.matmul %81, %82, %cst_20 {dimension_numbers = #tpu.dot_dimension_numbers<[1], [0], [0], [1], [0, 0, 1, 1], [], []>} : vector<16x8xf32>, vector<8x32xf32>, vector<16x32xf32> -> vector<16x32xf32>
    %84 = arith.addf %79, %83 : vector<16x32xf32>
    %85 = vector.extract_strided_slice %70 {offsets = [6, 0, 0], sizes = [2, 8, 8], strides = [1, 1, 1]} : vector<8x8x8xf32> to vector<2x8x8xf32>
    %86 = vector.shape_cast %85 : vector<2x8x8xf32> to vector<16x8xf32>
    %87 = vector.extract_strided_slice %30 {offsets = [24, 0], sizes = [8, 32], strides = [1, 1]} : vector<32x32xf32> to vector<8x32xf32>
    %cst_21 = arith.constant dense<0.000000e+00> : vector<16x32xf32>
    %88 = tpu.matmul %86, %87, %cst_21 {dimension_numbers = #tpu.dot_dimension_numbers<[1], [0], [0], [1], [0, 0, 1, 1], [], []>} : vector<16x8xf32>, vector<8x32xf32>, vector<16x32xf32> -> vector<16x32xf32>
    %89 = arith.addf %84, %88 : vector<16x32xf32>
    %90 = vector.broadcast %31 : vector<1x32xf32> to vector<16x32xf32>
    %91 = arith.addf %89, %90 : vector<16x32xf32>
    %92 = arith.addf %13, %91 : vector<16x32xf32>
    %93 = vector.extract_strided_slice %19 {offsets = [0, 0], sizes = [1, 32], strides = [1, 1]} : vector<6x32xf32> to vector<1x32xf32>
    %94 = vector.extract_strided_slice %19 {offsets = [1, 0], sizes = [1, 32], strides = [1, 1]} : vector<6x32xf32> to vector<1x32xf32>
    %cst_22 = arith.constant dense<0.000000e+00> : vector<16xf32>
    %95 = vector.multi_reduction <add>, %92, %cst_22 [1] : vector<16x32xf32> to vector<16xf32>
    %96 = vector.shape_cast %95 : vector<16xf32> to vector<16x1xf32>
    %cst_23 = arith.constant 3.200000e+01 : f32
    %97 = vector.broadcast %cst_23 : f32 to vector<16x1xf32>
    %98 = arith.divf %96, %97 : vector<16x1xf32>
    %99 = vector.broadcast %98 : vector<16x1xf32> to vector<16x32xf32>
    %100 = arith.subf %92, %99 : vector<16x32xf32>
    %101 = arith.mulf %100, %100 : vector<16x32xf32>
    %cst_24 = arith.constant dense<0.000000e+00> : vector<16xf32>
    %102 = vector.multi_reduction <add>, %101, %cst_24 [1] : vector<16x32xf32> to vector<16xf32>
    %103 = vector.shape_cast %102 : vector<16xf32> to vector<16x1xf32>
    %cst_25 = arith.constant 3.200000e+01 : f32
    %104 = vector.broadcast %cst_25 : f32 to vector<16x1xf32>
    %105 = arith.divf %103, %104 : vector<16x1xf32>
    %cst_26 = arith.constant 9.99999974E-6 : f32
    %106 = vector.broadcast %cst_26 : f32 to vector<16x1xf32>
    %107 = arith.addf %105, %106 : vector<16x1xf32>
    %108 = math.rsqrt %107 : vector<16x1xf32>
    %109 = vector.broadcast %108 : vector<16x1xf32> to vector<16x32xf32>
    %110 = arith.mulf %100, %109 : vector<16x32xf32>
    %111 = vector.broadcast %93 : vector<1x32xf32> to vector<16x32xf32>
    %112 = arith.mulf %110, %111 : vector<16x32xf32>
    %113 = vector.broadcast %94 : vector<1x32xf32> to vector<16x32xf32>
    %114 = arith.addf %112, %113 : vector<16x32xf32>
    %c224 = arith.constant 224 : index
    %c0_27 = arith.constant 0 : index
    %115 = vector.load %arg1[%c224, %c0_27] : memref<704x128xf32, #tpu.memory_space<vmem>>, vector<32x32xf32>
    %cst_28 = arith.constant dense<0.000000e+00> : vector<16x32xf32>
    %116 = tpu.matmul %114, %115, %cst_28 {dimension_numbers = #tpu.dot_dimension_numbers<[1], [0], [0], [1], [0, 0, 1, 1], [], []>} : vector<16x32xf32>, vector<32x32xf32>, vector<16x32xf32> -> vector<16x32xf32>
    %c256 = arith.constant 256 : index
    %c0_29 = arith.constant 0 : index
    %117 = vector.load %arg1[%c256, %c0_29] : memref<704x128xf32, #tpu.memory_space<vmem>>, vector<1x32xf32>
    %118 = vector.broadcast %117 : vector<1x32xf32> to vector<16x32xf32>
    %119 = arith.addf %116, %118 : vector<16x32xf32>
    %cst_30 = arith.constant 0.353553385 : f32
    %120 = vector.broadcast %cst_30 : f32 to vector<16x32xf32>
    %121 = arith.mulf %119, %120 : vector<16x32xf32>
    %122 = vector.extract_strided_slice %18 {offsets = [0, 0], sizes = [16, 32], strides = [1, 1]} : vector<16x128xf32> to vector<16x32xf32>
    %123 = vector.extract_strided_slice %18 {offsets = [0, 32], sizes = [16, 32], strides = [1, 1]} : vector<16x128xf32> to vector<16x32xf32>
    %c264 = arith.constant 264 : index
    %c0_31 = arith.constant 0 : index
    %124 = vector.load %arg1[%c264, %c0_31] : memref<704x128xf32, #tpu.memory_space<vmem>>, vector<32x32xf32>
    %c296 = arith.constant 296 : index
    %c0_32 = arith.constant 0 : index
    %125 = vector.load %arg1[%c296, %c0_32] : memref<704x128xf32, #tpu.memory_space<vmem>>, vector<1x32xf32>
    %126 = vector.extract_strided_slice %121 {offsets = [0, 0], sizes = [16, 8], strides = [1, 1]} : vector<16x32xf32> to vector<16x8xf32>
    %127 = vector.shape_cast %126 : vector<16x8xf32> to vector<2x8x8xf32>
    %128 = vector.extract_strided_slice %121 {offsets = [0, 8], sizes = [16, 8], strides = [1, 1]} : vector<16x32xf32> to vector<16x8xf32>
    %129 = vector.shape_cast %128 : vector<16x8xf32> to vector<2x8x8xf32>
    %130 = vector.extract_strided_slice %121 {offsets = [0, 16], sizes = [16, 8], strides = [1, 1]} : vector<16x32xf32> to vector<16x8xf32>
    %131 = vector.shape_cast %130 : vector<16x8xf32> to vector<2x8x8xf32>
    %132 = vector.extract_strided_slice %121 {offsets = [0, 24], sizes = [16, 8], strides = [1, 1]} : vector<16x32xf32> to vector<16x8xf32>
    %133 = vector.shape_cast %132 : vector<16x8xf32> to vector<2x8x8xf32>
    %134 = tpu.concatenate %127, %129, %131, %133 in 0 : vector<2x8x8xf32>, vector<2x8x8xf32>, vector<2x8x8xf32>, vector<2x8x8xf32> -> vector<8x8x8xf32>
    %135 = vector.extract_strided_slice %122 {offsets = [0, 0], sizes = [16, 8], strides = [1, 1]} : vector<16x32xf32> to vector<16x8xf32>
    %136 = vector.shape_cast %135 : vector<16x8xf32> to vector<2x8x8xf32>
    %137 = vector.extract_strided_slice %122 {offsets = [0, 8], sizes = [16, 8], strides = [1, 1]} : vector<16x32xf32> to vector<16x8xf32>
    %138 = vector.shape_cast %137 : vector<16x8xf32> to vector<2x8x8xf32>
    %139 = vector.extract_strided_slice %122 {offsets = [0, 16], sizes = [16, 8], strides = [1, 1]} : vector<16x32xf32> to vector<16x8xf32>
    %140 = vector.shape_cast %139 : vector<16x8xf32> to vector<2x8x8xf32>
    %141 = vector.extract_strided_slice %122 {offsets = [0, 24], sizes = [16, 8], strides = [1, 1]} : vector<16x32xf32> to vector<16x8xf32>
    %142 = vector.shape_cast %141 : vector<16x8xf32> to vector<2x8x8xf32>
    %143 = tpu.concatenate %136, %138, %140, %142 in 0 : vector<2x8x8xf32>, vector<2x8x8xf32>, vector<2x8x8xf32>, vector<2x8x8xf32> -> vector<8x8x8xf32>
    %144 = vector.extract_strided_slice %123 {offsets = [0, 0], sizes = [16, 8], strides = [1, 1]} : vector<16x32xf32> to vector<16x8xf32>
    %145 = vector.shape_cast %144 : vector<16x8xf32> to vector<2x8x8xf32>
    %146 = vector.extract_strided_slice %123 {offsets = [0, 8], sizes = [16, 8], strides = [1, 1]} : vector<16x32xf32> to vector<16x8xf32>
    %147 = vector.shape_cast %146 : vector<16x8xf32> to vector<2x8x8xf32>
    %148 = vector.extract_strided_slice %123 {offsets = [0, 16], sizes = [16, 8], strides = [1, 1]} : vector<16x32xf32> to vector<16x8xf32>
    %149 = vector.shape_cast %148 : vector<16x8xf32> to vector<2x8x8xf32>
    %150 = vector.extract_strided_slice %123 {offsets = [0, 24], sizes = [16, 8], strides = [1, 1]} : vector<16x32xf32> to vector<16x8xf32>
    %151 = vector.shape_cast %150 : vector<16x8xf32> to vector<2x8x8xf32>
    %152 = tpu.concatenate %145, %147, %149, %151 in 0 : vector<2x8x8xf32>, vector<2x8x8xf32>, vector<2x8x8xf32>, vector<2x8x8xf32> -> vector<8x8x8xf32>
    "tpu.trace_start"() <{level = 10 : i32, message = "bqd,bkd->bqk"}> : () -> ()
    %cst_33 = arith.constant dense<0.000000e+00> : vector<8x8x8xf32>
    %153 = tpu.matmul %134, %143, %cst_33 {dimension_numbers = #tpu.dot_dimension_numbers<[2], [2], [1], [1], [0, 0, 0, 1, 1, 1], [0], [0]>} : vector<8x8x8xf32>, vector<8x8x8xf32>, vector<8x8x8xf32> -> vector<8x8x8xf32>
    "tpu.trace_stop"() : () -> ()
    %cst_34 = arith.constant dense<0xFF800000> : vector<8x8xf32>
    %154 = vector.multi_reduction <maximumf>, %153, %cst_34 [2] : vector<8x8x8xf32> to vector<8x8xf32>
    %155 = vector.shape_cast %154 : vector<8x8xf32> to vector<8x8x1xf32>
    %156 = vector.broadcast %155 : vector<8x8x1xf32> to vector<8x8x8xf32>
    %157 = arith.subf %153, %156 : vector<8x8x8xf32>
    %158 = math.exp %157 : vector<8x8x8xf32>
    %cst_35 = arith.constant dense<0.000000e+00> : vector<8x8xf32>
    %159 = vector.multi_reduction <add>, %158, %cst_35 [2] : vector<8x8x8xf32> to vector<8x8xf32>
    %160 = vector.shape_cast %159 : vector<8x8xf32> to vector<8x8x1xf32>
    %161 = tpu.reciprocal %160 {approx = true} : vector<8x8x1xf32> -> vector<8x8x1xf32>
    %162 = vector.broadcast %161 : vector<8x8x1xf32> to vector<8x8x8xf32>
    %163 = arith.mulf %158, %162 : vector<8x8x8xf32>
    "tpu.trace_start"() <{level = 10 : i32, message = "bqk,bkd->bqd"}> : () -> ()
    %cst_36 = arith.constant dense<0.000000e+00> : vector<8x8x8xf32>
    %164 = tpu.matmul %163, %152, %cst_36 {dimension_numbers = #tpu.dot_dimension_numbers<[2], [1], [1], [2], [0, 0, 0, 1, 1, 2], [0], [0]>} : vector<8x8x8xf32>, vector<8x8x8xf32>, vector<8x8x8xf32> -> vector<8x8x8xf32>
    "tpu.trace_stop"() : () -> ()
    %165 = vector.extract_strided_slice %164 {offsets = [0, 0, 0], sizes = [2, 8, 8], strides = [1, 1, 1]} : vector<8x8x8xf32> to vector<2x8x8xf32>
    %166 = vector.shape_cast %165 : vector<2x8x8xf32> to vector<16x8xf32>
    %167 = vector.extract_strided_slice %124 {offsets = [0, 0], sizes = [8, 32], strides = [1, 1]} : vector<32x32xf32> to vector<8x32xf32>
    %cst_37 = arith.constant dense<0.000000e+00> : vector<16x32xf32>
    %168 = tpu.matmul %166, %167, %cst_37 {dimension_numbers = #tpu.dot_dimension_numbers<[1], [0], [0], [1], [0, 0, 1, 1], [], []>} : vector<16x8xf32>, vector<8x32xf32>, vector<16x32xf32> -> vector<16x32xf32>
    %169 = vector.extract_strided_slice %164 {offsets = [2, 0, 0], sizes = [2, 8, 8], strides = [1, 1, 1]} : vector<8x8x8xf32> to vector<2x8x8xf32>
    %170 = vector.shape_cast %169 : vector<2x8x8xf32> to vector<16x8xf32>
    %171 = vector.extract_strided_slice %124 {offsets = [8, 0], sizes = [8, 32], strides = [1, 1]} : vector<32x32xf32> to vector<8x32xf32>
    %cst_38 = arith.constant dense<0.000000e+00> : vector<16x32xf32>
    %172 = tpu.matmul %170, %171, %cst_38 {dimension_numbers = #tpu.dot_dimension_numbers<[1], [0], [0], [1], [0, 0, 1, 1], [], []>} : vector<16x8xf32>, vector<8x32xf32>, vector<16x32xf32> -> vector<16x32xf32>
    %173 = arith.addf %168, %172 : vector<16x32xf32>
    %174 = vector.extract_strided_slice %164 {offsets = [4, 0, 0], sizes = [2, 8, 8], strides = [1, 1, 1]} : vector<8x8x8xf32> to vector<2x8x8xf32>
    %175 = vector.shape_cast %174 : vector<2x8x8xf32> to vector<16x8xf32>
    %176 = vector.extract_strided_slice %124 {offsets = [16, 0], sizes = [8, 32], strides = [1, 1]} : vector<32x32xf32> to vector<8x32xf32>
    %cst_39 = arith.constant dense<0.000000e+00> : vector<16x32xf32>
    %177 = tpu.matmul %175, %176, %cst_39 {dimension_numbers = #tpu.dot_dimension_numbers<[1], [0], [0], [1], [0, 0, 1, 1], [], []>} : vector<16x8xf32>, vector<8x32xf32>, vector<16x32xf32> -> vector<16x32xf32>
    %178 = arith.addf %173, %177 : vector<16x32xf32>
    %179 = vector.extract_strided_slice %164 {offsets = [6, 0, 0], sizes = [2, 8, 8], strides = [1, 1, 1]} : vector<8x8x8xf32> to vector<2x8x8xf32>
    %180 = vector.shape_cast %179 : vector<2x8x8xf32> to vector<16x8xf32>
    %181 = vector.extract_strided_slice %124 {offsets = [24, 0], sizes = [8, 32], strides = [1, 1]} : vector<32x32xf32> to vector<8x32xf32>
    %cst_40 = arith.constant dense<0.000000e+00> : vector<16x32xf32>
    %182 = tpu.matmul %180, %181, %cst_40 {dimension_numbers = #tpu.dot_dimension_numbers<[1], [0], [0], [1], [0, 0, 1, 1], [], []>} : vector<16x8xf32>, vector<8x32xf32>, vector<16x32xf32> -> vector<16x32xf32>
    %183 = arith.addf %178, %182 : vector<16x32xf32>
    %184 = vector.broadcast %125 : vector<1x32xf32> to vector<16x32xf32>
    %185 = arith.addf %183, %184 : vector<16x32xf32>
    %186 = arith.addf %114, %185 : vector<16x32xf32>
    %187 = vector.extract_strided_slice %19 {offsets = [2, 0], sizes = [1, 32], strides = [1, 1]} : vector<6x32xf32> to vector<1x32xf32>
    %188 = vector.extract_strided_slice %19 {offsets = [3, 0], sizes = [1, 32], strides = [1, 1]} : vector<6x32xf32> to vector<1x32xf32>
    %cst_41 = arith.constant dense<0.000000e+00> : vector<16xf32>
    %189 = vector.multi_reduction <add>, %186, %cst_41 [1] : vector<16x32xf32> to vector<16xf32>
    %190 = vector.shape_cast %189 : vector<16xf32> to vector<16x1xf32>
    %cst_42 = arith.constant 3.200000e+01 : f32
    %191 = vector.broadcast %cst_42 : f32 to vector<16x1xf32>
    %192 = arith.divf %190, %191 : vector<16x1xf32>
    %193 = vector.broadcast %192 : vector<16x1xf32> to vector<16x32xf32>
    %194 = arith.subf %186, %193 : vector<16x32xf32>
    %195 = arith.mulf %194, %194 : vector<16x32xf32>
    %cst_43 = arith.constant dense<0.000000e+00> : vector<16xf32>
    %196 = vector.multi_reduction <add>, %195, %cst_43 [1] : vector<16x32xf32> to vector<16xf32>
    %197 = vector.shape_cast %196 : vector<16xf32> to vector<16x1xf32>
    %cst_44 = arith.constant 3.200000e+01 : f32
    %198 = vector.broadcast %cst_44 : f32 to vector<16x1xf32>
    %199 = arith.divf %197, %198 : vector<16x1xf32>
    %cst_45 = arith.constant 9.99999974E-6 : f32
    %200 = vector.broadcast %cst_45 : f32 to vector<16x1xf32>
    %201 = arith.addf %199, %200 : vector<16x1xf32>
    %202 = math.rsqrt %201 : vector<16x1xf32>
    %203 = vector.broadcast %202 : vector<16x1xf32> to vector<16x32xf32>
    %204 = arith.mulf %194, %203 : vector<16x32xf32>
    %205 = vector.broadcast %187 : vector<1x32xf32> to vector<16x32xf32>
    %206 = arith.mulf %204, %205 : vector<16x32xf32>
    %207 = vector.broadcast %188 : vector<1x32xf32> to vector<16x32xf32>
    %208 = arith.addf %206, %207 : vector<16x32xf32>
    %c312 = arith.constant 312 : index
    %c0_46 = arith.constant 0 : index
    %209 = vector.load %arg1[%c312, %c0_46] : memref<704x128xf32, #tpu.memory_space<vmem>>, vector<32x64xf32>
    %cst_47 = arith.constant dense<0.000000e+00> : vector<16x64xf32>
    %210 = tpu.matmul %208, %209, %cst_47 {dimension_numbers = #tpu.dot_dimension_numbers<[1], [0], [0], [1], [0, 0, 1, 1], [], []>} : vector<16x32xf32>, vector<32x64xf32>, vector<16x64xf32> -> vector<16x64xf32>
    %c344 = arith.constant 344 : index
    %c0_48 = arith.constant 0 : index
    %211 = vector.load %arg1[%c344, %c0_48] : memref<704x128xf32, #tpu.memory_space<vmem>>, vector<1x64xf32>
    %212 = vector.broadcast %211 : vector<1x64xf32> to vector<16x64xf32>
    %213 = arith.addf %210, %212 : vector<16x64xf32>
    %cst_49 = arith.constant 0.000000e+00 : f32
    %214 = vector.broadcast %cst_49 : f32 to vector<16x64xf32>
    %215 = arith.maximumf %213, %214 : vector<16x64xf32>
    %c352 = arith.constant 352 : index
    %c0_50 = arith.constant 0 : index
    %216 = vector.load %arg1[%c352, %c0_50] : memref<704x128xf32, #tpu.memory_space<vmem>>, vector<64x32xf32>
    %cst_51 = arith.constant dense<0.000000e+00> : vector<16x32xf32>
    %217 = tpu.matmul %215, %216, %cst_51 {dimension_numbers = #tpu.dot_dimension_numbers<[1], [0], [0], [1], [0, 0, 1, 1], [], []>} : vector<16x64xf32>, vector<64x32xf32>, vector<16x32xf32> -> vector<16x32xf32>
    %c416 = arith.constant 416 : index
    %c0_52 = arith.constant 0 : index
    %218 = vector.load %arg1[%c416, %c0_52] : memref<704x128xf32, #tpu.memory_space<vmem>>, vector<1x32xf32>
    %219 = vector.broadcast %218 : vector<1x32xf32> to vector<16x32xf32>
    %220 = arith.addf %217, %219 : vector<16x32xf32>
    %221 = arith.addf %208, %220 : vector<16x32xf32>
    %222 = vector.extract_strided_slice %19 {offsets = [4, 0], sizes = [1, 32], strides = [1, 1]} : vector<6x32xf32> to vector<1x32xf32>
    %223 = vector.extract_strided_slice %19 {offsets = [5, 0], sizes = [1, 32], strides = [1, 1]} : vector<6x32xf32> to vector<1x32xf32>
    %cst_53 = arith.constant dense<0.000000e+00> : vector<16xf32>
    %224 = vector.multi_reduction <add>, %221, %cst_53 [1] : vector<16x32xf32> to vector<16xf32>
    %225 = vector.shape_cast %224 : vector<16xf32> to vector<16x1xf32>
    %cst_54 = arith.constant 3.200000e+01 : f32
    %226 = vector.broadcast %cst_54 : f32 to vector<16x1xf32>
    %227 = arith.divf %225, %226 : vector<16x1xf32>
    %228 = vector.broadcast %227 : vector<16x1xf32> to vector<16x32xf32>
    %229 = arith.subf %221, %228 : vector<16x32xf32>
    %230 = arith.mulf %229, %229 : vector<16x32xf32>
    %cst_55 = arith.constant dense<0.000000e+00> : vector<16xf32>
    %231 = vector.multi_reduction <add>, %230, %cst_55 [1] : vector<16x32xf32> to vector<16xf32>
    %232 = vector.shape_cast %231 : vector<16xf32> to vector<16x1xf32>
    %cst_56 = arith.constant 3.200000e+01 : f32
    %233 = vector.broadcast %cst_56 : f32 to vector<16x1xf32>
    %234 = arith.divf %232, %233 : vector<16x1xf32>
    %cst_57 = arith.constant 9.99999974E-6 : f32
    %235 = vector.broadcast %cst_57 : f32 to vector<16x1xf32>
    %236 = arith.addf %234, %235 : vector<16x1xf32>
    %237 = math.rsqrt %236 : vector<16x1xf32>
    %238 = vector.broadcast %237 : vector<16x1xf32> to vector<16x32xf32>
    %239 = arith.mulf %229, %238 : vector<16x32xf32>
    %240 = vector.broadcast %222 : vector<1x32xf32> to vector<16x32xf32>
    %241 = arith.mulf %239, %240 : vector<16x32xf32>
    %242 = vector.broadcast %223 : vector<1x32xf32> to vector<16x32xf32>
    %243 = arith.addf %241, %242 : vector<16x32xf32>
    %c584 = arith.constant 584 : index
    %c0_58 = arith.constant 0 : index
    %244 = vector.load %arg1[%c584, %c0_58] : memref<704x128xf32, #tpu.memory_space<vmem>>, vector<6x32xf32>
    %c424 = arith.constant 424 : index
    %c0_59 = arith.constant 0 : index
    %245 = vector.load %arg1[%c424, %c0_59] : memref<704x128xf32, #tpu.memory_space<vmem>>, vector<32x96xf32>
    %cst_60 = arith.constant dense<0.000000e+00> : vector<16x96xf32>
    %246 = tpu.matmul %243, %245, %cst_60 {dimension_numbers = #tpu.dot_dimension_numbers<[1], [0], [0], [1], [0, 0, 1, 1], [], []>} : vector<16x32xf32>, vector<32x96xf32>, vector<16x96xf32> -> vector<16x96xf32>
    %c456 = arith.constant 456 : index
    %c0_61 = arith.constant 0 : index
    %247 = vector.load %arg1[%c456, %c0_61] : memref<704x128xf32, #tpu.memory_space<vmem>>, vector<1x96xf32>
    %248 = vector.broadcast %247 : vector<1x96xf32> to vector<16x96xf32>
    %249 = arith.addf %246, %248 : vector<16x96xf32>
    %250 = vector.extract_strided_slice %249 {offsets = [0, 0], sizes = [16, 32], strides = [1, 1]} : vector<16x96xf32> to vector<16x32xf32>
    %cst_62 = arith.constant 0.353553385 : f32
    %251 = vector.broadcast %cst_62 : f32 to vector<16x32xf32>
    %252 = arith.mulf %250, %251 : vector<16x32xf32>
    %253 = vector.extract_strided_slice %249 {offsets = [0, 32], sizes = [16, 32], strides = [1, 1]} : vector<16x96xf32> to vector<16x32xf32>
    %254 = vector.extract_strided_slice %249 {offsets = [0, 64], sizes = [16, 32], strides = [1, 1]} : vector<16x96xf32> to vector<16x32xf32>
    %c464 = arith.constant 464 : index
    %c0_63 = arith.constant 0 : index
    %255 = vector.load %arg1[%c464, %c0_63] : memref<704x128xf32, #tpu.memory_space<vmem>>, vector<32x32xf32>
    %c496 = arith.constant 496 : index
    %c0_64 = arith.constant 0 : index
    %256 = vector.load %arg1[%c496, %c0_64] : memref<704x128xf32, #tpu.memory_space<vmem>>, vector<1x32xf32>
    %257 = vector.extract_strided_slice %252 {offsets = [0, 0], sizes = [16, 8], strides = [1, 1]} : vector<16x32xf32> to vector<16x8xf32>
    %258 = vector.shape_cast %257 : vector<16x8xf32> to vector<2x8x8xf32>
    %259 = vector.extract_strided_slice %252 {offsets = [0, 8], sizes = [16, 8], strides = [1, 1]} : vector<16x32xf32> to vector<16x8xf32>
    %260 = vector.shape_cast %259 : vector<16x8xf32> to vector<2x8x8xf32>
    %261 = vector.extract_strided_slice %252 {offsets = [0, 16], sizes = [16, 8], strides = [1, 1]} : vector<16x32xf32> to vector<16x8xf32>
    %262 = vector.shape_cast %261 : vector<16x8xf32> to vector<2x8x8xf32>
    %263 = vector.extract_strided_slice %252 {offsets = [0, 24], sizes = [16, 8], strides = [1, 1]} : vector<16x32xf32> to vector<16x8xf32>
    %264 = vector.shape_cast %263 : vector<16x8xf32> to vector<2x8x8xf32>
    %265 = tpu.concatenate %258, %260, %262, %264 in 0 : vector<2x8x8xf32>, vector<2x8x8xf32>, vector<2x8x8xf32>, vector<2x8x8xf32> -> vector<8x8x8xf32>
    %266 = vector.extract_strided_slice %253 {offsets = [0, 0], sizes = [16, 8], strides = [1, 1]} : vector<16x32xf32> to vector<16x8xf32>
    %267 = vector.shape_cast %266 : vector<16x8xf32> to vector<2x8x8xf32>
    %268 = vector.extract_strided_slice %253 {offsets = [0, 8], sizes = [16, 8], strides = [1, 1]} : vector<16x32xf32> to vector<16x8xf32>
    %269 = vector.shape_cast %268 : vector<16x8xf32> to vector<2x8x8xf32>
    %270 = vector.extract_strided_slice %253 {offsets = [0, 16], sizes = [16, 8], strides = [1, 1]} : vector<16x32xf32> to vector<16x8xf32>
    %271 = vector.shape_cast %270 : vector<16x8xf32> to vector<2x8x8xf32>
    %272 = vector.extract_strided_slice %253 {offsets = [0, 24], sizes = [16, 8], strides = [1, 1]} : vector<16x32xf32> to vector<16x8xf32>
    %273 = vector.shape_cast %272 : vector<16x8xf32> to vector<2x8x8xf32>
    %274 = tpu.concatenate %267, %269, %271, %273 in 0 : vector<2x8x8xf32>, vector<2x8x8xf32>, vector<2x8x8xf32>, vector<2x8x8xf32> -> vector<8x8x8xf32>
    %275 = vector.extract_strided_slice %254 {offsets = [0, 0], sizes = [16, 8], strides = [1, 1]} : vector<16x32xf32> to vector<16x8xf32>
    %276 = vector.shape_cast %275 : vector<16x8xf32> to vector<2x8x8xf32>
    %277 = vector.extract_strided_slice %254 {offsets = [0, 8], sizes = [16, 8], strides = [1, 1]} : vector<16x32xf32> to vector<16x8xf32>
    %278 = vector.shape_cast %277 : vector<16x8xf32> to vector<2x8x8xf32>
    %279 = vector.extract_strided_slice %254 {offsets = [0, 16], sizes = [16, 8], strides = [1, 1]} : vector<16x32xf32> to vector<16x8xf32>
    %280 = vector.shape_cast %279 : vector<16x8xf32> to vector<2x8x8xf32>
    %281 = vector.extract_strided_slice %254 {offsets = [0, 24], sizes = [16, 8], strides = [1, 1]} : vector<16x32xf32> to vector<16x8xf32>
    %282 = vector.shape_cast %281 : vector<16x8xf32> to vector<2x8x8xf32>
    %283 = tpu.concatenate %276, %278, %280, %282 in 0 : vector<2x8x8xf32>, vector<2x8x8xf32>, vector<2x8x8xf32>, vector<2x8x8xf32> -> vector<8x8x8xf32>
    "tpu.trace_start"() <{level = 10 : i32, message = "bqd,bkd->bqk"}> : () -> ()
    %cst_65 = arith.constant dense<0.000000e+00> : vector<8x8x8xf32>
    %284 = tpu.matmul %265, %274, %cst_65 {dimension_numbers = #tpu.dot_dimension_numbers<[2], [2], [1], [1], [0, 0, 0, 1, 1, 1], [0], [0]>} : vector<8x8x8xf32>, vector<8x8x8xf32>, vector<8x8x8xf32> -> vector<8x8x8xf32>
    "tpu.trace_stop"() : () -> ()
    %cst_66 = arith.constant dense<0xFF800000> : vector<8x8xf32>
    %285 = vector.multi_reduction <maximumf>, %284, %cst_66 [2] : vector<8x8x8xf32> to vector<8x8xf32>
    %286 = vector.shape_cast %285 : vector<8x8xf32> to vector<8x8x1xf32>
    %287 = vector.broadcast %286 : vector<8x8x1xf32> to vector<8x8x8xf32>
    %288 = arith.subf %284, %287 : vector<8x8x8xf32>
    %289 = math.exp %288 : vector<8x8x8xf32>
    %cst_67 = arith.constant dense<0.000000e+00> : vector<8x8xf32>
    %290 = vector.multi_reduction <add>, %289, %cst_67 [2] : vector<8x8x8xf32> to vector<8x8xf32>
    %291 = vector.shape_cast %290 : vector<8x8xf32> to vector<8x8x1xf32>
    %292 = tpu.reciprocal %291 {approx = true} : vector<8x8x1xf32> -> vector<8x8x1xf32>
    %293 = vector.broadcast %292 : vector<8x8x1xf32> to vector<8x8x8xf32>
    %294 = arith.mulf %289, %293 : vector<8x8x8xf32>
    "tpu.trace_start"() <{level = 10 : i32, message = "bqk,bkd->bqd"}> : () -> ()
    %cst_68 = arith.constant dense<0.000000e+00> : vector<8x8x8xf32>
    %295 = tpu.matmul %294, %283, %cst_68 {dimension_numbers = #tpu.dot_dimension_numbers<[2], [1], [1], [2], [0, 0, 0, 1, 1, 2], [0], [0]>} : vector<8x8x8xf32>, vector<8x8x8xf32>, vector<8x8x8xf32> -> vector<8x8x8xf32>
    "tpu.trace_stop"() : () -> ()
    %296 = vector.extract_strided_slice %295 {offsets = [0, 0, 0], sizes = [2, 8, 8], strides = [1, 1, 1]} : vector<8x8x8xf32> to vector<2x8x8xf32>
    %297 = vector.shape_cast %296 : vector<2x8x8xf32> to vector<16x8xf32>
    %298 = vector.extract_strided_slice %255 {offsets = [0, 0], sizes = [8, 32], strides = [1, 1]} : vector<32x32xf32> to vector<8x32xf32>
    %cst_69 = arith.constant dense<0.000000e+00> : vector<16x32xf32>
    %299 = tpu.matmul %297, %298, %cst_69 {dimension_numbers = #tpu.dot_dimension_numbers<[1], [0], [0], [1], [0, 0, 1, 1], [], []>} : vector<16x8xf32>, vector<8x32xf32>, vector<16x32xf32> -> vector<16x32xf32>
    %300 = vector.extract_strided_slice %295 {offsets = [2, 0, 0], sizes = [2, 8, 8], strides = [1, 1, 1]} : vector<8x8x8xf32> to vector<2x8x8xf32>
    %301 = vector.shape_cast %300 : vector<2x8x8xf32> to vector<16x8xf32>
    %302 = vector.extract_strided_slice %255 {offsets = [8, 0], sizes = [8, 32], strides = [1, 1]} : vector<32x32xf32> to vector<8x32xf32>
    %cst_70 = arith.constant dense<0.000000e+00> : vector<16x32xf32>
    %303 = tpu.matmul %301, %302, %cst_70 {dimension_numbers = #tpu.dot_dimension_numbers<[1], [0], [0], [1], [0, 0, 1, 1], [], []>} : vector<16x8xf32>, vector<8x32xf32>, vector<16x32xf32> -> vector<16x32xf32>
    %304 = arith.addf %299, %303 : vector<16x32xf32>
    %305 = vector.extract_strided_slice %295 {offsets = [4, 0, 0], sizes = [2, 8, 8], strides = [1, 1, 1]} : vector<8x8x8xf32> to vector<2x8x8xf32>
    %306 = vector.shape_cast %305 : vector<2x8x8xf32> to vector<16x8xf32>
    %307 = vector.extract_strided_slice %255 {offsets = [16, 0], sizes = [8, 32], strides = [1, 1]} : vector<32x32xf32> to vector<8x32xf32>
    %cst_71 = arith.constant dense<0.000000e+00> : vector<16x32xf32>
    %308 = tpu.matmul %306, %307, %cst_71 {dimension_numbers = #tpu.dot_dimension_numbers<[1], [0], [0], [1], [0, 0, 1, 1], [], []>} : vector<16x8xf32>, vector<8x32xf32>, vector<16x32xf32> -> vector<16x32xf32>
    %309 = arith.addf %304, %308 : vector<16x32xf32>
    %310 = vector.extract_strided_slice %295 {offsets = [6, 0, 0], sizes = [2, 8, 8], strides = [1, 1, 1]} : vector<8x8x8xf32> to vector<2x8x8xf32>
    %311 = vector.shape_cast %310 : vector<2x8x8xf32> to vector<16x8xf32>
    %312 = vector.extract_strided_slice %255 {offsets = [24, 0], sizes = [8, 32], strides = [1, 1]} : vector<32x32xf32> to vector<8x32xf32>
    %cst_72 = arith.constant dense<0.000000e+00> : vector<16x32xf32>
    %313 = tpu.matmul %311, %312, %cst_72 {dimension_numbers = #tpu.dot_dimension_numbers<[1], [0], [0], [1], [0, 0, 1, 1], [], []>} : vector<16x8xf32>, vector<8x32xf32>, vector<16x32xf32> -> vector<16x32xf32>
    %314 = arith.addf %309, %313 : vector<16x32xf32>
    %315 = vector.broadcast %256 : vector<1x32xf32> to vector<16x32xf32>
    %316 = arith.addf %314, %315 : vector<16x32xf32>
    %317 = arith.addf %243, %316 : vector<16x32xf32>
    %318 = vector.extract_strided_slice %244 {offsets = [0, 0], sizes = [1, 32], strides = [1, 1]} : vector<6x32xf32> to vector<1x32xf32>
    %319 = vector.extract_strided_slice %244 {offsets = [1, 0], sizes = [1, 32], strides = [1, 1]} : vector<6x32xf32> to vector<1x32xf32>
    %cst_73 = arith.constant dense<0.000000e+00> : vector<16xf32>
    %320 = vector.multi_reduction <add>, %317, %cst_73 [1] : vector<16x32xf32> to vector<16xf32>
    %321 = vector.shape_cast %320 : vector<16xf32> to vector<16x1xf32>
    %cst_74 = arith.constant 3.200000e+01 : f32
    %322 = vector.broadcast %cst_74 : f32 to vector<16x1xf32>
    %323 = arith.divf %321, %322 : vector<16x1xf32>
    %324 = vector.broadcast %323 : vector<16x1xf32> to vector<16x32xf32>
    %325 = arith.subf %317, %324 : vector<16x32xf32>
    %326 = arith.mulf %325, %325 : vector<16x32xf32>
    %cst_75 = arith.constant dense<0.000000e+00> : vector<16xf32>
    %327 = vector.multi_reduction <add>, %326, %cst_75 [1] : vector<16x32xf32> to vector<16xf32>
    %328 = vector.shape_cast %327 : vector<16xf32> to vector<16x1xf32>
    %cst_76 = arith.constant 3.200000e+01 : f32
    %329 = vector.broadcast %cst_76 : f32 to vector<16x1xf32>
    %330 = arith.divf %328, %329 : vector<16x1xf32>
    %cst_77 = arith.constant 9.99999974E-6 : f32
    %331 = vector.broadcast %cst_77 : f32 to vector<16x1xf32>
    %332 = arith.addf %330, %331 : vector<16x1xf32>
    %333 = math.rsqrt %332 : vector<16x1xf32>
    %334 = vector.broadcast %333 : vector<16x1xf32> to vector<16x32xf32>
    %335 = arith.mulf %325, %334 : vector<16x32xf32>
    %336 = vector.broadcast %318 : vector<1x32xf32> to vector<16x32xf32>
    %337 = arith.mulf %335, %336 : vector<16x32xf32>
    %338 = vector.broadcast %319 : vector<1x32xf32> to vector<16x32xf32>
    %339 = arith.addf %337, %338 : vector<16x32xf32>
    %c504 = arith.constant 504 : index
    %c0_78 = arith.constant 0 : index
    %340 = vector.load %arg1[%c504, %c0_78] : memref<704x128xf32, #tpu.memory_space<vmem>>, vector<32x32xf32>
    %cst_79 = arith.constant dense<0.000000e+00> : vector<16x32xf32>
    %341 = tpu.matmul %339, %340, %cst_79 {dimension_numbers = #tpu.dot_dimension_numbers<[1], [0], [0], [1], [0, 0, 1, 1], [], []>} : vector<16x32xf32>, vector<32x32xf32>, vector<16x32xf32> -> vector<16x32xf32>
    %c536 = arith.constant 536 : index
    %c0_80 = arith.constant 0 : index
    %342 = vector.load %arg1[%c536, %c0_80] : memref<704x128xf32, #tpu.memory_space<vmem>>, vector<1x32xf32>
    %343 = vector.broadcast %342 : vector<1x32xf32> to vector<16x32xf32>
    %344 = arith.addf %341, %343 : vector<16x32xf32>
    %cst_81 = arith.constant 0.353553385 : f32
    %345 = vector.broadcast %cst_81 : f32 to vector<16x32xf32>
    %346 = arith.mulf %344, %345 : vector<16x32xf32>
    %347 = vector.extract_strided_slice %18 {offsets = [0, 64], sizes = [16, 32], strides = [1, 1]} : vector<16x128xf32> to vector<16x32xf32>
    %348 = vector.extract_strided_slice %18 {offsets = [0, 96], sizes = [16, 32], strides = [1, 1]} : vector<16x128xf32> to vector<16x32xf32>
    %c544 = arith.constant 544 : index
    %c0_82 = arith.constant 0 : index
    %349 = vector.load %arg1[%c544, %c0_82] : memref<704x128xf32, #tpu.memory_space<vmem>>, vector<32x32xf32>
    %c576 = arith.constant 576 : index
    %c0_83 = arith.constant 0 : index
    %350 = vector.load %arg1[%c576, %c0_83] : memref<704x128xf32, #tpu.memory_space<vmem>>, vector<1x32xf32>
    %351 = vector.extract_strided_slice %346 {offsets = [0, 0], sizes = [16, 8], strides = [1, 1]} : vector<16x32xf32> to vector<16x8xf32>
    %352 = vector.shape_cast %351 : vector<16x8xf32> to vector<2x8x8xf32>
    %353 = vector.extract_strided_slice %346 {offsets = [0, 8], sizes = [16, 8], strides = [1, 1]} : vector<16x32xf32> to vector<16x8xf32>
    %354 = vector.shape_cast %353 : vector<16x8xf32> to vector<2x8x8xf32>
    %355 = vector.extract_strided_slice %346 {offsets = [0, 16], sizes = [16, 8], strides = [1, 1]} : vector<16x32xf32> to vector<16x8xf32>
    %356 = vector.shape_cast %355 : vector<16x8xf32> to vector<2x8x8xf32>
    %357 = vector.extract_strided_slice %346 {offsets = [0, 24], sizes = [16, 8], strides = [1, 1]} : vector<16x32xf32> to vector<16x8xf32>
    %358 = vector.shape_cast %357 : vector<16x8xf32> to vector<2x8x8xf32>
    %359 = tpu.concatenate %352, %354, %356, %358 in 0 : vector<2x8x8xf32>, vector<2x8x8xf32>, vector<2x8x8xf32>, vector<2x8x8xf32> -> vector<8x8x8xf32>
    %360 = vector.extract_strided_slice %347 {offsets = [0, 0], sizes = [16, 8], strides = [1, 1]} : vector<16x32xf32> to vector<16x8xf32>
    %361 = vector.shape_cast %360 : vector<16x8xf32> to vector<2x8x8xf32>
    %362 = vector.extract_strided_slice %347 {offsets = [0, 8], sizes = [16, 8], strides = [1, 1]} : vector<16x32xf32> to vector<16x8xf32>
    %363 = vector.shape_cast %362 : vector<16x8xf32> to vector<2x8x8xf32>
    %364 = vector.extract_strided_slice %347 {offsets = [0, 16], sizes = [16, 8], strides = [1, 1]} : vector<16x32xf32> to vector<16x8xf32>
    %365 = vector.shape_cast %364 : vector<16x8xf32> to vector<2x8x8xf32>
    %366 = vector.extract_strided_slice %347 {offsets = [0, 24], sizes = [16, 8], strides = [1, 1]} : vector<16x32xf32> to vector<16x8xf32>
    %367 = vector.shape_cast %366 : vector<16x8xf32> to vector<2x8x8xf32>
    %368 = tpu.concatenate %361, %363, %365, %367 in 0 : vector<2x8x8xf32>, vector<2x8x8xf32>, vector<2x8x8xf32>, vector<2x8x8xf32> -> vector<8x8x8xf32>
    %369 = vector.extract_strided_slice %348 {offsets = [0, 0], sizes = [16, 8], strides = [1, 1]} : vector<16x32xf32> to vector<16x8xf32>
    %370 = vector.shape_cast %369 : vector<16x8xf32> to vector<2x8x8xf32>
    %371 = vector.extract_strided_slice %348 {offsets = [0, 8], sizes = [16, 8], strides = [1, 1]} : vector<16x32xf32> to vector<16x8xf32>
    %372 = vector.shape_cast %371 : vector<16x8xf32> to vector<2x8x8xf32>
    %373 = vector.extract_strided_slice %348 {offsets = [0, 16], sizes = [16, 8], strides = [1, 1]} : vector<16x32xf32> to vector<16x8xf32>
    %374 = vector.shape_cast %373 : vector<16x8xf32> to vector<2x8x8xf32>
    %375 = vector.extract_strided_slice %348 {offsets = [0, 24], sizes = [16, 8], strides = [1, 1]} : vector<16x32xf32> to vector<16x8xf32>
    %376 = vector.shape_cast %375 : vector<16x8xf32> to vector<2x8x8xf32>
    %377 = tpu.concatenate %370, %372, %374, %376 in 0 : vector<2x8x8xf32>, vector<2x8x8xf32>, vector<2x8x8xf32>, vector<2x8x8xf32> -> vector<8x8x8xf32>
    "tpu.trace_start"() <{level = 10 : i32, message = "bqd,bkd->bqk"}> : () -> ()
    %cst_84 = arith.constant dense<0.000000e+00> : vector<8x8x8xf32>
    %378 = tpu.matmul %359, %368, %cst_84 {dimension_numbers = #tpu.dot_dimension_numbers<[2], [2], [1], [1], [0, 0, 0, 1, 1, 1], [0], [0]>} : vector<8x8x8xf32>, vector<8x8x8xf32>, vector<8x8x8xf32> -> vector<8x8x8xf32>
    "tpu.trace_stop"() : () -> ()
    %cst_85 = arith.constant dense<0xFF800000> : vector<8x8xf32>
    %379 = vector.multi_reduction <maximumf>, %378, %cst_85 [2] : vector<8x8x8xf32> to vector<8x8xf32>
    %380 = vector.shape_cast %379 : vector<8x8xf32> to vector<8x8x1xf32>
    %381 = vector.broadcast %380 : vector<8x8x1xf32> to vector<8x8x8xf32>
    %382 = arith.subf %378, %381 : vector<8x8x8xf32>
    %383 = math.exp %382 : vector<8x8x8xf32>
    %cst_86 = arith.constant dense<0.000000e+00> : vector<8x8xf32>
    %384 = vector.multi_reduction <add>, %383, %cst_86 [2] : vector<8x8x8xf32> to vector<8x8xf32>
    %385 = vector.shape_cast %384 : vector<8x8xf32> to vector<8x8x1xf32>
    %386 = tpu.reciprocal %385 {approx = true} : vector<8x8x1xf32> -> vector<8x8x1xf32>
    %387 = vector.broadcast %386 : vector<8x8x1xf32> to vector<8x8x8xf32>
    %388 = arith.mulf %383, %387 : vector<8x8x8xf32>
    "tpu.trace_start"() <{level = 10 : i32, message = "bqk,bkd->bqd"}> : () -> ()
    %cst_87 = arith.constant dense<0.000000e+00> : vector<8x8x8xf32>
    %389 = tpu.matmul %388, %377, %cst_87 {dimension_numbers = #tpu.dot_dimension_numbers<[2], [1], [1], [2], [0, 0, 0, 1, 1, 2], [0], [0]>} : vector<8x8x8xf32>, vector<8x8x8xf32>, vector<8x8x8xf32> -> vector<8x8x8xf32>
    "tpu.trace_stop"() : () -> ()
    %390 = vector.extract_strided_slice %389 {offsets = [0, 0, 0], sizes = [2, 8, 8], strides = [1, 1, 1]} : vector<8x8x8xf32> to vector<2x8x8xf32>
    %391 = vector.shape_cast %390 : vector<2x8x8xf32> to vector<16x8xf32>
    %392 = vector.extract_strided_slice %349 {offsets = [0, 0], sizes = [8, 32], strides = [1, 1]} : vector<32x32xf32> to vector<8x32xf32>
    %cst_88 = arith.constant dense<0.000000e+00> : vector<16x32xf32>
    %393 = tpu.matmul %391, %392, %cst_88 {dimension_numbers = #tpu.dot_dimension_numbers<[1], [0], [0], [1], [0, 0, 1, 1], [], []>} : vector<16x8xf32>, vector<8x32xf32>, vector<16x32xf32> -> vector<16x32xf32>
    %394 = vector.extract_strided_slice %389 {offsets = [2, 0, 0], sizes = [2, 8, 8], strides = [1, 1, 1]} : vector<8x8x8xf32> to vector<2x8x8xf32>
    %395 = vector.shape_cast %394 : vector<2x8x8xf32> to vector<16x8xf32>
    %396 = vector.extract_strided_slice %349 {offsets = [8, 0], sizes = [8, 32], strides = [1, 1]} : vector<32x32xf32> to vector<8x32xf32>
    %cst_89 = arith.constant dense<0.000000e+00> : vector<16x32xf32>
    %397 = tpu.matmul %395, %396, %cst_89 {dimension_numbers = #tpu.dot_dimension_numbers<[1], [0], [0], [1], [0, 0, 1, 1], [], []>} : vector<16x8xf32>, vector<8x32xf32>, vector<16x32xf32> -> vector<16x32xf32>
    %398 = arith.addf %393, %397 : vector<16x32xf32>
    %399 = vector.extract_strided_slice %389 {offsets = [4, 0, 0], sizes = [2, 8, 8], strides = [1, 1, 1]} : vector<8x8x8xf32> to vector<2x8x8xf32>
    %400 = vector.shape_cast %399 : vector<2x8x8xf32> to vector<16x8xf32>
    %401 = vector.extract_strided_slice %349 {offsets = [16, 0], sizes = [8, 32], strides = [1, 1]} : vector<32x32xf32> to vector<8x32xf32>
    %cst_90 = arith.constant dense<0.000000e+00> : vector<16x32xf32>
    %402 = tpu.matmul %400, %401, %cst_90 {dimension_numbers = #tpu.dot_dimension_numbers<[1], [0], [0], [1], [0, 0, 1, 1], [], []>} : vector<16x8xf32>, vector<8x32xf32>, vector<16x32xf32> -> vector<16x32xf32>
    %403 = arith.addf %398, %402 : vector<16x32xf32>
    %404 = vector.extract_strided_slice %389 {offsets = [6, 0, 0], sizes = [2, 8, 8], strides = [1, 1, 1]} : vector<8x8x8xf32> to vector<2x8x8xf32>
    %405 = vector.shape_cast %404 : vector<2x8x8xf32> to vector<16x8xf32>
    %406 = vector.extract_strided_slice %349 {offsets = [24, 0], sizes = [8, 32], strides = [1, 1]} : vector<32x32xf32> to vector<8x32xf32>
    %cst_91 = arith.constant dense<0.000000e+00> : vector<16x32xf32>
    %407 = tpu.matmul %405, %406, %cst_91 {dimension_numbers = #tpu.dot_dimension_numbers<[1], [0], [0], [1], [0, 0, 1, 1], [], []>} : vector<16x8xf32>, vector<8x32xf32>, vector<16x32xf32> -> vector<16x32xf32>
    %408 = arith.addf %403, %407 : vector<16x32xf32>
    %409 = vector.broadcast %350 : vector<1x32xf32> to vector<16x32xf32>
    %410 = arith.addf %408, %409 : vector<16x32xf32>
    %411 = arith.addf %339, %410 : vector<16x32xf32>
    %412 = vector.extract_strided_slice %244 {offsets = [2, 0], sizes = [1, 32], strides = [1, 1]} : vector<6x32xf32> to vector<1x32xf32>
    %413 = vector.extract_strided_slice %244 {offsets = [3, 0], sizes = [1, 32], strides = [1, 1]} : vector<6x32xf32> to vector<1x32xf32>
    %cst_92 = arith.constant dense<0.000000e+00> : vector<16xf32>
    %414 = vector.multi_reduction <add>, %411, %cst_92 [1] : vector<16x32xf32> to vector<16xf32>
    %415 = vector.shape_cast %414 : vector<16xf32> to vector<16x1xf32>
    %cst_93 = arith.constant 3.200000e+01 : f32
    %416 = vector.broadcast %cst_93 : f32 to vector<16x1xf32>
    %417 = arith.divf %415, %416 : vector<16x1xf32>
    %418 = vector.broadcast %417 : vector<16x1xf32> to vector<16x32xf32>
    %419 = arith.subf %411, %418 : vector<16x32xf32>
    %420 = arith.mulf %419, %419 : vector<16x32xf32>
    %cst_94 = arith.constant dense<0.000000e+00> : vector<16xf32>
    %421 = vector.multi_reduction <add>, %420, %cst_94 [1] : vector<16x32xf32> to vector<16xf32>
    %422 = vector.shape_cast %421 : vector<16xf32> to vector<16x1xf32>
    %cst_95 = arith.constant 3.200000e+01 : f32
    %423 = vector.broadcast %cst_95 : f32 to vector<16x1xf32>
    %424 = arith.divf %422, %423 : vector<16x1xf32>
    %cst_96 = arith.constant 9.99999974E-6 : f32
    %425 = vector.broadcast %cst_96 : f32 to vector<16x1xf32>
    %426 = arith.addf %424, %425 : vector<16x1xf32>
    %427 = math.rsqrt %426 : vector<16x1xf32>
    %428 = vector.broadcast %427 : vector<16x1xf32> to vector<16x32xf32>
    %429 = arith.mulf %419, %428 : vector<16x32xf32>
    %430 = vector.broadcast %412 : vector<1x32xf32> to vector<16x32xf32>
    %431 = arith.mulf %429, %430 : vector<16x32xf32>
    %432 = vector.broadcast %413 : vector<1x32xf32> to vector<16x32xf32>
    %433 = arith.addf %431, %432 : vector<16x32xf32>
    %434 = vector.shape_cast %433 : vector<16x32xf32> to vector<2x8x32xf32>
    %435 = vector.extract_strided_slice %434 {offsets = [0, 7, 0], sizes = [2, 1, 32], strides = [1, 1, 1]} : vector<2x8x32xf32> to vector<2x1x32xf32>
    %436 = vector.shape_cast %435 : vector<2x1x32xf32> to vector<2x32xf32>
    %c592 = arith.constant 592 : index
    %c0_97 = arith.constant 0 : index
    %437 = vector.load %arg1[%c592, %c0_97] : memref<704x128xf32, #tpu.memory_space<vmem>>, vector<32x64xf32>
    %cst_98 = arith.constant dense<0.000000e+00> : vector<2x64xf32>
    %438 = tpu.matmul %436, %437, %cst_98 {dimension_numbers = #tpu.dot_dimension_numbers<[1], [0], [0], [1], [0, 0, 1, 1], [], []>} : vector<2x32xf32>, vector<32x64xf32>, vector<2x64xf32> -> vector<2x64xf32>
    %c624 = arith.constant 624 : index
    %c0_99 = arith.constant 0 : index
    %439 = vector.load %arg1[%c624, %c0_99] : memref<704x128xf32, #tpu.memory_space<vmem>>, vector<1x64xf32>
    %440 = vector.broadcast %439 : vector<1x64xf32> to vector<2x64xf32>
    %441 = arith.addf %438, %440 : vector<2x64xf32>
    %cst_100 = arith.constant 0.000000e+00 : f32
    %442 = vector.broadcast %cst_100 : f32 to vector<2x64xf32>
    %443 = arith.maximumf %441, %442 : vector<2x64xf32>
    %c632 = arith.constant 632 : index
    %c0_101 = arith.constant 0 : index
    %444 = vector.load %arg1[%c632, %c0_101] : memref<704x128xf32, #tpu.memory_space<vmem>>, vector<64x32xf32>
    %cst_102 = arith.constant dense<0.000000e+00> : vector<2x32xf32>
    %445 = tpu.matmul %443, %444, %cst_102 {dimension_numbers = #tpu.dot_dimension_numbers<[1], [0], [0], [1], [0, 0, 1, 1], [], []>} : vector<2x64xf32>, vector<64x32xf32>, vector<2x32xf32> -> vector<2x32xf32>
    %c696 = arith.constant 696 : index
    %c0_103 = arith.constant 0 : index
    %446 = vector.load %arg1[%c696, %c0_103] : memref<704x128xf32, #tpu.memory_space<vmem>>, vector<1x32xf32>
    %447 = vector.broadcast %446 : vector<1x32xf32> to vector<2x32xf32>
    %448 = arith.addf %445, %447 : vector<2x32xf32>
    %449 = arith.addf %436, %448 : vector<2x32xf32>
    %450 = vector.extract_strided_slice %244 {offsets = [4, 0], sizes = [1, 32], strides = [1, 1]} : vector<6x32xf32> to vector<1x32xf32>
    %451 = vector.extract_strided_slice %244 {offsets = [5, 0], sizes = [1, 32], strides = [1, 1]} : vector<6x32xf32> to vector<1x32xf32>
    %cst_104 = arith.constant dense<0.000000e+00> : vector<2xf32>
    %452 = vector.multi_reduction <add>, %449, %cst_104 [1] : vector<2x32xf32> to vector<2xf32>
    %453 = vector.shape_cast %452 : vector<2xf32> to vector<2x1xf32>
    %cst_105 = arith.constant 3.200000e+01 : f32
    %454 = vector.broadcast %cst_105 : f32 to vector<2x1xf32>
    %455 = arith.divf %453, %454 : vector<2x1xf32>
    %456 = vector.broadcast %455 : vector<2x1xf32> to vector<2x32xf32>
    %457 = arith.subf %449, %456 : vector<2x32xf32>
    %458 = arith.mulf %457, %457 : vector<2x32xf32>
    %cst_106 = arith.constant dense<0.000000e+00> : vector<2xf32>
    %459 = vector.multi_reduction <add>, %458, %cst_106 [1] : vector<2x32xf32> to vector<2xf32>
    %460 = vector.shape_cast %459 : vector<2xf32> to vector<2x1xf32>
    %cst_107 = arith.constant 3.200000e+01 : f32
    %461 = vector.broadcast %cst_107 : f32 to vector<2x1xf32>
    %462 = arith.divf %460, %461 : vector<2x1xf32>
    %cst_108 = arith.constant 9.99999974E-6 : f32
    %463 = vector.broadcast %cst_108 : f32 to vector<2x1xf32>
    %464 = arith.addf %462, %463 : vector<2x1xf32>
    %465 = math.rsqrt %464 : vector<2x1xf32>
    %466 = vector.broadcast %465 : vector<2x1xf32> to vector<2x32xf32>
    %467 = arith.mulf %457, %466 : vector<2x32xf32>
    %468 = vector.broadcast %450 : vector<1x32xf32> to vector<2x32xf32>
    %469 = arith.mulf %467, %468 : vector<2x32xf32>
    %470 = vector.broadcast %451 : vector<1x32xf32> to vector<2x32xf32>
    %471 = arith.addf %469, %470 : vector<2x32xf32>
    %c64 = arith.constant 64 : index
    %c0_109 = arith.constant 0 : index
    %472 = vector.load %arg1[%c64, %c0_109] : memref<704x128xf32, #tpu.memory_space<vmem>>, vector<32x128xf32>
    %cst_110 = arith.constant dense<0.000000e+00> : vector<2x128xf32>
    %473 = tpu.matmul %471, %472, %cst_110 {dimension_numbers = #tpu.dot_dimension_numbers<[1], [0], [0], [1], [0, 0, 1, 1], [], []>} : vector<2x32xf32>, vector<32x128xf32>, vector<2x128xf32> -> vector<2x128xf32>
    %c96 = arith.constant 96 : index
    %c0_111 = arith.constant 0 : index
    %474 = vector.load %arg1[%c96, %c0_111] : memref<704x128xf32, #tpu.memory_space<vmem>>, vector<1x128xf32>
    %475 = vector.broadcast %474 : vector<1x128xf32> to vector<2x128xf32>
    %476 = arith.addf %473, %475 : vector<2x128xf32>
    %c0_112 = arith.constant 0 : index
    %c0_113 = arith.constant 0 : index
    %477 = vector.load %arg2[%c0_112, %c0_113] : memref<2x128xf32, #tpu.memory_space<vmem>>, vector<2x128xf32>
    tpu.vector_store %arg2[%c0_112, %c0_113], %476 {strides = array<i32>} : memref<2x128xf32, #tpu.memory_space<vmem>>, vector<2x128xf32>,
    return
  }
}

</mosaic_0001>

<llo_original>
// kernel: mr_teddy_td_forward.1
$region0: #{mr_teddy_td_forward.1}
  #allocation0 [shape = 'u32[]', space=smem, size = 0x4, offset = 0x4, fixed_abs, tag = 'smem constant byte address 0x4 - core index']
  #allocation1 [shape = 'u32[72,128]{1,0:T(1,128)}', space=vmem, size = 0x9000, scoped, tag = 'internal scratch']
  %s0 = inlined_call_operand.vmem [shape: s32[16,1], index: 0, kind: input, shape index: {}]
  %s1 = inlined_call_operand.hbm [shape: f32[704,128], index: 1, kind: input, shape index: {}]
  %s2 = inlined_call_operand.hbm [shape: f32[2,128], index: 2, kind: output, shape index: {}]
  %s3 = sld [smem:[#allocation0]]
  $region22: #{mr_teddy_td_forward.1} parent=0
    _
  %s5 = ssub.s32 1, %s3
  %s6 = scalar_select 0, %s5, %s3
  $region1: #{mr_teddy_td_forward.1} parent=0
    #allocation2 [shape = 'u8[360448]{0}', space=vmem, size = 0x58000, scoped, tag = 'input window, operand 1, single buffered']
    #allocation3 [shape = 's32[1]{0}', space=sflag, size = 0x4, scoped, tag = 'scoped memory for mr_teddy_td_forward.1']
    #allocation4 [shape = 's32[1]{0}', space=sflag, size = 0x4, scoped, tag = 'scoped memory for mr_teddy_td_forward.1']
    #allocation5 [shape = 'u8[1024]{0}', space=vmem, size = 0x400, scoped, tag = 'output window, operand 0, single buffered']
    %7 = vsyncpa [#allocation3], 0
    %8 = vsyncpa [#allocation4], 0
    // Predicated region
    $region2: #{mr_teddy_td_forward.1} parent=1 // pred_check
      _
    $region3: #{mr_teddy_td_forward.1} parent=1 // pred_check_branch
      %10 = sbr.rel (0) target = $region5
    $region4: #{mr_teddy_td_forward.1} parent=1 // pred_region
      _
    $region5: #{mr_teddy_td_forward.1} parent=1 // pred_fallthru
      _
    // Predicated region
    $region6: #{mr_teddy_td_forward.1} parent=1 // pred_check
      _
    $region7: #{mr_teddy_td_forward.1} parent=1 // pred_check_branch
      %12 = sbr.rel (0) target = $region9
    $region8: #{mr_teddy_td_forward.1} parent=1 // pred_region
      %14 = vsyncadd [#allocation3], 0
      %s15 = sshll.u32 %s1, 4
      %s16 = int_to_ptr.hbm [resolvable:$true] %s15
      %s17 = sshll.u32 [#allocation2], 4
      %s18 = int_to_ptr.vmem [resolvable:$true] %s17
      %23 = dma.hbm_to_vmem [thread:$0]  %s16, 11264, %s18, [#allocation3], 128, 128, 8
    $region9: #{mr_teddy_td_forward.1} parent=1 // pred_fallthru
      _
    // Predicated region
    $region10: #{mr_teddy_td_forward.1} parent=1 // pred_check
      _
    $region11: #{mr_teddy_td_forward.1} parent=1 // pred_check_branch
      %25 = sbr.rel (0) target = $region13
    $region12: #{mr_teddy_td_forward.1} parent=1 // pred_region
      %27 = dma.done [#allocation3], 11264
    $region13: #{mr_teddy_td_forward.1} parent=1 // pred_fallthru
      _
    %v28 = vld [vmem:[%s0] sm:$0xff]
    %v29 = vld [vmem:[%s0 + $0x8] sm:$0xff]
    %v30 = vlaneseq
    %v31 = vand.u32 %v30, 127
    %32 = vset.pattern.permute.xlu0 0
    %33 = vperm.xlu0 %32, %v28
    %v34 = vpop.permute.xlu0 %33
    %35 = vset.pattern.permute.xlu0 0
    %36 = vperm.xlu0 %35, %v29
    %v37 = vpop.permute.xlu0 %36
    %vm38 = vcmp.eq.s32.totalorder %v31, %v34
    %vm39 = vcmp.eq.s32.totalorder %v31, %v37
    %v40 = vsel %vm38, 1, 0
    %v41 = vsel %vm39, 1, 0
    %v42 = vcvt.s32.f32 %v40
    %v43 = vcvt.s32.f32 %v41
    %v44 = vld [vmem:[#allocation2] sm:$0xff]
    %v45 = vld [vmem:[#allocation2 + $0x8] sm:$0xff]
    %v46 = vld [vmem:[#allocation2 + $0x10] sm:$0xff]
    %v47 = vld [vmem:[#allocation2 + $0x18] sm:$0xff]
    %v48 = vld [vmem:[#allocation2 + $0x20] sm:$0xff]
    %v49 = vld [vmem:[#allocation2 + $0x28] sm:$0xff]
    %v50 = vld [vmem:[#allocation2 + $0x30] sm:$0xff]
    %vm51 = vcmask 457728
    %v53 = vsel %vm51, %v42, 0
    %v56 = vsel %vm51, %v43, 0
    %58 = vmatpush.msra.mxu0 0.0
    %59 = vmatpush.msra.mxu0 0.0
    %60 = vmatpush.msra.mxu0 0.0
    %61 = vmatpush.msra.mxu0 0.0
    %62 = vmatpush.msra.mxu0 0.0
    %63 = vmatpush.msra.mxu0 0.0
    %64 = vmatpush.msra.mxu0 0.0
    %65 = vmatpush.msra.mxu0 0.0
    %66 = vmatpush.msra.mxu0 0.0
    %67 = vmatpush.msra.mxu0 %v50
    %68 = vmatpush.msra.mxu0 %v49
    %69 = vmatpush.msra.mxu0 %v48
    %70 = vmatpush.msra.mxu0 %v47
    %71 = vmatpush.msra.mxu0 %v46
    %72 = vmatpush.msra.mxu0 %v45
    %73 = vmatpush.msra.mxu0 %v44
    %74 = vmatmul.f32.gmra.mxu0 %v53
    %v75 = vpop.f32.mrf.mxu0
    %v76 = vadd.f32 0.0, %v75
    %77 = vmatmul.f32.gmra.mxu0 %v56
    %v78 = vpop.f32.mrf.mxu0
    %v79 = vadd.f32 0.0, %v78
    %80 = vdwg.mxu0
    %v81 = vld [vmem:[#allocation2 + $0x38] sm:$0xff]
    %v82 = vadd.f32 %v76, %v81
    %v83 = vadd.f32 %v79, %v81
    %v84 = vld [vmem:[#allocation2 + $0x68] sm:$0xff]
    %v85 = vld [vmem:[#allocation2 + $0x70] sm:$0xff]
    %v86 = vld [vmem:[#allocation2 + $0x78] sm:$0xff]
    %v87 = vld [vmem:[#allocation2 + $0x80] sm:$0xff]
    %v88 = vld [vmem:[#allocation2 + $0x88] sm:$0x1]
    %v89 = vperm.slane %v88, 0
    %vm90 = vcmask 261120
    %v92 = vsel %vm90, %v82, 0
    %v95 = vsel %vm90, %v83, 0
    %97 = vmatpush.msra.mxu0 0.0
    %98 = vmatpush.msra.mxu0 0.0
    %99 = vmatpush.msra.mxu0 0.0
    %100 = vmatpush.msra.mxu0 0.0
    %101 = vmatpush.msra.mxu0 0.0
    %102 = vmatpush.msra.mxu0 0.0
    %103 = vmatpush.msra.mxu0 0.0
    %104 = vmatpush.msra.mxu0 0.0
    %105 = vmatpush.msra.mxu0 0.0
    %106 = vmatpush.msra.mxu0 0.0
    %107 = vmatpush.msra.mxu0 0.0
    %108 = vmatpush.msra.mxu0 0.0
    %109 = vmatpush.msra.mxu0 %v87
    %110 = vmatpush.msra.mxu0 %v86
    %111 = vmatpush.msra.mxu0 %v85
    %112 = vmatpush.msra.mxu0 %v84
    %113 = vmatmul.f32.gmra.mxu0 %v92
    %v114 = vpop.f32.mrf.mxu0
    %v115 = vadd.f32 %v89, %v114
    %116 = vmatmul.f32.gmra.mxu0 %v95
    %v117 = vpop.f32.mrf.mxu0
    %v118 = vadd.f32 %v89, %v117
    %119 = vdwg.mxu0
    %v120 = vld [vmem:[#allocation2 + $0x130] sm:$0x3f]
    %v121 = vld [vmem:[#allocation2 + $0x90] sm:$0xff]
    %v122 = vld [vmem:[#allocation2 + $0x98] sm:$0xff]
    %v123 = vld [vmem:[#allocation2 + $0xa0] sm:$0xff]
    %v124 = vld [vmem:[#allocation2 + $0xa8] sm:$0xff]
    %v125 = vld [vmem:[#allocation2 + $0xb0] sm:$0x1]
    %v126 = vperm.slane %v125, 0
    %127 = vmatpush.msra.mxu0 0.0
    %128 = vmatpush.msra.mxu0 0.0
    %129 = vmatpush.msra.mxu0 0.0
    %130 = vmatpush.msra.mxu0 0.0
    %131 = vmatpush.msra.mxu0 0.0
    %132 = vmatpush.msra.mxu0 0.0
    %133 = vmatpush.msra.mxu0 0.0
    %134 = vmatpush.msra.mxu0 0.0
    %135 = vmatpush.msra.mxu0 0.0
    %136 = vmatpush.msra.mxu0 0.0
    %137 = vmatpush.msra.mxu0 0.0
    %138 = vmatpush.msra.mxu0 0.0
    %139 = vmatpush.msra.mxu0 %v124
    %140 = vmatpush.msra.mxu0 %v123
    %141 = vmatpush.msra.mxu0 %v122
    %142 = vmatpush.msra.mxu0 %v121
    %143 = vmatmul.f32.gmra.mxu0 %v92
    %v144 = vpop.f32.mrf.mxu0
    %v145 = vadd.f32 %v126, %v144
    %146 = vmatmul.f32.gmra.mxu0 %v95
    %v147 = vpop.f32.mrf.mxu0
    %v148 = vadd.f32 %v126, %v147
    %149 = vdwg.mxu0
    %v150 = vmul.f32 %v145, 0.35355338
    %v151 = vmul.f32 %v148, 0.35355338
    %v152 = vld [vmem:[#allocation2 + $0xb8] sm:$0xff]
    %v153 = vld [vmem:[#allocation2 + $0xc0] sm:$0xff]
    %v154 = vld [vmem:[#allocation2 + $0xc8] sm:$0xff]
    %v155 = vld [vmem:[#allocation2 + $0xd0] sm:$0xff]
    %v156 = vld [vmem:[#allocation2 + $0xd8] sm:$0x1]
    %159 = vrot.lane.b32.xlu0 %v150, 120
    %v160 = vpop.permute.xlu0 %159
    %161 = vrot.lane.b32.xlu0 %v151, 120
    %v162 = vpop.permute.xlu0 %161
    %163 = vrot.lane.b32.xlu0 %v150, 112
    %v164 = vpop.permute.xlu0 %163
    %165 = vrot.lane.b32.xlu0 %v151, 112
    %v166 = vpop.permute.xlu0 %165
    %167 = vrot.lane.b32.xlu0 %v150, 104
    %v168 = vpop.permute.xlu0 %167
    %169 = vrot.lane.b32.xlu0 %v151, 104
    %v170 = vpop.permute.xlu0 %169
    %173 = vrot.lane.b32.xlu0 %v145, 120
    %v174 = vpop.permute.xlu0 %173
    %175 = vrot.lane.b32.xlu0 %v148, 120
    %v176 = vpop.permute.xlu0 %175
    %177 = vrot.lane.b32.xlu0 %v145, 112
    %v178 = vpop.permute.xlu0 %177
    %179 = vrot.lane.b32.xlu0 %v148, 112
    %v180 = vpop.permute.xlu0 %179
    %181 = vrot.lane.b32.xlu0 %v145, 104
    %v182 = vpop.permute.xlu0 %181
    %183 = vrot.lane.b32.xlu0 %v148, 104
    %v184 = vpop.permute.xlu0 %183
    %185 = vrot.lane.b32.xlu0 %v145, 96
    %v186 = vpop.permute.xlu0 %185
    %vm187 = vcmask 64512
    %v188 = vsel %vm187, %v150, 0
    %v190 = vsel %vm187, %v186, 0
    %192 = vmatpush.xpose.msra.mxu0 0.0
    %193 = vmatpush.xpose.msra.mxu0 0.0
    %194 = vmatpush.xpose.msra.mxu0 0.0
    %195 = vmatpush.xpose.msra.mxu0 0.0
    %196 = vmatpush.xpose.msra.mxu0 0.0
    %197 = vmatpush.xpose.msra.mxu0 0.0
    %198 = vmatpush.xpose.msra.mxu0 0.0
    %199 = vmatpush.xpose.msra.mxu0 0.0
    %200 = vmatpush.xpose.msra.mxu0 0.0
    %201 = vmatpush.xpose.msra.mxu0 0.0
    %202 = vmatpush.xpose.msra.mxu0 0.0
    %203 = vmatpush.xpose.msra.mxu0 0.0
    %204 = vmatpush.xpose.msra.mxu0 0.0
    %205 = vmatpush.xpose.msra.mxu0 0.0
    %206 = vmatpush.xpose.msra.mxu0 0.0
    %207 = vmatpush.xpose.msra.mxu0 %v190
    %208 = vmatmul.f32.gmra.mxu0 %v188
    %v209 = vpop.f32.mrf.mxu0
    %v210 = vadd.f32 0.0, %v209
    %211 = vdwg.mxu0
    %212 = vrot.lane.b32.xlu0 %v148, 96
    %v213 = vpop.permute.xlu0 %212
    %v214 = vsel %vm187, %v151, 0
    %v216 = vsel %vm187, %v213, 0
    %218 = vmatpush.xpose.msra.mxu0 0.0
    %219 = vmatpush.xpose.msra.mxu0 0.0
    %220 = vmatpush.xpose.msra.mxu0 0.0
    %221 = vmatpush.xpose.msra.mxu0 0.0
    %222 = vmatpush.xpose.msra.mxu0 0.0
    %223 = vmatpush.xpose.msra.mxu0 0.0
    %224 = vmatpush.xpose.msra.mxu0 0.0
    %225 = vmatpush.xpose.msra.mxu0 0.0
    %226 = vmatpush.xpose.msra.mxu0 0.0
    %227 = vmatpush.xpose.msra.mxu0 0.0
    %228 = vmatpush.xpose.msra.mxu0 0.0
    %229 = vmatpush.xpose.msra.mxu0 0.0
    %230 = vmatpush.xpose.msra.mxu0 0.0
    %231 = vmatpush.xpose.msra.mxu0 0.0
    %232 = vmatpush.xpose.msra.mxu0 0.0
    %233 = vmatpush.xpose.msra.mxu0 %v216
    %234 = vmatmul.f32.gmra.mxu0 %v214
    %v235 = vpop.f32.mrf.mxu0
    %v236 = vadd.f32 0.0, %v235
    %237 = vdwg.mxu0
    %238 = vrot.lane.b32.xlu0 %v174, 96
    %v239 = vpop.permute.xlu0 %238
    %v240 = vsel %vm187, %v160, 0
    %v242 = vsel %vm187, %v239, 0
    %244 = vmatpush.xpose.msra.mxu0 0.0
    %245 = vmatpush.xpose.msra.mxu0 0.0
    %246 = vmatpush.xpose.msra.mxu0 0.0
    %247 = vmatpush.xpose.msra.mxu0 0.0
    %248 = vmatpush.xpose.msra.mxu0 0.0
    %249 = vmatpush.xpose.msra.mxu0 0.0
    %250 = vmatpush.xpose.msra.mxu0 0.0
    %251 = vmatpush.xpose.msra.mxu0 0.0
    %252 = vmatpush.xpose.msra.mxu0 0.0
    %253 = vmatpush.xpose.msra.mxu0 0.0
    %254 = vmatpush.xpose.msra.mxu0 0.0
    %255 = vmatpush.xpose.msra.mxu0 0.0
    %256 = vmatpush.xpose.msra.mxu0 0.0
    %257 = vmatpush.xpose.msra.mxu0 0.0
    %258 = vmatpush.xpose.msra.mxu0 0.0
    %259 = vmatpush.xpose.msra.mxu0 %v242
    %260 = vmatmul.f32.gmra.mxu0 %v240
    %v261 = vpop.f32.mrf.mxu0
    %v262 = vadd.f32 0.0, %v261
    %263 = vdwg.mxu0
    %264 = vrot.lane.b32.xlu0 %v176, 96
    %v265 = vpop.permute.xlu0 %264
    %v266 = vsel %vm187, %v162, 0
    %v268 = vsel %vm187, %v265, 0
    %270 = vmatpush.xpose.msra.mxu0 0.0
    %271 = vmatpush.xpose.msra.mxu0 0.0
    %272 = vmatpush.xpose.msra.mxu0 0.0
    %273 = vmatpush.xpose.msra.mxu0 0.0
    %274 = vmatpush.xpose.msra.mxu0 0.0
    %275 = vmatpush.xpose.msra.mxu0 0.0
    %276 = vmatpush.xpose.msra.mxu0 0.0
    %277 = vmatpush.xpose.msra.mxu0 0.0
    %278 = vmatpush.xpose.msra.mxu0 0.0
    %279 = vmatpush.xpose.msra.mxu0 0.0
    %280 = vmatpush.xpose.msra.mxu0 0.0
    %281 = vmatpush.xpose.msra.mxu0 0.0
    %282 = vmatpush.xpose.msra.mxu0 0.0
    %283 = vmatpush.xpose.msra.mxu0 0.0
    %284 = vmatpush.xpose.msra.mxu0 0.0
    %285 = vmatpush.xpose.msra.mxu0 %v268
    %286 = vmatmul.f32.gmra.mxu0 %v266
    %v287 = vpop.f32.mrf.mxu0
    %v288 = vadd.f32 0.0, %v287
    %289 = vdwg.mxu0
    %290 = vrot.lane.b32.xlu0 %v178, 96
    %v291 = vpop.permute.xlu0 %290
    %v292 = vsel %vm187, %v164, 0
    %v294 = vsel %vm187, %v291, 0
    %296 = vmatpush.xpose.msra.mxu0 0.0
    %297 = vmatpush.xpose.msra.mxu0 0.0
    %298 = vmatpush.xpose.msra.mxu0 0.0
    %299 = vmatpush.xpose.msra.mxu0 0.0
    %300 = vmatpush.xpose.msra.mxu0 0.0
    %301 = vmatpush.xpose.msra.mxu0 0.0
    %302 = vmatpush.xpose.msra.mxu0 0.0
    %303 = vmatpush.xpose.msra.mxu0 0.0
    %304 = vmatpush.xpose.msra.mxu0 0.0
    %305 = vmatpush.xpose.msra.mxu0 0.0
    %306 = vmatpush.xpose.msra.mxu0 0.0
    %307 = vmatpush.xpose.msra.mxu0 0.0
    %308 = vmatpush.xpose.msra.mxu0 0.0
    %309 = vmatpush.xpose.msra.mxu0 0.0
    %310 = vmatpush.xpose.msra.mxu0 0.0
    %311 = vmatpush.xpose.msra.mxu0 %v294
    %312 = vmatmul.f32.gmra.mxu0 %v292
    %v313 = vpop.f32.mrf.mxu0
    %v314 = vadd.f32 0.0, %v313
    %315 = vdwg.mxu0
    %316 = vrot.lane.b32.xlu0 %v180, 96
    %v317 = vpop.permute.xlu0 %316
    %v318 = vsel %vm187, %v166, 0
    %v320 = vsel %vm187, %v317, 0
    %322 = vmatpush.xpose.msra.mxu0 0.0
    %323 = vmatpush.xpose.msra.mxu0 0.0
    %324 = vmatpush.xpose.msra.mxu0 0.0
    %325 = vmatpush.xpose.msra.mxu0 0.0
    %326 = vmatpush.xpose.msra.mxu0 0.0
    %327 = vmatpush.xpose.msra.mxu0 0.0
    %328 = vmatpush.xpose.msra.mxu0 0.0
    %329 = vmatpush.xpose.msra.mxu0 0.0
    %330 = vmatpush.xpose.msra.mxu0 0.0
    %331 = vmatpush.xpose.msra.mxu0 0.0
    %332 = vmatpush.xpose.msra.mxu0 0.0
    %333 = vmatpush.xpose.msra.mxu0 0.0
    %334 = vmatpush.xpose.msra.mxu0 0.0
    %335 = vmatpush.xpose.msra.mxu0 0.0
    %336 = vmatpush.xpose.msra.mxu0 0.0
    %337 = vmatpush.xpose.msra.mxu0 %v320
    %338 = vmatmul.f32.gmra.mxu0 %v318
    %v339 = vpop.f32.mrf.mxu0
    %v340 = vadd.f32 0.0, %v339
    %341 = vdwg.mxu0
    %342 = vrot.lane.b32.xlu0 %v182, 96
    %v343 = vpop.permute.xlu0 %342
    %v344 = vsel %vm187, %v168, 0
    %v346 = vsel %vm187, %v343, 0
    %348 = vmatpush.xpose.msra.mxu0 0.0
    %349 = vmatpush.xpose.msra.mxu0 0.0
    %350 = vmatpush.xpose.msra.mxu0 0.0
    %351 = vmatpush.xpose.msra.mxu0 0.0
    %352 = vmatpush.xpose.msra.mxu0 0.0
    %353 = vmatpush.xpose.msra.mxu0 0.0
    %354 = vmatpush.xpose.msra.mxu0 0.0
    %355 = vmatpush.xpose.msra.mxu0 0.0
    %356 = vmatpush.xpose.msra.mxu0 0.0
    %357 = vmatpush.xpose.msra.mxu0 0.0
    %358 = vmatpush.xpose.msra.mxu0 0.0
    %359 = vmatpush.xpose.msra.mxu0 0.0
    %360 = vmatpush.xpose.msra.mxu0 0.0
    %361 = vmatpush.xpose.msra.mxu0 0.0
    %362 = vmatpush.xpose.msra.mxu0 0.0
    %363 = vmatpush.xpose.msra.mxu0 %v346
    %364 = vmatmul.f32.gmra.mxu0 %v344
    %v365 = vpop.f32.mrf.mxu0
    %v366 = vadd.f32 0.0, %v365
    %367 = vdwg.mxu0
    %368 = vrot.lane.b32.xlu0 %v184, 96
    %v369 = vpop.permute.xlu0 %368
    %v370 = vsel %vm187, %v170, 0
    %v372 = vsel %vm187, %v369, 0
    %374 = vmatpush.xpose.msra.mxu0 0.0
    %375 = vmatpush.xpose.msra.mxu0 0.0
    %376 = vmatpush.xpose.msra.mxu0 0.0
    %377 = vmatpush.xpose.msra.mxu0 0.0
    %378 = vmatpush.xpose.msra.mxu0 0.0
    %379 = vmatpush.xpose.msra.mxu0 0.0
    %380 = vmatpush.xpose.msra.mxu0 0.0
    %381 = vmatpush.xpose.msra.mxu0 0.0
    %382 = vmatpush.xpose.msra.mxu0 0.0
    %383 = vmatpush.xpose.msra.mxu0 0.0
    %384 = vmatpush.xpose.msra.mxu0 0.0
    %385 = vmatpush.xpose.msra.mxu0 0.0
    %386 = vmatpush.xpose.msra.mxu0 0.0
    %387 = vmatpush.xpose.msra.mxu0 0.0
    %388 = vmatpush.xpose.msra.mxu0 0.0
    %389 = vmatpush.xpose.msra.mxu0 %v372
    %390 = vmatmul.f32.gmra.mxu0 %v370
    %v391 = vpop.f32.mrf.mxu0
    %v392 = vadd.f32 0.0, %v391
    %393 = vdwg.mxu0
    %v394 = vsel %vm187, %v210, -inf
    %395 = vmax.xlane.f32.xlu0 %v394
    %v396 = vpop.xlane.xlu0 %395
    %v397 = vsel %vm187, %v236, -inf
    %398 = vmax.xlane.f32.xlu0 %v397
    %v399 = vpop.xlane.xlu0 %398
    %v400 = vsel %vm187, %v262, -inf
    %401 = vmax.xlane.f32.xlu0 %v400
    %v402 = vpop.xlane.xlu0 %401
    %v403 = vsel %vm187, %v288, -inf
    %404 = vmax.xlane.f32.xlu0 %v403
    %v405 = vpop.xlane.xlu0 %404
    %v406 = vsel %vm187, %v314, -inf
    %407 = vmax.xlane.f32.xlu0 %v406
    %v408 = vpop.xlane.xlu0 %407
    %v409 = vsel %vm187, %v340, -inf
    %410 = vmax.xlane.f32.xlu0 %v409
    %v411 = vpop.xlane.xlu0 %410
    %v412 = vsel %vm187, %v366, -inf
    %413 = vmax.xlane.f32.xlu0 %v412
    %v414 = vpop.xlane.xlu0 %413
    %v415 = vsel %vm187, %v392, -inf
    %416 = vmax.xlane.f32.xlu0 %v415
    %v417 = vpop.xlane.xlu0 %416
    %v418 = vsub.f32 %v210, %v396
    %v419 = vsub.f32 %v236, %v399
    %v420 = vsub.f32 %v262, %v402
    %v421 = vsub.f32 %v288, %v405
    %v422 = vsub.f32 %v314, %v408
    %v423 = vsub.f32 %v340, %v411
    %v424 = vsub.f32 %v366, %v414
    %v425 = vsub.f32 %v392, %v417
    %v426 = vmul.f32 %v418, 1.442695
    %v427 = vpow.pop %v426
    %v428 = vmul.f32 %v419, 1.442695
    %v429 = vpow.pop %v428
    %v430 = vmul.f32 %v420, 1.442695
    %v431 = vpow.pop %v430
    %v432 = vmul.f32 %v421, 1.442695
    %v433 = vpow.pop %v432
    %v434 = vmul.f32 %v422, 1.442695
    %v435 = vpow.pop %v434
    %v436 = vmul.f32 %v423, 1.442695
    %v437 = vpow.pop %v436
    %v438 = vmul.f32 %v424, 1.442695
    %v439 = vpow.pop %v438
    %v440 = vmul.f32 %v425, 1.442695
    %v441 = vpow.pop %v440
    %v442 = vsel %vm187, %v427, 0.0
    %443 = vadd.xlane.f32.xlu0 %v442
    %v444 = vpop.xlane.xlu0 %443
    %v445 = vsel %vm187, %v429, 0.0
    %446 = vadd.xlane.f32.xlu0 %v445
    %v447 = vpop.xlane.xlu0 %446
    %v448 = vsel %vm187, %v431, 0.0
    %449 = vadd.xlane.f32.xlu0 %v448
    %v450 = vpop.xlane.xlu0 %449
    %v451 = vsel %vm187, %v433, 0.0
    %452 = vadd.xlane.f32.xlu0 %v451
    %v453 = vpop.xlane.xlu0 %452
    %v454 = vsel %vm187, %v435, 0.0
    %455 = vadd.xlane.f32.xlu0 %v454
    %v456 = vpop.xlane.xlu0 %455
    %v457 = vsel %vm187, %v437, 0.0
    %458 = vadd.xlane.f32.xlu0 %v457
    %v459 = vpop.xlane.xlu0 %458
    %v460 = vsel %vm187, %v439, 0.0
    %461 = vadd.xlane.f32.xlu0 %v460
    %v462 = vpop.xlane.xlu0 %461
    %v463 = vsel %vm187, %v441, 0.0
    %464 = vadd.xlane.f32.xlu0 %v463
    %v465 = vpop.xlane.xlu0 %464
    %v466 = vrcp.pop %v444
    %v467 = vrcp.pop %v447
    %v468 = vrcp.pop %v450
    %v469 = vrcp.pop %v453
    %v470 = vrcp.pop %v456
    %v471 = vrcp.pop %v459
    %v472 = vrcp.pop %v462
    %v473 = vrcp.pop %v465
    %v474 = vmul.f32 %v427, %v466
    %v475 = vmul.f32 %v429, %v467
    %v476 = vmul.f32 %v431, %v468
    %v477 = vmul.f32 %v433, %v469
    %v478 = vmul.f32 %v435, %v470
    %v479 = vmul.f32 %v437, %v471
    %v480 = vmul.f32 %v439, %v472
    %v481 = vmul.f32 %v441, %v473
    %482 = vrot.lane.b32.xlu0 %v145, 64
    %v483 = vpop.permute.xlu0 %482
    %v486 = vsel %vm187, %v474, 0
    %488 = vmatpush.msra.mxu0 0.0
    %489 = vmatpush.msra.mxu0 0.0
    %490 = vmatpush.msra.mxu0 0.0
    %491 = vmatpush.msra.mxu0 0.0
    %492 = vmatpush.msra.mxu0 0.0
    %493 = vmatpush.msra.mxu0 0.0
    %494 = vmatpush.msra.mxu0 0.0
    %495 = vmatpush.msra.mxu0 0.0
    %496 = vmatpush.msra.mxu0 0.0
    %497 = vmatpush.msra.mxu0 0.0
    %498 = vmatpush.msra.mxu0 0.0
    %499 = vmatpush.msra.mxu0 0.0
    %500 = vmatpush.msra.mxu0 0.0
    %501 = vmatpush.msra.mxu0 0.0
    %502 = vmatpush.msra.mxu0 0.0
    %503 = vmatpush.msra.mxu0 %v483
    %504 = vmatmul.f32.gmra.mxu0 %v486
    %v505 = vpop.f32.mrf.mxu0
    %v506 = vadd.f32 0.0, %v505
    %507 = vdwg.mxu0
    %508 = vrot.lane.b32.xlu0 %v148, 64
    %v509 = vpop.permute.xlu0 %508
    %v512 = vsel %vm187, %v475, 0
    %514 = vmatpush.msra.mxu0 0.0
    %515 = vmatpush.msra.mxu0 0.0
    %516 = vmatpush.msra.mxu0 0.0
    %517 = vmatpush.msra.mxu0 0.0
    %518 = vmatpush.msra.mxu0 0.0
    %519 = vmatpush.msra.mxu0 0.0
    %520 = vmatpush.msra.mxu0 0.0
    %521 = vmatpush.msra.mxu0 0.0
    %522 = vmatpush.msra.mxu0 0.0
    %523 = vmatpush.msra.mxu0 0.0
    %524 = vmatpush.msra.mxu0 0.0
    %525 = vmatpush.msra.mxu0 0.0
    %526 = vmatpush.msra.mxu0 0.0
    %527 = vmatpush.msra.mxu0 0.0
    %528 = vmatpush.msra.mxu0 0.0
    %529 = vmatpush.msra.mxu0 %v509
    %530 = vmatmul.f32.gmra.mxu0 %v512
    %v531 = vpop.f32.mrf.mxu0
    %v532 = vadd.f32 0.0, %v531
    %533 = vdwg.mxu0
    %534 = vrot.lane.b32.xlu0 %v174, 64
    %v535 = vpop.permute.xlu0 %534
    %v538 = vsel %vm187, %v476, 0
    %540 = vmatpush.msra.mxu0 0.0
    %541 = vmatpush.msra.mxu0 0.0
    %542 = vmatpush.msra.mxu0 0.0
    %543 = vmatpush.msra.mxu0 0.0
    %544 = vmatpush.msra.mxu0 0.0
    %545 = vmatpush.msra.mxu0 0.0
    %546 = vmatpush.msra.mxu0 0.0
    %547 = vmatpush.msra.mxu0 0.0
    %548 = vmatpush.msra.mxu0 0.0
    %549 = vmatpush.msra.mxu0 0.0
    %550 = vmatpush.msra.mxu0 0.0
    %551 = vmatpush.msra.mxu0 0.0
    %552 = vmatpush.msra.mxu0 0.0
    %553 = vmatpush.msra.mxu0 0.0
    %554 = vmatpush.msra.mxu0 0.0
    %555 = vmatpush.msra.mxu0 %v535
    %556 = vmatmul.f32.gmra.mxu0 %v538
    %v557 = vpop.f32.mrf.mxu0
    %v558 = vadd.f32 0.0, %v557
    %559 = vdwg.mxu0
    %560 = vrot.lane.b32.xlu0 %v176, 64
    %v561 = vpop.permute.xlu0 %560
    %v564 = vsel %vm187, %v477, 0
    %566 = vmatpush.msra.mxu0 0.0
    %567 = vmatpush.msra.mxu0 0.0
    %568 = vmatpush.msra.mxu0 0.0
    %569 = vmatpush.msra.mxu0 0.0
    %570 = vmatpush.msra.mxu0 0.0
    %571 = vmatpush.msra.mxu0 0.0
    %572 = vmatpush.msra.mxu0 0.0
    %573 = vmatpush.msra.mxu0 0.0
    %574 = vmatpush.msra.mxu0 0.0
    %575 = vmatpush.msra.mxu0 0.0
    %576 = vmatpush.msra.mxu0 0.0
    %577 = vmatpush.msra.mxu0 0.0
    %578 = vmatpush.msra.mxu0 0.0
    %579 = vmatpush.msra.mxu0 0.0
    %580 = vmatpush.msra.mxu0 0.0
    %581 = vmatpush.msra.mxu0 %v561
    %582 = vmatmul.f32.gmra.mxu0 %v564
    %v583 = vpop.f32.mrf.mxu0
    %v584 = vadd.f32 0.0, %v583
    %585 = vdwg.mxu0
    %586 = vrot.lane.b32.xlu0 %v178, 64
    %v587 = vpop.permute.xlu0 %586
    %v590 = vsel %vm187, %v478, 0
    %592 = vmatpush.msra.mxu0 0.0
    %593 = vmatpush.msra.mxu0 0.0
    %594 = vmatpush.msra.mxu0 0.0
    %595 = vmatpush.msra.mxu0 0.0
    %596 = vmatpush.msra.mxu0 0.0
    %597 = vmatpush.msra.mxu0 0.0
    %598 = vmatpush.msra.mxu0 0.0
    %599 = vmatpush.msra.mxu0 0.0
    %600 = vmatpush.msra.mxu0 0.0
    %601 = vmatpush.msra.mxu0 0.0
    %602 = vmatpush.msra.mxu0 0.0
    %603 = vmatpush.msra.mxu0 0.0
    %604 = vmatpush.msra.mxu0 0.0
    %605 = vmatpush.msra.mxu0 0.0
    %606 = vmatpush.msra.mxu0 0.0
    %607 = vmatpush.msra.mxu0 %v587
    %608 = vmatmul.f32.gmra.mxu0 %v590
    %v609 = vpop.f32.mrf.mxu0
    %v610 = vadd.f32 0.0, %v609
    %611 = vdwg.mxu0
    %612 = vrot.lane.b32.xlu0 %v180, 64
    %v613 = vpop.permute.xlu0 %612
    %v616 = vsel %vm187, %v479, 0
    %618 = vmatpush.msra.mxu0 0.0
    %619 = vmatpush.msra.mxu0 0.0
    %620 = vmatpush.msra.mxu0 0.0
    %621 = vmatpush.msra.mxu0 0.0
    %622 = vmatpush.msra.mxu0 0.0
    %623 = vmatpush.msra.mxu0 0.0
    %624 = vmatpush.msra.mxu0 0.0
    %625 = vmatpush.msra.mxu0 0.0
    %626 = vmatpush.msra.mxu0 0.0
    %627 = vmatpush.msra.mxu0 0.0
    %628 = vmatpush.msra.mxu0 0.0
    %629 = vmatpush.msra.mxu0 0.0
    %630 = vmatpush.msra.mxu0 0.0
    %631 = vmatpush.msra.mxu0 0.0
    %632 = vmatpush.msra.mxu0 0.0
    %633 = vmatpush.msra.mxu0 %v613
    %634 = vmatmul.f32.gmra.mxu0 %v616
    %v635 = vpop.f32.mrf.mxu0
    %v636 = vadd.f32 0.0, %v635
    %637 = vdwg.mxu0
    %638 = vrot.lane.b32.xlu0 %v182, 64
    %v639 = vpop.permute.xlu0 %638
    %v642 = vsel %vm187, %v480, 0
    %644 = vmatpush.msra.mxu0 0.0
    %645 = vmatpush.msra.mxu0 0.0
    %646 = vmatpush.msra.mxu0 0.0
    %647 = vmatpush.msra.mxu0 0.0
    %648 = vmatpush.msra.mxu0 0.0
    %649 = vmatpush.msra.mxu0 0.0
    %650 = vmatpush.msra.mxu0 0.0
    %651 = vmatpush.msra.mxu0 0.0
    %652 = vmatpush.msra.mxu0 0.0
    %653 = vmatpush.msra.mxu0 0.0
    %654 = vmatpush.msra.mxu0 0.0
    %655 = vmatpush.msra.mxu0 0.0
    %656 = vmatpush.msra.mxu0 0.0
    %657 = vmatpush.msra.mxu0 0.0
    %658 = vmatpush.msra.mxu0 0.0
    %659 = vmatpush.msra.mxu0 %v639
    %660 = vmatmul.f32.gmra.mxu0 %v642
    %v661 = vpop.f32.mrf.mxu0
    %v662 = vadd.f32 0.0, %v661
    %663 = vdwg.mxu0
    %664 = vrot.lane.b32.xlu0 %v184, 64
    %v665 = vpop.permute.xlu0 %664
    %v668 = vsel %vm187, %v481, 0
    %670 = vmatpush.msra.mxu0 0.0
    %671 = vmatpush.msra.mxu0 0.0
    %672 = vmatpush.msra.mxu0 0.0
    %673 = vmatpush.msra.mxu0 0.0
    %674 = vmatpush.msra.mxu0 0.0
    %675 = vmatpush.msra.mxu0 0.0
    %676 = vmatpush.msra.mxu0 0.0
    %677 = vmatpush.msra.mxu0 0.0
    %678 = vmatpush.msra.mxu0 0.0
    %679 = vmatpush.msra.mxu0 0.0
    %680 = vmatpush.msra.mxu0 0.0
    %681 = vmatpush.msra.mxu0 0.0
    %682 = vmatpush.msra.mxu0 0.0
    %683 = vmatpush.msra.mxu0 0.0
    %684 = vmatpush.msra.mxu0 0.0
    %685 = vmatpush.msra.mxu0 %v665
    %686 = vmatmul.f32.gmra.mxu0 %v668
    %v687 = vpop.f32.mrf.mxu0
    %v688 = vadd.f32 0.0, %v687
    %689 = vdwg.mxu0
    %v691 = vsel %vm187, %v558, 0
    %v694 = vsel %vm187, %v584, 0
    %696 = vmatpush.msra.mxu0 0.0
    %697 = vmatpush.msra.mxu0 0.0
    %698 = vmatpush.msra.mxu0 0.0
    %699 = vmatpush.msra.mxu0 0.0
    %700 = vmatpush.msra.mxu0 0.0
    %701 = vmatpush.msra.mxu0 0.0
    %702 = vmatpush.msra.mxu0 0.0
    %703 = vmatpush.msra.mxu0 0.0
    %704 = vmatpush.msra.mxu0 0.0
    %705 = vmatpush.msra.mxu0 0.0
    %706 = vmatpush.msra.mxu0 0.0
    %707 = vmatpush.msra.mxu0 0.0
    %708 = vmatpush.msra.mxu0 0.0
    %709 = vmatpush.msra.mxu0 0.0
    %710 = vmatpush.msra.mxu0 0.0
    %711 = vmatpush.msra.mxu0 %v153
    %712 = vmatmul.f32.gmra.mxu0 %v691
    %v713 = vpop.f32.mrf.mxu0
    %v714 = vadd.f32 0.0, %v713
    %715 = vmatmul.f32.gmra.mxu0 %v694
    %v716 = vpop.f32.mrf.mxu0
    %v717 = vadd.f32 0.0, %v716
    %718 = vdwg.mxu0
    %v720 = vsel %vm187, %v506, 0
    %v723 = vsel %vm187, %v532, 0
    %725 = vmatpush.msra.mxu0 0.0
    %726 = vmatpush.msra.mxu0 0.0
    %727 = vmatpush.msra.mxu0 0.0
    %728 = vmatpush.msra.mxu0 0.0
    %729 = vmatpush.msra.mxu0 0.0
    %730 = vmatpush.msra.mxu0 0.0
    %731 = vmatpush.msra.mxu0 0.0
    %732 = vmatpush.msra.mxu0 0.0
    %733 = vmatpush.msra.mxu0 0.0
    %734 = vmatpush.msra.mxu0 0.0
    %735 = vmatpush.msra.mxu0 0.0
    %736 = vmatpush.msra.mxu0 0.0
    %737 = vmatpush.msra.mxu0 0.0
    %738 = vmatpush.msra.mxu0 0.0
    %739 = vmatpush.msra.mxu0 0.0
    %740 = vmatpush.msra.mxu0 %v152
    %741 = vmatmul.f32.gmra.mxu0 %v720
    %v742 = vpop.f32.mrf.mxu0
    %v743 = vadd.f32 %v714, %v742
    %744 = vmatmul.f32.gmra.mxu0 %v723
    %v745 = vpop.f32.mrf.mxu0
    %v746 = vadd.f32 %v717, %v745
    %747 = vdwg.mxu0
    %v749 = vsel %vm187, %v610, 0
    %v752 = vsel %vm187, %v636, 0
    %754 = vmatpush.msra.mxu0 0.0
    %755 = vmatpush.msra.mxu0 0.0
    %756 = vmatpush.msra.mxu0 0.0
    %757 = vmatpush.msra.mxu0 0.0
    %758 = vmatpush.msra.mxu0 0.0
    %759 = vmatpush.msra.mxu0 0.0
    %760 = vmatpush.msra.mxu0 0.0
    %761 = vmatpush.msra.mxu0 0.0
    %762 = vmatpush.msra.mxu0 0.0
    %763 = vmatpush.msra.mxu0 0.0
    %764 = vmatpush.msra.mxu0 0.0
    %765 = vmatpush.msra.mxu0 0.0
    %766 = vmatpush.msra.mxu0 0.0
    %767 = vmatpush.msra.mxu0 0.0
    %768 = vmatpush.msra.mxu0 0.0
    %769 = vmatpush.msra.mxu0 %v154
    %770 = vmatmul.f32.gmra.mxu0 %v749
    %v771 = vpop.f32.mrf.mxu0
    %v772 = vadd.f32 0.0, %v771
    %773 = vmatmul.f32.gmra.mxu0 %v752
    %v774 = vpop.f32.mrf.mxu0
    %v775 = vadd.f32 0.0, %v774
    %776 = vdwg.mxu0
    %v777 = vadd.f32 %v743, %v772
    %v778 = vadd.f32 %v746, %v775
    %v780 = vsel %vm187, %v662, 0
    %v783 = vsel %vm187, %v688, 0
    %785 = vmatpush.msra.mxu0 0.0
    %786 = vmatpush.msra.mxu0 0.0
    %787 = vmatpush.msra.mxu0 0.0
    %788 = vmatpush.msra.mxu0 0.0
    %789 = vmatpush.msra.mxu0 0.0
    %790 = vmatpush.msra.mxu0 0.0
    %791 = vmatpush.msra.mxu0 0.0
    %792 = vmatpush.msra.mxu0 0.0
    %793 = vmatpush.msra.mxu0 0.0
    %794 = vmatpush.msra.mxu0 0.0
    %795 = vmatpush.msra.mxu0 0.0
    %796 = vmatpush.msra.mxu0 0.0
    %797 = vmatpush.msra.mxu0 0.0
    %798 = vmatpush.msra.mxu0 0.0
    %799 = vmatpush.msra.mxu0 0.0
    %800 = vmatpush.msra.mxu0 %v155
    %801 = vmatmul.f32.gmra.mxu0 %v780
    %v802 = vpop.f32.mrf.mxu0
    %v803 = vadd.f32 0.0, %v802
    %804 = vmatmul.f32.gmra.mxu0 %v783
    %v805 = vpop.f32.mrf.mxu0
    %v806 = vadd.f32 0.0, %v805
    %807 = vdwg.mxu0
    %v808 = vadd.f32 %v777, %v803
    %v809 = vadd.f32 %v778, %v806
    %v810 = vperm.slane %v156, 0
    %v811 = vadd.f32 %v808, %v810
    %v812 = vadd.f32 %v809, %v810
    %v813 = vadd.f32 %v82, %v811
    %v814 = vadd.f32 %v83, %v812
    %v815 = vsel %vm90, %v813, 0.0
    %816 = vadd.xlane.f32.xlu0 %v815
    %v817 = vpop.xlane.xlu0 %816
    %v818 = vsel %vm90, %v814, 0.0
    %819 = vadd.xlane.f32.xlu0 %v818
    %v820 = vpop.xlane.xlu0 %819
    %v821 = vrcp.pop 32.0
    %v822 = vmul.f32 32.0, %v821
    %v823 = vsub.f32 1.0, %v822
    %v824 = vmul.f32 %v821, %v823
    %v825 = vadd.f32 %v821, %v824
    %vm826 = vweird.f32 %v821
    %v827 = vsel %vm826, %v821, %v825
    %v828 = vmul.f32 %v817, %v827
    %v829 = vmul.f32 %v820, %v827
    %v830 = vsub.f32 %v813, %v828
    %v831 = vsub.f32 %v814, %v829
    %v832 = vmul.f32 %v830, %v830
    %v833 = vmul.f32 %v831, %v831
    %v834 = vsel %vm90, %v832, 0.0
    %835 = vadd.xlane.f32.xlu0 %v834
    %v836 = vpop.xlane.xlu0 %835
    %v837 = vsel %vm90, %v833, 0.0
    %838 = vadd.xlane.f32.xlu0 %v837
    %v839 = vpop.xlane.xlu0 %838
    %v840 = vmul.f32 %v836, %v827
    %v841 = vmul.f32 %v839, %v827
    %v842 = vadd.f32 %v840, 1e-05
    %v843 = vadd.f32 %v841, 1e-05
    %v844 = vrsqrt.pop %v842
    %v845 = vmul.f32 %v844, %v842
    %v846 = vmul.f32 %v845, %v844
    %v847 = vmul.f32 0.5, %v846
    %v848 = vsub.f32 1.5, %v847
    %v849 = vmul.f32 %v844, %v848
    %vm850 = vweird.f32 %v842
    %vm851 = vweird.f32 %v844
    %vm852 = vmor %vm850, %vm851
    %v853 = vsel %vm852, %v844, %v849
    %v854 = vrsqrt.pop %v843
    %v855 = vmul.f32 %v854, %v843
    %v856 = vmul.f32 %v855, %v854
    %v857 = vmul.f32 0.5, %v856
    %v858 = vsub.f32 1.5, %v857
    %v859 = vmul.f32 %v854, %v858
    %vm860 = vweird.f32 %v843
    %vm861 = vweird.f32 %v854
    %vm862 = vmor %vm860, %vm861
    %v863 = vsel %vm862, %v854, %v859
    %v864 = vmul.f32 %v830, %v853
    %v865 = vmul.f32 %v831, %v863
    %v866 = vperm.slane %v120, 0
    %v867 = vmul.f32 %v864, %v866
    %v868 = vmul.f32 %v865, %v866
    %v869 = vperm.slane %v120, 1
    %v870 = vadd.f32 %v867, %v869
    %v871 = vadd.f32 %v868, %v869
    %v872 = vld [vmem:[#allocation2 + $0xe0] sm:$0xff]
    %v873 = vld [vmem:[#allocation2 + $0xe8] sm:$0xff]
    %v874 = vld [vmem:[#allocation2 + $0xf0] sm:$0xff]
    %v875 = vld [vmem:[#allocation2 + $0xf8] sm:$0xff]
    %v876 = vld [vmem:[#allocation2 + $0x100] sm:$0x1]
    %v877 = vperm.slane %v876, 0
    %v879 = vsel %vm90, %v870, 0
    %v882 = vsel %vm90, %v871, 0
    %884 = vmatpush.msra.mxu0 0.0
    %885 = vmatpush.msra.mxu0 0.0
    %886 = vmatpush.msra.mxu0 0.0
    %887 = vmatpush.msra.mxu0 0.0
    %888 = vmatpush.msra.mxu0 0.0
    %889 = vmatpush.msra.mxu0 0.0
    %890 = vmatpush.msra.mxu0 0.0
    %891 = vmatpush.msra.mxu0 0.0
    %892 = vmatpush.msra.mxu0 0.0
    %893 = vmatpush.msra.mxu0 0.0
    %894 = vmatpush.msra.mxu0 0.0
    %895 = vmatpush.msra.mxu0 0.0
    %896 = vmatpush.msra.mxu0 %v875
    %897 = vmatpush.msra.mxu0 %v874
    %898 = vmatpush.msra.mxu0 %v873
    %899 = vmatpush.msra.mxu0 %v872
    %900 = vmatmul.f32.gmra.mxu0 %v879
    %v901 = vpop.f32.mrf.mxu0
    %v902 = vadd.f32 %v877, %v901
    %903 = vmatmul.f32.gmra.mxu0 %v882
    %v904 = vpop.f32.mrf.mxu0
    %v905 = vadd.f32 %v877, %v904
    %906 = vdwg.mxu0
    %v907 = vmul.f32 %v902, 0.35355338
    %v908 = vmul.f32 %v905, 0.35355338
    %v909 = vld [vmem:[#allocation2 + $0x108] sm:$0xff]
    %v910 = vld [vmem:[#allocation2 + $0x110] sm:$0xff]
    %v911 = vld [vmem:[#allocation2 + $0x118] sm:$0xff]
    %v912 = vld [vmem:[#allocation2 + $0x120] sm:$0xff]
    %v913 = vld [vmem:[#allocation2 + $0x128] sm:$0x1]
    %916 = vrot.lane.b32.xlu0 %v907, 120
    %v917 = vpop.permute.xlu0 %916
    %918 = vrot.lane.b32.xlu0 %v908, 120
    %v919 = vpop.permute.xlu0 %918
    %920 = vrot.lane.b32.xlu0 %v907, 112
    %v921 = vpop.permute.xlu0 %920
    %922 = vrot.lane.b32.xlu0 %v908, 112
    %v923 = vpop.permute.xlu0 %922
    %924 = vrot.lane.b32.xlu0 %v907, 104
    %v925 = vpop.permute.xlu0 %924
    %926 = vrot.lane.b32.xlu0 %v908, 104
    %v927 = vpop.permute.xlu0 %926
    %930 = vrot.lane.b32.xlu0 %v115, 120
    %v931 = vpop.permute.xlu0 %930
    %932 = vrot.lane.b32.xlu0 %v118, 120
    %v933 = vpop.permute.xlu0 %932
    %934 = vrot.lane.b32.xlu0 %v115, 112
    %v935 = vpop.permute.xlu0 %934
    %936 = vrot.lane.b32.xlu0 %v118, 112
    %v937 = vpop.permute.xlu0 %936
    %938 = vrot.lane.b32.xlu0 %v115, 104
    %v939 = vpop.permute.xlu0 %938
    %940 = vrot.lane.b32.xlu0 %v118, 104
    %v941 = vpop.permute.xlu0 %940
    %v942 = vsel %vm187, %v907, 0
    %v944 = vsel %vm187, %v115, 0
    %946 = vmatpush.xpose.msra.mxu0 0.0
    %947 = vmatpush.xpose.msra.mxu0 0.0
    %948 = vmatpush.xpose.msra.mxu0 0.0
    %949 = vmatpush.xpose.msra.mxu0 0.0
    %950 = vmatpush.xpose.msra.mxu0 0.0
    %951 = vmatpush.xpose.msra.mxu0 0.0
    %952 = vmatpush.xpose.msra.mxu0 0.0
    %953 = vmatpush.xpose.msra.mxu0 0.0
    %954 = vmatpush.xpose.msra.mxu0 0.0
    %955 = vmatpush.xpose.msra.mxu0 0.0
    %956 = vmatpush.xpose.msra.mxu0 0.0
    %957 = vmatpush.xpose.msra.mxu0 0.0
    %958 = vmatpush.xpose.msra.mxu0 0.0
    %959 = vmatpush.xpose.msra.mxu0 0.0
    %960 = vmatpush.xpose.msra.mxu0 0.0
    %961 = vmatpush.xpose.msra.mxu0 %v944
    %962 = vmatmul.f32.gmra.mxu0 %v942
    %v963 = vpop.f32.mrf.mxu0
    %v964 = vadd.f32 0.0, %v963
    %965 = vdwg.mxu0
    %v966 = vsel %vm187, %v908, 0
    %v968 = vsel %vm187, %v118, 0
    %970 = vmatpush.xpose.msra.mxu0 0.0
    %971 = vmatpush.xpose.msra.mxu0 0.0
    %972 = vmatpush.xpose.msra.mxu0 0.0
    %973 = vmatpush.xpose.msra.mxu0 0.0
    %974 = vmatpush.xpose.msra.mxu0 0.0
    %975 = vmatpush.xpose.msra.mxu0 0.0
    %976 = vmatpush.xpose.msra.mxu0 0.0
    %977 = vmatpush.xpose.msra.mxu0 0.0
    %978 = vmatpush.xpose.msra.mxu0 0.0
    %979 = vmatpush.xpose.msra.mxu0 0.0
    %980 = vmatpush.xpose.msra.mxu0 0.0
    %981 = vmatpush.xpose.msra.mxu0 0.0
    %982 = vmatpush.xpose.msra.mxu0 0.0
    %983 = vmatpush.xpose.msra.mxu0 0.0
    %984 = vmatpush.xpose.msra.mxu0 0.0
    %985 = vmatpush.xpose.msra.mxu0 %v968
    %986 = vmatmul.f32.gmra.mxu0 %v966
    %v987 = vpop.f32.mrf.mxu0
    %v988 = vadd.f32 0.0, %v987
    %989 = vdwg.mxu0
    %v990 = vsel %vm187, %v917, 0
    %v992 = vsel %vm187, %v931, 0
    %994 = vmatpush.xpose.msra.mxu0 0.0
    %995 = vmatpush.xpose.msra.mxu0 0.0
    %996 = vmatpush.xpose.msra.mxu0 0.0
    %997 = vmatpush.xpose.msra.mxu0 0.0
    %998 = vmatpush.xpose.msra.mxu0 0.0
    %999 = vmatpush.xpose.msra.mxu0 0.0
    %1000 = vmatpush.xpose.msra.mxu0 0.0
    %1001 = vmatpush.xpose.msra.mxu0 0.0
    %1002 = vmatpush.xpose.msra.mxu0 0.0
    %1003 = vmatpush.xpose.msra.mxu0 0.0
    %1004 = vmatpush.xpose.msra.mxu0 0.0
    %1005 = vmatpush.xpose.msra.mxu0 0.0
    %1006 = vmatpush.xpose.msra.mxu0 0.0
    %1007 = vmatpush.xpose.msra.mxu0 0.0
    %1008 = vmatpush.xpose.msra.mxu0 0.0
    %1009 = vmatpush.xpose.msra.mxu0 %v992
    %1010 = vmatmul.f32.gmra.mxu0 %v990
    %v1011 = vpop.f32.mrf.mxu0
    %v1012 = vadd.f32 0.0, %v1011
    %1013 = vdwg.mxu0
    %v1014 = vsel %vm187, %v919, 0
    %v1016 = vsel %vm187, %v933, 0
    %1018 = vmatpush.xpose.msra.mxu0 0.0
    %1019 = vmatpush.xpose.msra.mxu0 0.0
    %1020 = vmatpush.xpose.msra.mxu0 0.0
    %1021 = vmatpush.xpose.msra.mxu0 0.0
    %1022 = vmatpush.xpose.msra.mxu0 0.0
    %1023 = vmatpush.xpose.msra.mxu0 0.0
    %1024 = vmatpush.xpose.msra.mxu0 0.0
    %1025 = vmatpush.xpose.msra.mxu0 0.0
    %1026 = vmatpush.xpose.msra.mxu0 0.0
    %1027 = vmatpush.xpose.msra.mxu0 0.0
    %1028 = vmatpush.xpose.msra.mxu0 0.0
    %1029 = vmatpush.xpose.msra.mxu0 0.0
    %1030 = vmatpush.xpose.msra.mxu0 0.0
    %1031 = vmatpush.xpose.msra.mxu0 0.0
    %1032 = vmatpush.xpose.msra.mxu0 0.0
    %1033 = vmatpush.xpose.msra.mxu0 %v1016
    %1034 = vmatmul.f32.gmra.mxu0 %v1014
    %v1035 = vpop.f32.mrf.mxu0
    %v1036 = vadd.f32 0.0, %v1035
    %1037 = vdwg.mxu0
    %v1038 = vsel %vm187, %v921, 0
    %v1040 = vsel %vm187, %v935, 0
    %1042 = vmatpush.xpose.msra.mxu0 0.0
    %1043 = vmatpush.xpose.msra.mxu0 0.0
    %1044 = vmatpush.xpose.msra.mxu0 0.0
    %1045 = vmatpush.xpose.msra.mxu0 0.0
    %1046 = vmatpush.xpose.msra.mxu0 0.0
    %1047 = vmatpush.xpose.msra.mxu0 0.0
    %1048 = vmatpush.xpose.msra.mxu0 0.0
    %1049 = vmatpush.xpose.msra.mxu0 0.0
    %1050 = vmatpush.xpose.msra.mxu0 0.0
    %1051 = vmatpush.xpose.msra.mxu0 0.0
    %1052 = vmatpush.xpose.msra.mxu0 0.0
    %1053 = vmatpush.xpose.msra.mxu0 0.0
    %1054 = vmatpush.xpose.msra.mxu0 0.0
    %1055 = vmatpush.xpose.msra.mxu0 0.0
    %1056 = vmatpush.xpose.msra.mxu0 0.0
    %1057 = vmatpush.xpose.msra.mxu0 %v1040
    %1058 = vmatmul.f32.gmra.mxu0 %v1038
    %v1059 = vpop.f32.mrf.mxu0
    %v1060 = vadd.f32 0.0, %v1059
    %1061 = vdwg.mxu0
    %v1062 = vsel %vm187, %v923, 0
    %v1064 = vsel %vm187, %v937, 0
    %1066 = vmatpush.xpose.msra.mxu0 0.0
    %1067 = vmatpush.xpose.msra.mxu0 0.0
    %1068 = vmatpush.xpose.msra.mxu0 0.0
    %1069 = vmatpush.xpose.msra.mxu0 0.0
    %1070 = vmatpush.xpose.msra.mxu0 0.0
    %1071 = vmatpush.xpose.msra.mxu0 0.0
    %1072 = vmatpush.xpose.msra.mxu0 0.0
    %1073 = vmatpush.xpose.msra.mxu0 0.0
    %1074 = vmatpush.xpose.msra.mxu0 0.0
    %1075 = vmatpush.xpose.msra.mxu0 0.0
    %1076 = vmatpush.xpose.msra.mxu0 0.0
    %1077 = vmatpush.xpose.msra.mxu0 0.0
    %1078 = vmatpush.xpose.msra.mxu0 0.0
    %1079 = vmatpush.xpose.msra.mxu0 0.0
    %1080 = vmatpush.xpose.msra.mxu0 0.0
    %1081 = vmatpush.xpose.msra.mxu0 %v1064
    %1082 = vmatmul.f32.gmra.mxu0 %v1062
    %v1083 = vpop.f32.mrf.mxu0
    %v1084 = vadd.f32 0.0, %v1083
    %1085 = vdwg.mxu0
    %v1086 = vsel %vm187, %v925, 0
    %v1088 = vsel %vm187, %v939, 0
    %1090 = vmatpush.xpose.msra.mxu0 0.0
    %1091 = vmatpush.xpose.msra.mxu0 0.0
    %1092 = vmatpush.xpose.msra.mxu0 0.0
    %1093 = vmatpush.xpose.msra.mxu0 0.0
    %1094 = vmatpush.xpose.msra.mxu0 0.0
    %1095 = vmatpush.xpose.msra.mxu0 0.0
    %1096 = vmatpush.xpose.msra.mxu0 0.0
    %1097 = vmatpush.xpose.msra.mxu0 0.0
    %1098 = vmatpush.xpose.msra.mxu0 0.0
    %1099 = vmatpush.xpose.msra.mxu0 0.0
    %1100 = vmatpush.xpose.msra.mxu0 0.0
    %1101 = vmatpush.xpose.msra.mxu0 0.0
    %1102 = vmatpush.xpose.msra.mxu0 0.0
    %1103 = vmatpush.xpose.msra.mxu0 0.0
    %1104 = vmatpush.xpose.msra.mxu0 0.0
    %1105 = vmatpush.xpose.msra.mxu0 %v1088
    %1106 = vmatmul.f32.gmra.mxu0 %v1086
    %v1107 = vpop.f32.mrf.mxu0
    %v1108 = vadd.f32 0.0, %v1107
    %1109 = vdwg.mxu0
    %v1110 = vsel %vm187, %v927, 0
    %v1112 = vsel %vm187, %v941, 0
    %1114 = vmatpush.xpose.msra.mxu0 0.0
    %1115 = vmatpush.xpose.msra.mxu0 0.0
    %1116 = vmatpush.xpose.msra.mxu0 0.0
    %1117 = vmatpush.xpose.msra.mxu0 0.0
    %1118 = vmatpush.xpose.msra.mxu0 0.0
    %1119 = vmatpush.xpose.msra.mxu0 0.0
    %1120 = vmatpush.xpose.msra.mxu0 0.0
    %1121 = vmatpush.xpose.msra.mxu0 0.0
    %1122 = vmatpush.xpose.msra.mxu0 0.0
    %1123 = vmatpush.xpose.msra.mxu0 0.0
    %1124 = vmatpush.xpose.msra.mxu0 0.0
    %1125 = vmatpush.xpose.msra.mxu0 0.0
    %1126 = vmatpush.xpose.msra.mxu0 0.0
    %1127 = vmatpush.xpose.msra.mxu0 0.0
    %1128 = vmatpush.xpose.msra.mxu0 0.0
    %1129 = vmatpush.xpose.msra.mxu0 %v1112
    %1130 = vmatmul.f32.gmra.mxu0 %v1110
    %v1131 = vpop.f32.mrf.mxu0
    %v1132 = vadd.f32 0.0, %v1131
    %1133 = vdwg.mxu0
    %v1134 = vsel %vm187, %v964, -inf
    %1135 = vmax.xlane.f32.xlu0 %v1134
    %v1136 = vpop.xlane.xlu0 %1135
    %v1137 = vsel %vm187, %v988, -inf
    %1138 = vmax.xlane.f32.xlu0 %v1137
    %v1139 = vpop.xlane.xlu0 %1138
    %v1140 = vsel %vm187, %v1012, -inf
    %1141 = vmax.xlane.f32.xlu0 %v1140
    %v1142 = vpop.xlane.xlu0 %1141
    %v1143 = vsel %vm187, %v1036, -inf
    %1144 = vmax.xlane.f32.xlu0 %v1143
    %v1145 = vpop.xlane.xlu0 %1144
    %v1146 = vsel %vm187, %v1060, -inf
    %1147 = vmax.xlane.f32.xlu0 %v1146
    %v1148 = vpop.xlane.xlu0 %1147
    %v1149 = vsel %vm187, %v1084, -inf
    %1150 = vmax.xlane.f32.xlu0 %v1149
    %v1151 = vpop.xlane.xlu0 %1150
    %v1152 = vsel %vm187, %v1108, -inf
    %1153 = vmax.xlane.f32.xlu0 %v1152
    %v1154 = vpop.xlane.xlu0 %1153
    %v1155 = vsel %vm187, %v1132, -inf
    %1156 = vmax.xlane.f32.xlu0 %v1155
    %v1157 = vpop.xlane.xlu0 %1156
    %v1158 = vsub.f32 %v964, %v1136
    %v1159 = vsub.f32 %v988, %v1139
    %v1160 = vsub.f32 %v1012, %v1142
    %v1161 = vsub.f32 %v1036, %v1145
    %v1162 = vsub.f32 %v1060, %v1148
    %v1163 = vsub.f32 %v1084, %v1151
    %v1164 = vsub.f32 %v1108, %v1154
    %v1165 = vsub.f32 %v1132, %v1157
    %v1166 = vmul.f32 %v1158, 1.442695
    %v1167 = vpow.pop %v1166
    %v1168 = vmul.f32 %v1159, 1.442695
    %v1169 = vpow.pop %v1168
    %v1170 = vmul.f32 %v1160, 1.442695
    %v1171 = vpow.pop %v1170
    %v1172 = vmul.f32 %v1161, 1.442695
    %v1173 = vpow.pop %v1172
    %v1174 = vmul.f32 %v1162, 1.442695
    %v1175 = vpow.pop %v1174
    %v1176 = vmul.f32 %v1163, 1.442695
    %v1177 = vpow.pop %v1176
    %v1178 = vmul.f32 %v1164, 1.442695
    %v1179 = vpow.pop %v1178
    %v1180 = vmul.f32 %v1165, 1.442695
    %v1181 = vpow.pop %v1180
    %v1182 = vsel %vm187, %v1167, 0.0
    %1183 = vadd.xlane.f32.xlu0 %v1182
    %v1184 = vpop.xlane.xlu0 %1183
    %v1185 = vsel %vm187, %v1169, 0.0
    %1186 = vadd.xlane.f32.xlu0 %v1185
    %v1187 = vpop.xlane.xlu0 %1186
    %v1188 = vsel %vm187, %v1171, 0.0
    %1189 = vadd.xlane.f32.xlu0 %v1188
    %v1190 = vpop.xlane.xlu0 %1189
    %v1191 = vsel %vm187, %v1173, 0.0
    %1192 = vadd.xlane.f32.xlu0 %v1191
    %v1193 = vpop.xlane.xlu0 %1192
    %v1194 = vsel %vm187, %v1175, 0.0
    %1195 = vadd.xlane.f32.xlu0 %v1194
    %v1196 = vpop.xlane.xlu0 %1195
    %v1197 = vsel %vm187, %v1177, 0.0
    %1198 = vadd.xlane.f32.xlu0 %v1197
    %v1199 = vpop.xlane.xlu0 %1198
    %v1200 = vsel %vm187, %v1179, 0.0
    %1201 = vadd.xlane.f32.xlu0 %v1200
    %v1202 = vpop.xlane.xlu0 %1201
    %v1203 = vsel %vm187, %v1181, 0.0
    %1204 = vadd.xlane.f32.xlu0 %v1203
    %v1205 = vpop.xlane.xlu0 %1204
    %v1206 = vrcp.pop %v1184
    %v1207 = vrcp.pop %v1187
    %v1208 = vrcp.pop %v1190
    %v1209 = vrcp.pop %v1193
    %v1210 = vrcp.pop %v1196
    %v1211 = vrcp.pop %v1199
    %v1212 = vrcp.pop %v1202
    %v1213 = vrcp.pop %v1205
    %v1214 = vmul.f32 %v1167, %v1206
    %v1215 = vmul.f32 %v1169, %v1207
    %v1216 = vmul.f32 %v1171, %v1208
    %v1217 = vmul.f32 %v1173, %v1209
    %v1218 = vmul.f32 %v1175, %v1210
    %v1219 = vmul.f32 %v1177, %v1211
    %v1220 = vmul.f32 %v1179, %v1212
    %v1221 = vmul.f32 %v1181, %v1213
    %1222 = vrot.lane.b32.xlu0 %v115, 96
    %v1223 = vpop.permute.xlu0 %1222
    %v1226 = vsel %vm187, %v1214, 0
    %1228 = vmatpush.msra.mxu0 0.0
    %1229 = vmatpush.msra.mxu0 0.0
    %1230 = vmatpush.msra.mxu0 0.0
    %1231 = vmatpush.msra.mxu0 0.0
    %1232 = vmatpush.msra.mxu0 0.0
    %1233 = vmatpush.msra.mxu0 0.0
    %1234 = vmatpush.msra.mxu0 0.0
    %1235 = vmatpush.msra.mxu0 0.0
    %1236 = vmatpush.msra.mxu0 0.0
    %1237 = vmatpush.msra.mxu0 0.0
    %1238 = vmatpush.msra.mxu0 0.0
    %1239 = vmatpush.msra.mxu0 0.0
    %1240 = vmatpush.msra.mxu0 0.0
    %1241 = vmatpush.msra.mxu0 0.0
    %1242 = vmatpush.msra.mxu0 0.0
    %1243 = vmatpush.msra.mxu0 %v1223
    %1244 = vmatmul.f32.gmra.mxu0 %v1226
    %v1245 = vpop.f32.mrf.mxu0
    %v1246 = vadd.f32 0.0, %v1245
    %1247 = vdwg.mxu0
    %1248 = vrot.lane.b32.xlu0 %v118, 96
    %v1249 = vpop.permute.xlu0 %1248
    %v1252 = vsel %vm187, %v1215, 0
    %1254 = vmatpush.msra.mxu0 0.0
    %1255 = vmatpush.msra.mxu0 0.0
    %1256 = vmatpush.msra.mxu0 0.0
    %1257 = vmatpush.msra.mxu0 0.0
    %1258 = vmatpush.msra.mxu0 0.0
    %1259 = vmatpush.msra.mxu0 0.0
    %1260 = vmatpush.msra.mxu0 0.0
    %1261 = vmatpush.msra.mxu0 0.0
    %1262 = vmatpush.msra.mxu0 0.0
    %1263 = vmatpush.msra.mxu0 0.0
    %1264 = vmatpush.msra.mxu0 0.0
    %1265 = vmatpush.msra.mxu0 0.0
    %1266 = vmatpush.msra.mxu0 0.0
    %1267 = vmatpush.msra.mxu0 0.0
    %1268 = vmatpush.msra.mxu0 0.0
    %1269 = vmatpush.msra.mxu0 %v1249
    %1270 = vmatmul.f32.gmra.mxu0 %v1252
    %v1271 = vpop.f32.mrf.mxu0
    %v1272 = vadd.f32 0.0, %v1271
    %1273 = vdwg.mxu0
    %1274 = vrot.lane.b32.xlu0 %v931, 96
    %v1275 = vpop.permute.xlu0 %1274
    %v1278 = vsel %vm187, %v1216, 0
    %1280 = vmatpush.msra.mxu0 0.0
    %1281 = vmatpush.msra.mxu0 0.0
    %1282 = vmatpush.msra.mxu0 0.0
    %1283 = vmatpush.msra.mxu0 0.0
    %1284 = vmatpush.msra.mxu0 0.0
    %1285 = vmatpush.msra.mxu0 0.0
    %1286 = vmatpush.msra.mxu0 0.0
    %1287 = vmatpush.msra.mxu0 0.0
    %1288 = vmatpush.msra.mxu0 0.0
    %1289 = vmatpush.msra.mxu0 0.0
    %1290 = vmatpush.msra.mxu0 0.0
    %1291 = vmatpush.msra.mxu0 0.0
    %1292 = vmatpush.msra.mxu0 0.0
    %1293 = vmatpush.msra.mxu0 0.0
    %1294 = vmatpush.msra.mxu0 0.0
    %1295 = vmatpush.msra.mxu0 %v1275
    %1296 = vmatmul.f32.gmra.mxu0 %v1278
    %v1297 = vpop.f32.mrf.mxu0
    %v1298 = vadd.f32 0.0, %v1297
    %1299 = vdwg.mxu0
    %1300 = vrot.lane.b32.xlu0 %v933, 96
    %v1301 = vpop.permute.xlu0 %1300
    %v1304 = vsel %vm187, %v1217, 0
    %1306 = vmatpush.msra.mxu0 0.0
    %1307 = vmatpush.msra.mxu0 0.0
    %1308 = vmatpush.msra.mxu0 0.0
    %1309 = vmatpush.msra.mxu0 0.0
    %1310 = vmatpush.msra.mxu0 0.0
    %1311 = vmatpush.msra.mxu0 0.0
    %1312 = vmatpush.msra.mxu0 0.0
    %1313 = vmatpush.msra.mxu0 0.0
    %1314 = vmatpush.msra.mxu0 0.0
    %1315 = vmatpush.msra.mxu0 0.0
    %1316 = vmatpush.msra.mxu0 0.0
    %1317 = vmatpush.msra.mxu0 0.0
    %1318 = vmatpush.msra.mxu0 0.0
    %1319 = vmatpush.msra.mxu0 0.0
    %1320 = vmatpush.msra.mxu0 0.0
    %1321 = vmatpush.msra.mxu0 %v1301
    %1322 = vmatmul.f32.gmra.mxu0 %v1304
    %v1323 = vpop.f32.mrf.mxu0
    %v1324 = vadd.f32 0.0, %v1323
    %1325 = vdwg.mxu0
    %1326 = vrot.lane.b32.xlu0 %v935, 96
    %v1327 = vpop.permute.xlu0 %1326
    %v1330 = vsel %vm187, %v1218, 0
    %1332 = vmatpush.msra.mxu0 0.0
    %1333 = vmatpush.msra.mxu0 0.0
    %1334 = vmatpush.msra.mxu0 0.0
    %1335 = vmatpush.msra.mxu0 0.0
    %1336 = vmatpush.msra.mxu0 0.0
    %1337 = vmatpush.msra.mxu0 0.0
    %1338 = vmatpush.msra.mxu0 0.0
    %1339 = vmatpush.msra.mxu0 0.0
    %1340 = vmatpush.msra.mxu0 0.0
    %1341 = vmatpush.msra.mxu0 0.0
    %1342 = vmatpush.msra.mxu0 0.0
    %1343 = vmatpush.msra.mxu0 0.0
    %1344 = vmatpush.msra.mxu0 0.0
    %1345 = vmatpush.msra.mxu0 0.0
    %1346 = vmatpush.msra.mxu0 0.0
    %1347 = vmatpush.msra.mxu0 %v1327
    %1348 = vmatmul.f32.gmra.mxu0 %v1330
    %v1349 = vpop.f32.mrf.mxu0
    %v1350 = vadd.f32 0.0, %v1349
    %1351 = vdwg.mxu0
    %1352 = vrot.lane.b32.xlu0 %v937, 96
    %v1353 = vpop.permute.xlu0 %1352
    %v1356 = vsel %vm187, %v1219, 0
    %1358 = vmatpush.msra.mxu0 0.0
    %1359 = vmatpush.msra.mxu0 0.0
    %1360 = vmatpush.msra.mxu0 0.0
    %1361 = vmatpush.msra.mxu0 0.0
    %1362 = vmatpush.msra.mxu0 0.0
    %1363 = vmatpush.msra.mxu0 0.0
    %1364 = vmatpush.msra.mxu0 0.0
    %1365 = vmatpush.msra.mxu0 0.0
    %1366 = vmatpush.msra.mxu0 0.0
    %1367 = vmatpush.msra.mxu0 0.0
    %1368 = vmatpush.msra.mxu0 0.0
    %1369 = vmatpush.msra.mxu0 0.0
    %1370 = vmatpush.msra.mxu0 0.0
    %1371 = vmatpush.msra.mxu0 0.0
    %1372 = vmatpush.msra.mxu0 0.0
    %1373 = vmatpush.msra.mxu0 %v1353
    %1374 = vmatmul.f32.gmra.mxu0 %v1356
    %v1375 = vpop.f32.mrf.mxu0
    %v1376 = vadd.f32 0.0, %v1375
    %1377 = vdwg.mxu0
    %1378 = vrot.lane.b32.xlu0 %v939, 96
    %v1379 = vpop.permute.xlu0 %1378
    %v1382 = vsel %vm187, %v1220, 0
    %1384 = vmatpush.msra.mxu0 0.0
    %1385 = vmatpush.msra.mxu0 0.0
    %1386 = vmatpush.msra.mxu0 0.0
    %1387 = vmatpush.msra.mxu0 0.0
    %1388 = vmatpush.msra.mxu0 0.0
    %1389 = vmatpush.msra.mxu0 0.0
    %1390 = vmatpush.msra.mxu0 0.0
    %1391 = vmatpush.msra.mxu0 0.0
    %1392 = vmatpush.msra.mxu0 0.0
    %1393 = vmatpush.msra.mxu0 0.0
    %1394 = vmatpush.msra.mxu0 0.0
    %1395 = vmatpush.msra.mxu0 0.0
    %1396 = vmatpush.msra.mxu0 0.0
    %1397 = vmatpush.msra.mxu0 0.0
    %1398 = vmatpush.msra.mxu0 0.0
    %1399 = vmatpush.msra.mxu0 %v1379
    %1400 = vmatmul.f32.gmra.mxu0 %v1382
    %v1401 = vpop.f32.mrf.mxu0
    %v1402 = vadd.f32 0.0, %v1401
    %1403 = vdwg.mxu0
    %1404 = vrot.lane.b32.xlu0 %v941, 96
    %v1405 = vpop.permute.xlu0 %1404
    %v1408 = vsel %vm187, %v1221, 0
    %1410 = vmatpush.msra.mxu0 0.0
    %1411 = vmatpush.msra.mxu0 0.0
    %1412 = vmatpush.msra.mxu0 0.0
    %1413 = vmatpush.msra.mxu0 0.0
    %1414 = vmatpush.msra.mxu0 0.0
    %1415 = vmatpush.msra.mxu0 0.0
    %1416 = vmatpush.msra.mxu0 0.0
    %1417 = vmatpush.msra.mxu0 0.0
    %1418 = vmatpush.msra.mxu0 0.0
    %1419 = vmatpush.msra.mxu0 0.0
    %1420 = vmatpush.msra.mxu0 0.0
    %1421 = vmatpush.msra.mxu0 0.0
    %1422 = vmatpush.msra.mxu0 0.0
    %1423 = vmatpush.msra.mxu0 0.0
    %1424 = vmatpush.msra.mxu0 0.0
    %1425 = vmatpush.msra.mxu0 %v1405
    %1426 = vmatmul.f32.gmra.mxu0 %v1408
    %v1427 = vpop.f32.mrf.mxu0
    %v1428 = vadd.f32 0.0, %v1427
    %1429 = vdwg.mxu0
    %v1431 = vsel %vm187, %v1298, 0
    %v1434 = vsel %vm187, %v1324, 0
    %1436 = vmatpush.msra.mxu0 0.0
    %1437 = vmatpush.msra.mxu0 0.0
    %1438 = vmatpush.msra.mxu0 0.0
    %1439 = vmatpush.msra.mxu0 0.0
    %1440 = vmatpush.msra.mxu0 0.0
    %1441 = vmatpush.msra.mxu0 0.0
    %1442 = vmatpush.msra.mxu0 0.0
    %1443 = vmatpush.msra.mxu0 0.0
    %1444 = vmatpush.msra.mxu0 0.0
    %1445 = vmatpush.msra.mxu0 0.0
    %1446 = vmatpush.msra.mxu0 0.0
    %1447 = vmatpush.msra.mxu0 0.0
    %1448 = vmatpush.msra.mxu0 0.0
    %1449 = vmatpush.msra.mxu0 0.0
    %1450 = vmatpush.msra.mxu0 0.0
    %1451 = vmatpush.msra.mxu0 %v910
    %1452 = vmatmul.f32.gmra.mxu0 %v1431
    %v1453 = vpop.f32.mrf.mxu0
    %v1454 = vadd.f32 0.0, %v1453
    %1455 = vmatmul.f32.gmra.mxu0 %v1434
    %v1456 = vpop.f32.mrf.mxu0
    %v1457 = vadd.f32 0.0, %v1456
    %1458 = vdwg.mxu0
    %v1460 = vsel %vm187, %v1246, 0
    %v1463 = vsel %vm187, %v1272, 0
    %1465 = vmatpush.msra.mxu0 0.0
    %1466 = vmatpush.msra.mxu0 0.0
    %1467 = vmatpush.msra.mxu0 0.0
    %1468 = vmatpush.msra.mxu0 0.0
    %1469 = vmatpush.msra.mxu0 0.0
    %1470 = vmatpush.msra.mxu0 0.0
    %1471 = vmatpush.msra.mxu0 0.0
    %1472 = vmatpush.msra.mxu0 0.0
    %1473 = vmatpush.msra.mxu0 0.0
    %1474 = vmatpush.msra.mxu0 0.0
    %1475 = vmatpush.msra.mxu0 0.0
    %1476 = vmatpush.msra.mxu0 0.0
    %1477 = vmatpush.msra.mxu0 0.0
    %1478 = vmatpush.msra.mxu0 0.0
    %1479 = vmatpush.msra.mxu0 0.0
    %1480 = vmatpush.msra.mxu0 %v909
    %1481 = vmatmul.f32.gmra.mxu0 %v1460
    %v1482 = vpop.f32.mrf.mxu0
    %v1483 = vadd.f32 %v1454, %v1482
    %1484 = vmatmul.f32.gmra.mxu0 %v1463
    %v1485 = vpop.f32.mrf.mxu0
    %v1486 = vadd.f32 %v1457, %v1485
    %1487 = vdwg.mxu0
    %v1489 = vsel %vm187, %v1350, 0
    %v1492 = vsel %vm187, %v1376, 0
    %1494 = vmatpush.msra.mxu0 0.0
    %1495 = vmatpush.msra.mxu0 0.0
    %1496 = vmatpush.msra.mxu0 0.0
    %1497 = vmatpush.msra.mxu0 0.0
    %1498 = vmatpush.msra.mxu0 0.0
    %1499 = vmatpush.msra.mxu0 0.0
    %1500 = vmatpush.msra.mxu0 0.0
    %1501 = vmatpush.msra.mxu0 0.0
    %1502 = vmatpush.msra.mxu0 0.0
    %1503 = vmatpush.msra.mxu0 0.0
    %1504 = vmatpush.msra.mxu0 0.0
    %1505 = vmatpush.msra.mxu0 0.0
    %1506 = vmatpush.msra.mxu0 0.0
    %1507 = vmatpush.msra.mxu0 0.0
    %1508 = vmatpush.msra.mxu0 0.0
    %1509 = vmatpush.msra.mxu0 %v911
    %1510 = vmatmul.f32.gmra.mxu0 %v1489
    %v1511 = vpop.f32.mrf.mxu0
    %v1512 = vadd.f32 0.0, %v1511
    %1513 = vmatmul.f32.gmra.mxu0 %v1492
    %v1514 = vpop.f32.mrf.mxu0
    %v1515 = vadd.f32 0.0, %v1514
    %1516 = vdwg.mxu0
    %v1517 = vadd.f32 %v1483, %v1512
    %v1518 = vadd.f32 %v1486, %v1515
    %v1520 = vsel %vm187, %v1402, 0
    %v1523 = vsel %vm187, %v1428, 0
    %1525 = vmatpush.msra.mxu0 0.0
    %1526 = vmatpush.msra.mxu0 0.0
    %1527 = vmatpush.msra.mxu0 0.0
    %1528 = vmatpush.msra.mxu0 0.0
    %1529 = vmatpush.msra.mxu0 0.0
    %1530 = vmatpush.msra.mxu0 0.0
    %1531 = vmatpush.msra.mxu0 0.0
    %1532 = vmatpush.msra.mxu0 0.0
    %1533 = vmatpush.msra.mxu0 0.0
    %1534 = vmatpush.msra.mxu0 0.0
    %1535 = vmatpush.msra.mxu0 0.0
    %1536 = vmatpush.msra.mxu0 0.0
    %1537 = vmatpush.msra.mxu0 0.0
    %1538 = vmatpush.msra.mxu0 0.0
    %1539 = vmatpush.msra.mxu0 0.0
    %1540 = vmatpush.msra.mxu0 %v912
    %1541 = vmatmul.f32.gmra.mxu0 %v1520
    %v1542 = vpop.f32.mrf.mxu0
    %v1543 = vadd.f32 0.0, %v1542
    %1544 = vmatmul.f32.gmra.mxu0 %v1523
    %v1545 = vpop.f32.mrf.mxu0
    %v1546 = vadd.f32 0.0, %v1545
    %1547 = vdwg.mxu0
    %v1548 = vadd.f32 %v1517, %v1543
    %v1549 = vadd.f32 %v1518, %v1546
    %v1550 = vperm.slane %v913, 0
    %v1551 = vadd.f32 %v1548, %v1550
    %v1552 = vadd.f32 %v1549, %v1550
    %v1553 = vadd.f32 %v870, %v1551
    %v1554 = vadd.f32 %v871, %v1552
    %v1555 = vsel %vm90, %v1553, 0.0
    %1556 = vadd.xlane.f32.xlu0 %v1555
    %v1557 = vpop.xlane.xlu0 %1556
    %v1558 = vsel %vm90, %v1554, 0.0
    %1559 = vadd.xlane.f32.xlu0 %v1558
    %v1560 = vpop.xlane.xlu0 %1559
    %v1561 = vmul.f32 %v1557, %v827
    %v1562 = vmul.f32 %v1560, %v827
    %v1563 = vsub.f32 %v1553, %v1561
    %v1564 = vsub.f32 %v1554, %v1562
    %v1565 = vmul.f32 %v1563, %v1563
    %v1566 = vmul.f32 %v1564, %v1564
    %v1567 = vsel %vm90, %v1565, 0.0
    %1568 = vadd.xlane.f32.xlu0 %v1567
    %v1569 = vpop.xlane.xlu0 %1568
    %v1570 = vsel %vm90, %v1566, 0.0
    %1571 = vadd.xlane.f32.xlu0 %v1570
    %v1572 = vpop.xlane.xlu0 %1571
    %v1573 = vmul.f32 %v1569, %v827
    %v1574 = vmul.f32 %v1572, %v827
    %v1575 = vadd.f32 %v1573, 1e-05
    %v1576 = vadd.f32 %v1574, 1e-05
    %v1577 = vrsqrt.pop %v1575
    %v1578 = vmul.f32 %v1577, %v1575
    %v1579 = vmul.f32 %v1578, %v1577
    %v1580 = vmul.f32 0.5, %v1579
    %v1581 = vsub.f32 1.5, %v1580
    %v1582 = vmul.f32 %v1577, %v1581
    %vm1583 = vweird.f32 %v1575
    %vm1584 = vweird.f32 %v1577
    %vm1585 = vmor %vm1583, %vm1584
    %v1586 = vsel %vm1585, %v1577, %v1582
    %v1587 = vrsqrt.pop %v1576
    %v1588 = vmul.f32 %v1587, %v1576
    %v1589 = vmul.f32 %v1588, %v1587
    %v1590 = vmul.f32 0.5, %v1589
    %v1591 = vsub.f32 1.5, %v1590
    %v1592 = vmul.f32 %v1587, %v1591
    %vm1593 = vweird.f32 %v1576
    %vm1594 = vweird.f32 %v1587
    %vm1595 = vmor %vm1593, %vm1594
    %v1596 = vsel %vm1595, %v1587, %v1592
    %v1597 = vmul.f32 %v1563, %v1586
    %v1598 = vmul.f32 %v1564, %v1596
    %v1599 = vperm.slane %v120, 2
    %v1600 = vmul.f32 %v1597, %v1599
    %v1601 = vmul.f32 %v1598, %v1599
    %v1602 = vperm.slane %v120, 3
    %v1603 = vadd.f32 %v1600, %v1602
    %v1604 = vadd.f32 %v1601, %v1602
    %v1605 = vld [vmem:[#allocation2 + $0x138] sm:$0xff]
    %v1606 = vld [vmem:[#allocation2 + $0x140] sm:$0xff]
    %v1607 = vld [vmem:[#allocation2 + $0x148] sm:$0xff]
    %v1608 = vld [vmem:[#allocation2 + $0x150] sm:$0xff]
    %v1609 = vld [vmem:[#allocation2 + $0x158] sm:$0x1]
    %v1610 = vperm.slane %v1609, 0
    %v1612 = vsel %vm90, %v1603, 0
    %v1615 = vsel %vm90, %v1604, 0
    %1617 = vmatpush.msra.mxu0 0.0
    %1618 = vmatpush.msra.mxu0 0.0
    %1619 = vmatpush.msra.mxu0 0.0
    %1620 = vmatpush.msra.mxu0 0.0
    %1621 = vmatpush.msra.mxu0 0.0
    %1622 = vmatpush.msra.mxu0 0.0
    %1623 = vmatpush.msra.mxu0 0.0
    %1624 = vmatpush.msra.mxu0 0.0
    %1625 = vmatpush.msra.mxu0 0.0
    %1626 = vmatpush.msra.mxu0 0.0
    %1627 = vmatpush.msra.mxu0 0.0
    %1628 = vmatpush.msra.mxu0 0.0
    %1629 = vmatpush.msra.mxu0 %v1608
    %1630 = vmatpush.msra.mxu0 %v1607
    %1631 = vmatpush.msra.mxu0 %v1606
    %1632 = vmatpush.msra.mxu0 %v1605
    %1633 = vmatmul.f32.gmra.mxu0 %v1612
    %v1634 = vpop.f32.mrf.mxu0
    %v1635 = vadd.f32 %v1610, %v1634
    %1636 = vmatmul.f32.gmra.mxu0 %v1615
    %v1637 = vpop.f32.mrf.mxu0
    %v1638 = vadd.f32 %v1610, %v1637
    %1639 = vdwg.mxu0
    %v1640 = vmax.f32 %v1635, 0.0
    %v1641 = vmax.f32 %v1638, 0.0
    %v1642 = vld [vmem:[#allocation2 + $0x160] sm:$0xff]
    %v1643 = vld [vmem:[#allocation2 + $0x168] sm:$0xff]
    %v1644 = vld [vmem:[#allocation2 + $0x170] sm:$0xff]
    %v1645 = vld [vmem:[#allocation2 + $0x178] sm:$0xff]
    %v1646 = vld [vmem:[#allocation2 + $0x180] sm:$0xff]
    %v1647 = vld [vmem:[#allocation2 + $0x188] sm:$0xff]
    %v1648 = vld [vmem:[#allocation2 + $0x190] sm:$0xff]
    %v1649 = vld [vmem:[#allocation2 + $0x198] sm:$0xff]
    %v1650 = vld [vmem:[#allocation2 + $0x1a0] sm:$0x1]
    %v1651 = vperm.slane %v1650, 0
    %vm1652 = vcmask 523264
    %v1654 = vsel %vm1652, %v1640, 0
    %v1657 = vsel %vm1652, %v1641, 0
    %1659 = vmatpush.msra.mxu0 0.0
    %1660 = vmatpush.msra.mxu0 0.0
    %1661 = vmatpush.msra.mxu0 0.0
    %1662 = vmatpush.msra.mxu0 0.0
    %1663 = vmatpush.msra.mxu0 0.0
    %1664 = vmatpush.msra.mxu0 0.0
    %1665 = vmatpush.msra.mxu0 0.0
    %1666 = vmatpush.msra.mxu0 0.0
    %1667 = vmatpush.msra.mxu0 %v1649
    %1668 = vmatpush.msra.mxu0 %v1648
    %1669 = vmatpush.msra.mxu0 %v1647
    %1670 = vmatpush.msra.mxu0 %v1646
    %1671 = vmatpush.msra.mxu0 %v1645
    %1672 = vmatpush.msra.mxu0 %v1644
    %1673 = vmatpush.msra.mxu0 %v1643
    %1674 = vmatpush.msra.mxu0 %v1642
    %1675 = vmatmul.f32.gmra.mxu0 %v1654
    %v1676 = vpop.f32.mrf.mxu0
    %v1677 = vadd.f32 %v1651, %v1676
    %1678 = vmatmul.f32.gmra.mxu0 %v1657
    %v1679 = vpop.f32.mrf.mxu0
    %v1680 = vadd.f32 %v1651, %v1679
    %1681 = vdwg.mxu0
    %v1682 = vadd.f32 %v1603, %v1677
    %v1683 = vadd.f32 %v1604, %v1680
    %v1684 = vsel %vm90, %v1682, 0.0
    %1685 = vadd.xlane.f32.xlu0 %v1684
    %v1686 = vpop.xlane.xlu0 %1685
    %v1687 = vsel %vm90, %v1683, 0.0
    %1688 = vadd.xlane.f32.xlu0 %v1687
    %v1689 = vpop.xlane.xlu0 %1688
    %v1690 = vmul.f32 %v1686, %v827
    %v1691 = vmul.f32 %v1689, %v827
    %v1692 = vsub.f32 %v1682, %v1690
    %v1693 = vsub.f32 %v1683, %v1691
    %v1694 = vmul.f32 %v1692, %v1692
    %v1695 = vmul.f32 %v1693, %v1693
    %v1696 = vsel %vm90, %v1694, 0.0
    %1697 = vadd.xlane.f32.xlu0 %v1696
    %v1698 = vpop.xlane.xlu0 %1697
    %v1699 = vsel %vm90, %v1695, 0.0
    %1700 = vadd.xlane.f32.xlu0 %v1699
    %v1701 = vpop.xlane.xlu0 %1700
    %v1702 = vmul.f32 %v1698, %v827
    %v1703 = vmul.f32 %v1701, %v827
    %v1704 = vadd.f32 %v1702, 1e-05
    %v1705 = vadd.f32 %v1703, 1e-05
    %v1706 = vrsqrt.pop %v1704
    %v1707 = vmul.f32 %v1706, %v1704
    %v1708 = vmul.f32 %v1707, %v1706
    %v1709 = vmul.f32 0.5, %v1708
    %v1710 = vsub.f32 1.5, %v1709
    %v1711 = vmul.f32 %v1706, %v1710
    %vm1712 = vweird.f32 %v1704
    %vm1713 = vweird.f32 %v1706
    %vm1714 = vmor %vm1712, %vm1713
    %v1715 = vsel %vm1714, %v1706, %v1711
    %v1716 = vrsqrt.pop %v1705
    %v1717 = vmul.f32 %v1716, %v1705
    %v1718 = vmul.f32 %v1717, %v1716
    %v1719 = vmul.f32 0.5, %v1718
    %v1720 = vsub.f32 1.5, %v1719
    %v1721 = vmul.f32 %v1716, %v1720
    %vm1722 = vweird.f32 %v1705
    %vm1723 = vweird.f32 %v1716
    %vm1724 = vmor %vm1722, %vm1723
    %v1725 = vsel %vm1724, %v1716, %v1721
    %v1726 = vmul.f32 %v1692, %v1715
    %v1727 = vmul.f32 %v1693, %v1725
    %v1728 = vperm.slane %v120, 4
    %v1729 = vmul.f32 %v1726, %v1728
    %v1730 = vmul.f32 %v1727, %v1728
    %v1731 = vperm.slane %v120, 5
    %v1732 = vadd.f32 %v1729, %v1731
    %v1733 = vadd.f32 %v1730, %v1731
    %v1734 = vld [vmem:[#allocation2 + $0x248] sm:$0x3f]
    %v1735 = vld [vmem:[#allocation2 + $0x1a8] sm:$0xff]
    %v1736 = vld [vmem:[#allocation2 + $0x1b0] sm:$0xff]
    %v1737 = vld [vmem:[#allocation2 + $0x1b8] sm:$0xff]
    %v1738 = vld [vmem:[#allocation2 + $0x1c0] sm:$0xff]
    %v1739 = vld [vmem:[#allocation2 + $0x1c8] sm:$0x1]
    %v1740 = vperm.slane %v1739, 0
    %v1742 = vsel %vm90, %v1732, 0
    %v1745 = vsel %vm90, %v1733, 0
    %1747 = vmatpush.msra.mxu0 0.0
    %1748 = vmatpush.msra.mxu0 0.0
    %1749 = vmatpush.msra.mxu0 0.0
    %1750 = vmatpush.msra.mxu0 0.0
    %1751 = vmatpush.msra.mxu0 0.0
    %1752 = vmatpush.msra.mxu0 0.0
    %1753 = vmatpush.msra.mxu0 0.0
    %1754 = vmatpush.msra.mxu0 0.0
    %1755 = vmatpush.msra.mxu0 0.0
    %1756 = vmatpush.msra.mxu0 0.0
    %1757 = vmatpush.msra.mxu0 0.0
    %1758 = vmatpush.msra.mxu0 0.0
    %1759 = vmatpush.msra.mxu0 %v1738
    %1760 = vmatpush.msra.mxu0 %v1737
    %1761 = vmatpush.msra.mxu0 %v1736
    %1762 = vmatpush.msra.mxu0 %v1735
    %1763 = vmatmul.f32.gmra.mxu0 %v1742
    %v1764 = vpop.f32.mrf.mxu0
    %v1765 = vadd.f32 %v1740, %v1764
    %1766 = vmatmul.f32.gmra.mxu0 %v1745
    %v1767 = vpop.f32.mrf.mxu0
    %v1768 = vadd.f32 %v1740, %v1767
    %1769 = vdwg.mxu0
    %v1770 = vmul.f32 %v1765, 0.35355338
    %v1771 = vmul.f32 %v1768, 0.35355338
    %v1772 = vld [vmem:[#allocation2 + $0x1d0] sm:$0xff]
    %v1773 = vld [vmem:[#allocation2 + $0x1d8] sm:$0xff]
    %v1774 = vld [vmem:[#allocation2 + $0x1e0] sm:$0xff]
    %v1775 = vld [vmem:[#allocation2 + $0x1e8] sm:$0xff]
    %v1776 = vld [vmem:[#allocation2 + $0x1f0] sm:$0x1]
    %1779 = vrot.lane.b32.xlu0 %v1770, 120
    %v1780 = vpop.permute.xlu0 %1779
    %1781 = vrot.lane.b32.xlu0 %v1771, 120
    %v1782 = vpop.permute.xlu0 %1781
    %1783 = vrot.lane.b32.xlu0 %v1770, 112
    %v1784 = vpop.permute.xlu0 %1783
    %1785 = vrot.lane.b32.xlu0 %v1771, 112
    %v1786 = vpop.permute.xlu0 %1785
    %1787 = vrot.lane.b32.xlu0 %v1770, 104
    %v1788 = vpop.permute.xlu0 %1787
    %1789 = vrot.lane.b32.xlu0 %v1771, 104
    %v1790 = vpop.permute.xlu0 %1789
    %1793 = vrot.lane.b32.xlu0 %v1765, 120
    %v1794 = vpop.permute.xlu0 %1793
    %1795 = vrot.lane.b32.xlu0 %v1768, 120
    %v1796 = vpop.permute.xlu0 %1795
    %1797 = vrot.lane.b32.xlu0 %v1765, 112
    %v1798 = vpop.permute.xlu0 %1797
    %1799 = vrot.lane.b32.xlu0 %v1768, 112
    %v1800 = vpop.permute.xlu0 %1799
    %1801 = vrot.lane.b32.xlu0 %v1765, 104
    %v1802 = vpop.permute.xlu0 %1801
    %1803 = vrot.lane.b32.xlu0 %v1768, 104
    %v1804 = vpop.permute.xlu0 %1803
    %1805 = vrot.lane.b32.xlu0 %v1765, 96
    %v1806 = vpop.permute.xlu0 %1805
    %v1807 = vsel %vm187, %v1770, 0
    %v1809 = vsel %vm187, %v1806, 0
    %1811 = vmatpush.xpose.msra.mxu0 0.0
    %1812 = vmatpush.xpose.msra.mxu0 0.0
    %1813 = vmatpush.xpose.msra.mxu0 0.0
    %1814 = vmatpush.xpose.msra.mxu0 0.0
    %1815 = vmatpush.xpose.msra.mxu0 0.0
    %1816 = vmatpush.xpose.msra.mxu0 0.0
    %1817 = vmatpush.xpose.msra.mxu0 0.0
    %1818 = vmatpush.xpose.msra.mxu0 0.0
    %1819 = vmatpush.xpose.msra.mxu0 0.0
    %1820 = vmatpush.xpose.msra.mxu0 0.0
    %1821 = vmatpush.xpose.msra.mxu0 0.0
    %1822 = vmatpush.xpose.msra.mxu0 0.0
    %1823 = vmatpush.xpose.msra.mxu0 0.0
    %1824 = vmatpush.xpose.msra.mxu0 0.0
    %1825 = vmatpush.xpose.msra.mxu0 0.0
    %1826 = vmatpush.xpose.msra.mxu0 %v1809
    %1827 = vmatmul.f32.gmra.mxu0 %v1807
    %v1828 = vpop.f32.mrf.mxu0
    %v1829 = vadd.f32 0.0, %v1828
    %1830 = vdwg.mxu0
    %1831 = vrot.lane.b32.xlu0 %v1768, 96
    %v1832 = vpop.permute.xlu0 %1831
    %v1833 = vsel %vm187, %v1771, 0
    %v1835 = vsel %vm187, %v1832, 0
    %1837 = vmatpush.xpose.msra.mxu0 0.0
    %1838 = vmatpush.xpose.msra.mxu0 0.0
    %1839 = vmatpush.xpose.msra.mxu0 0.0
    %1840 = vmatpush.xpose.msra.mxu0 0.0
    %1841 = vmatpush.xpose.msra.mxu0 0.0
    %1842 = vmatpush.xpose.msra.mxu0 0.0
    %1843 = vmatpush.xpose.msra.mxu0 0.0
    %1844 = vmatpush.xpose.msra.mxu0 0.0
    %1845 = vmatpush.xpose.msra.mxu0 0.0
    %1846 = vmatpush.xpose.msra.mxu0 0.0
    %1847 = vmatpush.xpose.msra.mxu0 0.0
    %1848 = vmatpush.xpose.msra.mxu0 0.0
    %1849 = vmatpush.xpose.msra.mxu0 0.0
    %1850 = vmatpush.xpose.msra.mxu0 0.0
    %1851 = vmatpush.xpose.msra.mxu0 0.0
    %1852 = vmatpush.xpose.msra.mxu0 %v1835
    %1853 = vmatmul.f32.gmra.mxu0 %v1833
    %v1854 = vpop.f32.mrf.mxu0
    %v1855 = vadd.f32 0.0, %v1854
    %1856 = vdwg.mxu0
    %1857 = vrot.lane.b32.xlu0 %v1794, 96
    %v1858 = vpop.permute.xlu0 %1857
    %v1859 = vsel %vm187, %v1780, 0
    %v1861 = vsel %vm187, %v1858, 0
    %1863 = vmatpush.xpose.msra.mxu0 0.0
    %1864 = vmatpush.xpose.msra.mxu0 0.0
    %1865 = vmatpush.xpose.msra.mxu0 0.0
    %1866 = vmatpush.xpose.msra.mxu0 0.0
    %1867 = vmatpush.xpose.msra.mxu0 0.0
    %1868 = vmatpush.xpose.msra.mxu0 0.0
    %1869 = vmatpush.xpose.msra.mxu0 0.0
    %1870 = vmatpush.xpose.msra.mxu0 0.0
    %1871 = vmatpush.xpose.msra.mxu0 0.0
    %1872 = vmatpush.xpose.msra.mxu0 0.0
    %1873 = vmatpush.xpose.msra.mxu0 0.0
    %1874 = vmatpush.xpose.msra.mxu0 0.0
    %1875 = vmatpush.xpose.msra.mxu0 0.0
    %1876 = vmatpush.xpose.msra.mxu0 0.0
    %1877 = vmatpush.xpose.msra.mxu0 0.0
    %1878 = vmatpush.xpose.msra.mxu0 %v1861
    %1879 = vmatmul.f32.gmra.mxu0 %v1859
    %v1880 = vpop.f32.mrf.mxu0
    %v1881 = vadd.f32 0.0, %v1880
    %1882 = vdwg.mxu0
    %1883 = vrot.lane.b32.xlu0 %v1796, 96
    %v1884 = vpop.permute.xlu0 %1883
    %v1885 = vsel %vm187, %v1782, 0
    %v1887 = vsel %vm187, %v1884, 0
    %1889 = vmatpush.xpose.msra.mxu0 0.0
    %1890 = vmatpush.xpose.msra.mxu0 0.0
    %1891 = vmatpush.xpose.msra.mxu0 0.0
    %1892 = vmatpush.xpose.msra.mxu0 0.0
    %1893 = vmatpush.xpose.msra.mxu0 0.0
    %1894 = vmatpush.xpose.msra.mxu0 0.0
    %1895 = vmatpush.xpose.msra.mxu0 0.0
    %1896 = vmatpush.xpose.msra.mxu0 0.0
    %1897 = vmatpush.xpose.msra.mxu0 0.0
    %1898 = vmatpush.xpose.msra.mxu0 0.0
    %1899 = vmatpush.xpose.msra.mxu0 0.0
    %1900 = vmatpush.xpose.msra.mxu0 0.0
    %1901 = vmatpush.xpose.msra.mxu0 0.0
    %1902 = vmatpush.xpose.msra.mxu0 0.0
    %1903 = vmatpush.xpose.msra.mxu0 0.0
    %1904 = vmatpush.xpose.msra.mxu0 %v1887
    %1905 = vmatmul.f32.gmra.mxu0 %v1885
    %v1906 = vpop.f32.mrf.mxu0
    %v1907 = vadd.f32 0.0, %v1906
    %1908 = vdwg.mxu0
    %1909 = vrot.lane.b32.xlu0 %v1798, 96
    %v1910 = vpop.permute.xlu0 %1909
    %v1911 = vsel %vm187, %v1784, 0
    %v1913 = vsel %vm187, %v1910, 0
    %1915 = vmatpush.xpose.msra.mxu0 0.0
    %1916 = vmatpush.xpose.msra.mxu0 0.0
    %1917 = vmatpush.xpose.msra.mxu0 0.0
    %1918 = vmatpush.xpose.msra.mxu0 0.0
    %1919 = vmatpush.xpose.msra.mxu0 0.0
    %1920 = vmatpush.xpose.msra.mxu0 0.0
    %1921 = vmatpush.xpose.msra.mxu0 0.0
    %1922 = vmatpush.xpose.msra.mxu0 0.0
    %1923 = vmatpush.xpose.msra.mxu0 0.0
    %1924 = vmatpush.xpose.msra.mxu0 0.0
    %1925 = vmatpush.xpose.msra.mxu0 0.0
    %1926 = vmatpush.xpose.msra.mxu0 0.0
    %1927 = vmatpush.xpose.msra.mxu0 0.0
    %1928 = vmatpush.xpose.msra.mxu0 0.0
    %1929 = vmatpush.xpose.msra.mxu0 0.0
    %1930 = vmatpush.xpose.msra.mxu0 %v1913
    %1931 = vmatmul.f32.gmra.mxu0 %v1911
    %v1932 = vpop.f32.mrf.mxu0
    %v1933 = vadd.f32 0.0, %v1932
    %1934 = vdwg.mxu0
    %1935 = vrot.lane.b32.xlu0 %v1800, 96
    %v1936 = vpop.permute.xlu0 %1935
    %v1937 = vsel %vm187, %v1786, 0
    %v1939 = vsel %vm187, %v1936, 0
    %1941 = vmatpush.xpose.msra.mxu0 0.0
    %1942 = vmatpush.xpose.msra.mxu0 0.0
    %1943 = vmatpush.xpose.msra.mxu0 0.0
    %1944 = vmatpush.xpose.msra.mxu0 0.0
    %1945 = vmatpush.xpose.msra.mxu0 0.0
    %1946 = vmatpush.xpose.msra.mxu0 0.0
    %1947 = vmatpush.xpose.msra.mxu0 0.0
    %1948 = vmatpush.xpose.msra.mxu0 0.0
    %1949 = vmatpush.xpose.msra.mxu0 0.0
    %1950 = vmatpush.xpose.msra.mxu0 0.0
    %1951 = vmatpush.xpose.msra.mxu0 0.0
    %1952 = vmatpush.xpose.msra.mxu0 0.0
    %1953 = vmatpush.xpose.msra.mxu0 0.0
    %1954 = vmatpush.xpose.msra.mxu0 0.0
    %1955 = vmatpush.xpose.msra.mxu0 0.0
    %1956 = vmatpush.xpose.msra.mxu0 %v1939
    %1957 = vmatmul.f32.gmra.mxu0 %v1937
    %v1958 = vpop.f32.mrf.mxu0
    %v1959 = vadd.f32 0.0, %v1958
    %1960 = vdwg.mxu0
    %1961 = vrot.lane.b32.xlu0 %v1802, 96
    %v1962 = vpop.permute.xlu0 %1961
    %v1963 = vsel %vm187, %v1788, 0
    %v1965 = vsel %vm187, %v1962, 0
    %1967 = vmatpush.xpose.msra.mxu0 0.0
    %1968 = vmatpush.xpose.msra.mxu0 0.0
    %1969 = vmatpush.xpose.msra.mxu0 0.0
    %1970 = vmatpush.xpose.msra.mxu0 0.0
    %1971 = vmatpush.xpose.msra.mxu0 0.0
    %1972 = vmatpush.xpose.msra.mxu0 0.0
    %1973 = vmatpush.xpose.msra.mxu0 0.0
    %1974 = vmatpush.xpose.msra.mxu0 0.0
    %1975 = vmatpush.xpose.msra.mxu0 0.0
    %1976 = vmatpush.xpose.msra.mxu0 0.0
    %1977 = vmatpush.xpose.msra.mxu0 0.0
    %1978 = vmatpush.xpose.msra.mxu0 0.0
    %1979 = vmatpush.xpose.msra.mxu0 0.0
    %1980 = vmatpush.xpose.msra.mxu0 0.0
    %1981 = vmatpush.xpose.msra.mxu0 0.0
    %1982 = vmatpush.xpose.msra.mxu0 %v1965
    %1983 = vmatmul.f32.gmra.mxu0 %v1963
    %v1984 = vpop.f32.mrf.mxu0
    %v1985 = vadd.f32 0.0, %v1984
    %1986 = vdwg.mxu0
    %1987 = vrot.lane.b32.xlu0 %v1804, 96
    %v1988 = vpop.permute.xlu0 %1987
    %v1989 = vsel %vm187, %v1790, 0
    %v1991 = vsel %vm187, %v1988, 0
    %1993 = vmatpush.xpose.msra.mxu0 0.0
    %1994 = vmatpush.xpose.msra.mxu0 0.0
    %1995 = vmatpush.xpose.msra.mxu0 0.0
    %1996 = vmatpush.xpose.msra.mxu0 0.0
    %1997 = vmatpush.xpose.msra.mxu0 0.0
    %1998 = vmatpush.xpose.msra.mxu0 0.0
    %1999 = vmatpush.xpose.msra.mxu0 0.0
    %2000 = vmatpush.xpose.msra.mxu0 0.0
    %2001 = vmatpush.xpose.msra.mxu0 0.0
    %2002 = vmatpush.xpose.msra.mxu0 0.0
    %2003 = vmatpush.xpose.msra.mxu0 0.0
    %2004 = vmatpush.xpose.msra.mxu0 0.0
    %2005 = vmatpush.xpose.msra.mxu0 0.0
    %2006 = vmatpush.xpose.msra.mxu0 0.0
    %2007 = vmatpush.xpose.msra.mxu0 0.0
    %2008 = vmatpush.xpose.msra.mxu0 %v1991
    %2009 = vmatmul.f32.gmra.mxu0 %v1989
    %v2010 = vpop.f32.mrf.mxu0
    %v2011 = vadd.f32 0.0, %v2010
    %2012 = vdwg.mxu0
    %v2013 = vsel %vm187, %v1829, -inf
    %2014 = vmax.xlane.f32.xlu0 %v2013
    %v2015 = vpop.xlane.xlu0 %2014
    %v2016 = vsel %vm187, %v1855, -inf
    %2017 = vmax.xlane.f32.xlu0 %v2016
    %v2018 = vpop.xlane.xlu0 %2017
    %v2019 = vsel %vm187, %v1881, -inf
    %2020 = vmax.xlane.f32.xlu0 %v2019
    %v2021 = vpop.xlane.xlu0 %2020
    %v2022 = vsel %vm187, %v1907, -inf
    %2023 = vmax.xlane.f32.xlu0 %v2022
    %v2024 = vpop.xlane.xlu0 %2023
    %v2025 = vsel %vm187, %v1933, -inf
    %2026 = vmax.xlane.f32.xlu0 %v2025
    %v2027 = vpop.xlane.xlu0 %2026
    %v2028 = vsel %vm187, %v1959, -inf
    %2029 = vmax.xlane.f32.xlu0 %v2028
    %v2030 = vpop.xlane.xlu0 %2029
    %v2031 = vsel %vm187, %v1985, -inf
    %2032 = vmax.xlane.f32.xlu0 %v2031
    %v2033 = vpop.xlane.xlu0 %2032
    %v2034 = vsel %vm187, %v2011, -inf
    %2035 = vmax.xlane.f32.xlu0 %v2034
    %v2036 = vpop.xlane.xlu0 %2035
    %v2037 = vsub.f32 %v1829, %v2015
    %v2038 = vsub.f32 %v1855, %v2018
    %v2039 = vsub.f32 %v1881, %v2021
    %v2040 = vsub.f32 %v1907, %v2024
    %v2041 = vsub.f32 %v1933, %v2027
    %v2042 = vsub.f32 %v1959, %v2030
    %v2043 = vsub.f32 %v1985, %v2033
    %v2044 = vsub.f32 %v2011, %v2036
    %v2045 = vmul.f32 %v2037, 1.442695
    %v2046 = vpow.pop %v2045
    %v2047 = vmul.f32 %v2038, 1.442695
    %v2048 = vpow.pop %v2047
    %v2049 = vmul.f32 %v2039, 1.442695
    %v2050 = vpow.pop %v2049
    %v2051 = vmul.f32 %v2040, 1.442695
    %v2052 = vpow.pop %v2051
    %v2053 = vmul.f32 %v2041, 1.442695
    %v2054 = vpow.pop %v2053
    %v2055 = vmul.f32 %v2042, 1.442695
    %v2056 = vpow.pop %v2055
    %v2057 = vmul.f32 %v2043, 1.442695
    %v2058 = vpow.pop %v2057
    %v2059 = vmul.f32 %v2044, 1.442695
    %v2060 = vpow.pop %v2059
    %v2061 = vsel %vm187, %v2046, 0.0
    %2062 = vadd.xlane.f32.xlu0 %v2061
    %v2063 = vpop.xlane.xlu0 %2062
    %v2064 = vsel %vm187, %v2048, 0.0
    %2065 = vadd.xlane.f32.xlu0 %v2064
    %v2066 = vpop.xlane.xlu0 %2065
    %v2067 = vsel %vm187, %v2050, 0.0
    %2068 = vadd.xlane.f32.xlu0 %v2067
    %v2069 = vpop.xlane.xlu0 %2068
    %v2070 = vsel %vm187, %v2052, 0.0
    %2071 = vadd.xlane.f32.xlu0 %v2070
    %v2072 = vpop.xlane.xlu0 %2071
    %v2073 = vsel %vm187, %v2054, 0.0
    %2074 = vadd.xlane.f32.xlu0 %v2073
    %v2075 = vpop.xlane.xlu0 %2074
    %v2076 = vsel %vm187, %v2056, 0.0
    %2077 = vadd.xlane.f32.xlu0 %v2076
    %v2078 = vpop.xlane.xlu0 %2077
    %v2079 = vsel %vm187, %v2058, 0.0
    %2080 = vadd.xlane.f32.xlu0 %v2079
    %v2081 = vpop.xlane.xlu0 %2080
    %v2082 = vsel %vm187, %v2060, 0.0
    %2083 = vadd.xlane.f32.xlu0 %v2082
    %v2084 = vpop.xlane.xlu0 %2083
    %v2085 = vrcp.pop %v2063
    %v2086 = vrcp.pop %v2066
    %v2087 = vrcp.pop %v2069
    %v2088 = vrcp.pop %v2072
    %v2089 = vrcp.pop %v2075
    %v2090 = vrcp.pop %v2078
    %v2091 = vrcp.pop %v2081
    %v2092 = vrcp.pop %v2084
    %v2093 = vmul.f32 %v2046, %v2085
    %v2094 = vmul.f32 %v2048, %v2086
    %v2095 = vmul.f32 %v2050, %v2087
    %v2096 = vmul.f32 %v2052, %v2088
    %v2097 = vmul.f32 %v2054, %v2089
    %v2098 = vmul.f32 %v2056, %v2090
    %v2099 = vmul.f32 %v2058, %v2091
    %v2100 = vmul.f32 %v2060, %v2092
    %2101 = vrot.lane.b32.xlu0 %v1765, 64
    %v2102 = vpop.permute.xlu0 %2101
    %v2105 = vsel %vm187, %v2093, 0
    %2107 = vmatpush.msra.mxu0 0.0
    %2108 = vmatpush.msra.mxu0 0.0
    %2109 = vmatpush.msra.mxu0 0.0
    %2110 = vmatpush.msra.mxu0 0.0
    %2111 = vmatpush.msra.mxu0 0.0
    %2112 = vmatpush.msra.mxu0 0.0
    %2113 = vmatpush.msra.mxu0 0.0
    %2114 = vmatpush.msra.mxu0 0.0
    %2115 = vmatpush.msra.mxu0 0.0
    %2116 = vmatpush.msra.mxu0 0.0
    %2117 = vmatpush.msra.mxu0 0.0
    %2118 = vmatpush.msra.mxu0 0.0
    %2119 = vmatpush.msra.mxu0 0.0
    %2120 = vmatpush.msra.mxu0 0.0
    %2121 = vmatpush.msra.mxu0 0.0
    %2122 = vmatpush.msra.mxu0 %v2102
    %2123 = vmatmul.f32.gmra.mxu0 %v2105
    %v2124 = vpop.f32.mrf.mxu0
    %v2125 = vadd.f32 0.0, %v2124
    %2126 = vdwg.mxu0
    %2127 = vrot.lane.b32.xlu0 %v1768, 64
    %v2128 = vpop.permute.xlu0 %2127
    %v2131 = vsel %vm187, %v2094, 0
    %2133 = vmatpush.msra.mxu0 0.0
    %2134 = vmatpush.msra.mxu0 0.0
    %2135 = vmatpush.msra.mxu0 0.0
    %2136 = vmatpush.msra.mxu0 0.0
    %2137 = vmatpush.msra.mxu0 0.0
    %2138 = vmatpush.msra.mxu0 0.0
    %2139 = vmatpush.msra.mxu0 0.0
    %2140 = vmatpush.msra.mxu0 0.0
    %2141 = vmatpush.msra.mxu0 0.0
    %2142 = vmatpush.msra.mxu0 0.0
    %2143 = vmatpush.msra.mxu0 0.0
    %2144 = vmatpush.msra.mxu0 0.0
    %2145 = vmatpush.msra.mxu0 0.0
    %2146 = vmatpush.msra.mxu0 0.0
    %2147 = vmatpush.msra.mxu0 0.0
    %2148 = vmatpush.msra.mxu0 %v2128
    %2149 = vmatmul.f32.gmra.mxu0 %v2131
    %v2150 = vpop.f32.mrf.mxu0
    %v2151 = vadd.f32 0.0, %v2150
    %2152 = vdwg.mxu0
    %2153 = vrot.lane.b32.xlu0 %v1794, 64
    %v2154 = vpop.permute.xlu0 %2153
    %v2157 = vsel %vm187, %v2095, 0
    %2159 = vmatpush.msra.mxu0 0.0
    %2160 = vmatpush.msra.mxu0 0.0
    %2161 = vmatpush.msra.mxu0 0.0
    %2162 = vmatpush.msra.mxu0 0.0
    %2163 = vmatpush.msra.mxu0 0.0
    %2164 = vmatpush.msra.mxu0 0.0
    %2165 = vmatpush.msra.mxu0 0.0
    %2166 = vmatpush.msra.mxu0 0.0
    %2167 = vmatpush.msra.mxu0 0.0
    %2168 = vmatpush.msra.mxu0 0.0
    %2169 = vmatpush.msra.mxu0 0.0
    %2170 = vmatpush.msra.mxu0 0.0
    %2171 = vmatpush.msra.mxu0 0.0
    %2172 = vmatpush.msra.mxu0 0.0
    %2173 = vmatpush.msra.mxu0 0.0
    %2174 = vmatpush.msra.mxu0 %v2154
    %2175 = vmatmul.f32.gmra.mxu0 %v2157
    %v2176 = vpop.f32.mrf.mxu0
    %v2177 = vadd.f32 0.0, %v2176
    %2178 = vdwg.mxu0
    %2179 = vrot.lane.b32.xlu0 %v1796, 64
    %v2180 = vpop.permute.xlu0 %2179
    %v2183 = vsel %vm187, %v2096, 0
    %2185 = vmatpush.msra.mxu0 0.0
    %2186 = vmatpush.msra.mxu0 0.0
    %2187 = vmatpush.msra.mxu0 0.0
    %2188 = vmatpush.msra.mxu0 0.0
    %2189 = vmatpush.msra.mxu0 0.0
    %2190 = vmatpush.msra.mxu0 0.0
    %2191 = vmatpush.msra.mxu0 0.0
    %2192 = vmatpush.msra.mxu0 0.0
    %2193 = vmatpush.msra.mxu0 0.0
    %2194 = vmatpush.msra.mxu0 0.0
    %2195 = vmatpush.msra.mxu0 0.0
    %2196 = vmatpush.msra.mxu0 0.0
    %2197 = vmatpush.msra.mxu0 0.0
    %2198 = vmatpush.msra.mxu0 0.0
    %2199 = vmatpush.msra.mxu0 0.0
    %2200 = vmatpush.msra.mxu0 %v2180
    %2201 = vmatmul.f32.gmra.mxu0 %v2183
    %v2202 = vpop.f32.mrf.mxu0
    %v2203 = vadd.f32 0.0, %v2202
    %2204 = vdwg.mxu0
    %2205 = vrot.lane.b32.xlu0 %v1798, 64
    %v2206 = vpop.permute.xlu0 %2205
    %v2209 = vsel %vm187, %v2097, 0
    %2211 = vmatpush.msra.mxu0 0.0
    %2212 = vmatpush.msra.mxu0 0.0
    %2213 = vmatpush.msra.mxu0 0.0
    %2214 = vmatpush.msra.mxu0 0.0
    %2215 = vmatpush.msra.mxu0 0.0
    %2216 = vmatpush.msra.mxu0 0.0
    %2217 = vmatpush.msra.mxu0 0.0
    %2218 = vmatpush.msra.mxu0 0.0
    %2219 = vmatpush.msra.mxu0 0.0
    %2220 = vmatpush.msra.mxu0 0.0
    %2221 = vmatpush.msra.mxu0 0.0
    %2222 = vmatpush.msra.mxu0 0.0
    %2223 = vmatpush.msra.mxu0 0.0
    %2224 = vmatpush.msra.mxu0 0.0
    %2225 = vmatpush.msra.mxu0 0.0
    %2226 = vmatpush.msra.mxu0 %v2206
    %2227 = vmatmul.f32.gmra.mxu0 %v2209
    %v2228 = vpop.f32.mrf.mxu0
    %v2229 = vadd.f32 0.0, %v2228
    %2230 = vdwg.mxu0
    %2231 = vrot.lane.b32.xlu0 %v1800, 64
    %v2232 = vpop.permute.xlu0 %2231
    %v2235 = vsel %vm187, %v2098, 0
    %2237 = vmatpush.msra.mxu0 0.0
    %2238 = vmatpush.msra.mxu0 0.0
    %2239 = vmatpush.msra.mxu0 0.0
    %2240 = vmatpush.msra.mxu0 0.0
    %2241 = vmatpush.msra.mxu0 0.0
    %2242 = vmatpush.msra.mxu0 0.0
    %2243 = vmatpush.msra.mxu0 0.0
    %2244 = vmatpush.msra.mxu0 0.0
    %2245 = vmatpush.msra.mxu0 0.0
    %2246 = vmatpush.msra.mxu0 0.0
    %2247 = vmatpush.msra.mxu0 0.0
    %2248 = vmatpush.msra.mxu0 0.0
    %2249 = vmatpush.msra.mxu0 0.0
    %2250 = vmatpush.msra.mxu0 0.0
    %2251 = vmatpush.msra.mxu0 0.0
    %2252 = vmatpush.msra.mxu0 %v2232
    %2253 = vmatmul.f32.gmra.mxu0 %v2235
    %v2254 = vpop.f32.mrf.mxu0
    %v2255 = vadd.f32 0.0, %v2254
    %2256 = vdwg.mxu0
    %2257 = vrot.lane.b32.xlu0 %v1802, 64
    %v2258 = vpop.permute.xlu0 %2257
    %v2261 = vsel %vm187, %v2099, 0
    %2263 = vmatpush.msra.mxu0 0.0
    %2264 = vmatpush.msra.mxu0 0.0
    %2265 = vmatpush.msra.mxu0 0.0
    %2266 = vmatpush.msra.mxu0 0.0
    %2267 = vmatpush.msra.mxu0 0.0
    %2268 = vmatpush.msra.mxu0 0.0
    %2269 = vmatpush.msra.mxu0 0.0
    %2270 = vmatpush.msra.mxu0 0.0
    %2271 = vmatpush.msra.mxu0 0.0
    %2272 = vmatpush.msra.mxu0 0.0
    %2273 = vmatpush.msra.mxu0 0.0
    %2274 = vmatpush.msra.mxu0 0.0
    %2275 = vmatpush.msra.mxu0 0.0
    %2276 = vmatpush.msra.mxu0 0.0
    %2277 = vmatpush.msra.mxu0 0.0
    %2278 = vmatpush.msra.mxu0 %v2258
    %2279 = vmatmul.f32.gmra.mxu0 %v2261
    %v2280 = vpop.f32.mrf.mxu0
    %v2281 = vadd.f32 0.0, %v2280
    %2282 = vdwg.mxu0
    %2283 = vrot.lane.b32.xlu0 %v1804, 64
    %v2284 = vpop.permute.xlu0 %2283
    %v2287 = vsel %vm187, %v2100, 0
    %2289 = vmatpush.msra.mxu0 0.0
    %2290 = vmatpush.msra.mxu0 0.0
    %2291 = vmatpush.msra.mxu0 0.0
    %2292 = vmatpush.msra.mxu0 0.0
    %2293 = vmatpush.msra.mxu0 0.0
    %2294 = vmatpush.msra.mxu0 0.0
    %2295 = vmatpush.msra.mxu0 0.0
    %2296 = vmatpush.msra.mxu0 0.0
    %2297 = vmatpush.msra.mxu0 0.0
    %2298 = vmatpush.msra.mxu0 0.0
    %2299 = vmatpush.msra.mxu0 0.0
    %2300 = vmatpush.msra.mxu0 0.0
    %2301 = vmatpush.msra.mxu0 0.0
    %2302 = vmatpush.msra.mxu0 0.0
    %2303 = vmatpush.msra.mxu0 0.0
    %2304 = vmatpush.msra.mxu0 %v2284
    %2305 = vmatmul.f32.gmra.mxu0 %v2287
    %v2306 = vpop.f32.mrf.mxu0
    %v2307 = vadd.f32 0.0, %v2306
    %2308 = vdwg.mxu0
    %v2310 = vsel %vm187, %v2177, 0
    %v2313 = vsel %vm187, %v2203, 0
    %2315 = vmatpush.msra.mxu0 0.0
    %2316 = vmatpush.msra.mxu0 0.0
    %2317 = vmatpush.msra.mxu0 0.0
    %2318 = vmatpush.msra.mxu0 0.0
    %2319 = vmatpush.msra.mxu0 0.0
    %2320 = vmatpush.msra.mxu0 0.0
    %2321 = vmatpush.msra.mxu0 0.0
    %2322 = vmatpush.msra.mxu0 0.0
    %2323 = vmatpush.msra.mxu0 0.0
    %2324 = vmatpush.msra.mxu0 0.0
    %2325 = vmatpush.msra.mxu0 0.0
    %2326 = vmatpush.msra.mxu0 0.0
    %2327 = vmatpush.msra.mxu0 0.0
    %2328 = vmatpush.msra.mxu0 0.0
    %2329 = vmatpush.msra.mxu0 0.0
    %2330 = vmatpush.msra.mxu0 %v1773
    %2331 = vmatmul.f32.gmra.mxu0 %v2310
    %v2332 = vpop.f32.mrf.mxu0
    %v2333 = vadd.f32 0.0, %v2332
    %2334 = vmatmul.f32.gmra.mxu0 %v2313
    %v2335 = vpop.f32.mrf.mxu0
    %v2336 = vadd.f32 0.0, %v2335
    %2337 = vdwg.mxu0
    %v2339 = vsel %vm187, %v2125, 0
    %v2342 = vsel %vm187, %v2151, 0
    %2344 = vmatpush.msra.mxu0 0.0
    %2345 = vmatpush.msra.mxu0 0.0
    %2346 = vmatpush.msra.mxu0 0.0
    %2347 = vmatpush.msra.mxu0 0.0
    %2348 = vmatpush.msra.mxu0 0.0
    %2349 = vmatpush.msra.mxu0 0.0
    %2350 = vmatpush.msra.mxu0 0.0
    %2351 = vmatpush.msra.mxu0 0.0
    %2352 = vmatpush.msra.mxu0 0.0
    %2353 = vmatpush.msra.mxu0 0.0
    %2354 = vmatpush.msra.mxu0 0.0
    %2355 = vmatpush.msra.mxu0 0.0
    %2356 = vmatpush.msra.mxu0 0.0
    %2357 = vmatpush.msra.mxu0 0.0
    %2358 = vmatpush.msra.mxu0 0.0
    %2359 = vmatpush.msra.mxu0 %v1772
    %2360 = vmatmul.f32.gmra.mxu0 %v2339
    %v2361 = vpop.f32.mrf.mxu0
    %v2362 = vadd.f32 %v2333, %v2361
    %2363 = vmatmul.f32.gmra.mxu0 %v2342
    %v2364 = vpop.f32.mrf.mxu0
    %v2365 = vadd.f32 %v2336, %v2364
    %2366 = vdwg.mxu0
    %v2368 = vsel %vm187, %v2229, 0
    %v2371 = vsel %vm187, %v2255, 0
    %2373 = vmatpush.msra.mxu0 0.0
    %2374 = vmatpush.msra.mxu0 0.0
    %2375 = vmatpush.msra.mxu0 0.0
    %2376 = vmatpush.msra.mxu0 0.0
    %2377 = vmatpush.msra.mxu0 0.0
    %2378 = vmatpush.msra.mxu0 0.0
    %2379 = vmatpush.msra.mxu0 0.0
    %2380 = vmatpush.msra.mxu0 0.0
    %2381 = vmatpush.msra.mxu0 0.0
    %2382 = vmatpush.msra.mxu0 0.0
    %2383 = vmatpush.msra.mxu0 0.0
    %2384 = vmatpush.msra.mxu0 0.0
    %2385 = vmatpush.msra.mxu0 0.0
    %2386 = vmatpush.msra.mxu0 0.0
    %2387 = vmatpush.msra.mxu0 0.0
    %2388 = vmatpush.msra.mxu0 %v1774
    %2389 = vmatmul.f32.gmra.mxu0 %v2368
    %v2390 = vpop.f32.mrf.mxu0
    %v2391 = vadd.f32 0.0, %v2390
    %2392 = vmatmul.f32.gmra.mxu0 %v2371
    %v2393 = vpop.f32.mrf.mxu0
    %v2394 = vadd.f32 0.0, %v2393
    %2395 = vdwg.mxu0
    %v2396 = vadd.f32 %v2362, %v2391
    %v2397 = vadd.f32 %v2365, %v2394
    %v2399 = vsel %vm187, %v2281, 0
    %v2402 = vsel %vm187, %v2307, 0
    %2404 = vmatpush.msra.mxu0 0.0
    %2405 = vmatpush.msra.mxu0 0.0
    %2406 = vmatpush.msra.mxu0 0.0
    %2407 = vmatpush.msra.mxu0 0.0
    %2408 = vmatpush.msra.mxu0 0.0
    %2409 = vmatpush.msra.mxu0 0.0
    %2410 = vmatpush.msra.mxu0 0.0
    %2411 = vmatpush.msra.mxu0 0.0
    %2412 = vmatpush.msra.mxu0 0.0
    %2413 = vmatpush.msra.mxu0 0.0
    %2414 = vmatpush.msra.mxu0 0.0
    %2415 = vmatpush.msra.mxu0 0.0
    %2416 = vmatpush.msra.mxu0 0.0
    %2417 = vmatpush.msra.mxu0 0.0
    %2418 = vmatpush.msra.mxu0 0.0
    %2419 = vmatpush.msra.mxu0 %v1775
    %2420 = vmatmul.f32.gmra.mxu0 %v2399
    %v2421 = vpop.f32.mrf.mxu0
    %v2422 = vadd.f32 0.0, %v2421
    %2423 = vmatmul.f32.gmra.mxu0 %v2402
    %v2424 = vpop.f32.mrf.mxu0
    %v2425 = vadd.f32 0.0, %v2424
    %2426 = vdwg.mxu0
    %v2427 = vadd.f32 %v2396, %v2422
    %v2428 = vadd.f32 %v2397, %v2425
    %v2429 = vperm.slane %v1776, 0
    %v2430 = vadd.f32 %v2427, %v2429
    %v2431 = vadd.f32 %v2428, %v2429
    %v2432 = vadd.f32 %v1732, %v2430
    %v2433 = vadd.f32 %v1733, %v2431
    %v2434 = vsel %vm90, %v2432, 0.0
    %2435 = vadd.xlane.f32.xlu0 %v2434
    %v2436 = vpop.xlane.xlu0 %2435
    %v2437 = vsel %vm90, %v2433, 0.0
    %2438 = vadd.xlane.f32.xlu0 %v2437
    %v2439 = vpop.xlane.xlu0 %2438
    %v2440 = vmul.f32 %v2436, %v827
    %v2441 = vmul.f32 %v2439, %v827
    %v2442 = vsub.f32 %v2432, %v2440
    %v2443 = vsub.f32 %v2433, %v2441
    %v2444 = vmul.f32 %v2442, %v2442
    %v2445 = vmul.f32 %v2443, %v2443
    %v2446 = vsel %vm90, %v2444, 0.0
    %2447 = vadd.xlane.f32.xlu0 %v2446
    %v2448 = vpop.xlane.xlu0 %2447
    %v2449 = vsel %vm90, %v2445, 0.0
    %2450 = vadd.xlane.f32.xlu0 %v2449
    %v2451 = vpop.xlane.xlu0 %2450
    %v2452 = vmul.f32 %v2448, %v827
    %v2453 = vmul.f32 %v2451, %v827
    %v2454 = vadd.f32 %v2452, 1e-05
    %v2455 = vadd.f32 %v2453, 1e-05
    %v2456 = vrsqrt.pop %v2454
    %v2457 = vmul.f32 %v2456, %v2454
    %v2458 = vmul.f32 %v2457, %v2456
    %v2459 = vmul.f32 0.5, %v2458
    %v2460 = vsub.f32 1.5, %v2459
    %v2461 = vmul.f32 %v2456, %v2460
    %vm2462 = vweird.f32 %v2454
    %vm2463 = vweird.f32 %v2456
    %vm2464 = vmor %vm2462, %vm2463
    %v2465 = vsel %vm2464, %v2456, %v2461
    %v2466 = vrsqrt.pop %v2455
    %v2467 = vmul.f32 %v2466, %v2455
    %v2468 = vmul.f32 %v2467, %v2466
    %v2469 = vmul.f32 0.5, %v2468
    %v2470 = vsub.f32 1.5, %v2469
    %v2471 = vmul.f32 %v2466, %v2470
    %vm2472 = vweird.f32 %v2455
    %vm2473 = vweird.f32 %v2466
    %vm2474 = vmor %vm2472, %vm2473
    %v2475 = vsel %vm2474, %v2466, %v2471
    %v2476 = vmul.f32 %v2442, %v2465
    %v2477 = vmul.f32 %v2443, %v2475
    %v2478 = vperm.slane %v1734, 0
    %v2479 = vmul.f32 %v2476, %v2478
    %v2480 = vmul.f32 %v2477, %v2478
    %v2481 = vperm.slane %v1734, 1
    %v2482 = vadd.f32 %v2479, %v2481
    %v2483 = vadd.f32 %v2480, %v2481
    %v2484 = vld [vmem:[#allocation2 + $0x1f8] sm:$0xff]
    %v2485 = vld [vmem:[#allocation2 + $0x200] sm:$0xff]
    %v2486 = vld [vmem:[#allocation2 + $0x208] sm:$0xff]
    %v2487 = vld [vmem:[#allocation2 + $0x210] sm:$0xff]
    %v2488 = vld [vmem:[#allocation2 + $0x218] sm:$0x1]
    %v2489 = vperm.slane %v2488, 0
    %v2491 = vsel %vm90, %v2482, 0
    %v2494 = vsel %vm90, %v2483, 0
    %2496 = vmatpush.msra.mxu0 0.0
    %2497 = vmatpush.msra.mxu0 0.0
    %2498 = vmatpush.msra.mxu0 0.0
    %2499 = vmatpush.msra.mxu0 0.0
    %2500 = vmatpush.msra.mxu0 0.0
    %2501 = vmatpush.msra.mxu0 0.0
    %2502 = vmatpush.msra.mxu0 0.0
    %2503 = vmatpush.msra.mxu0 0.0
    %2504 = vmatpush.msra.mxu0 0.0
    %2505 = vmatpush.msra.mxu0 0.0
    %2506 = vmatpush.msra.mxu0 0.0
    %2507 = vmatpush.msra.mxu0 0.0
    %2508 = vmatpush.msra.mxu0 %v2487
    %2509 = vmatpush.msra.mxu0 %v2486
    %2510 = vmatpush.msra.mxu0 %v2485
    %2511 = vmatpush.msra.mxu0 %v2484
    %2512 = vmatmul.f32.gmra.mxu0 %v2491
    %v2513 = vpop.f32.mrf.mxu0
    %v2514 = vadd.f32 %v2489, %v2513
    %2515 = vmatmul.f32.gmra.mxu0 %v2494
    %v2516 = vpop.f32.mrf.mxu0
    %v2517 = vadd.f32 %v2489, %v2516
    %2518 = vdwg.mxu0
    %v2519 = vmul.f32 %v2514, 0.35355338
    %v2520 = vmul.f32 %v2517, 0.35355338
    %v2521 = vld [vmem:[#allocation2 + $0x220] sm:$0xff]
    %v2522 = vld [vmem:[#allocation2 + $0x228] sm:$0xff]
    %v2523 = vld [vmem:[#allocation2 + $0x230] sm:$0xff]
    %v2524 = vld [vmem:[#allocation2 + $0x238] sm:$0xff]
    %v2525 = vld [vmem:[#allocation2 + $0x240] sm:$0x1]
    %2528 = vrot.lane.b32.xlu0 %v2519, 120
    %v2529 = vpop.permute.xlu0 %2528
    %2530 = vrot.lane.b32.xlu0 %v2520, 120
    %v2531 = vpop.permute.xlu0 %2530
    %2532 = vrot.lane.b32.xlu0 %v2519, 112
    %v2533 = vpop.permute.xlu0 %2532
    %2534 = vrot.lane.b32.xlu0 %v2520, 112
    %v2535 = vpop.permute.xlu0 %2534
    %2536 = vrot.lane.b32.xlu0 %v2519, 104
    %v2537 = vpop.permute.xlu0 %2536
    %2538 = vrot.lane.b32.xlu0 %v2520, 104
    %v2539 = vpop.permute.xlu0 %2538
    %2540 = vrot.lane.b32.xlu0 %v115, 64
    %v2541 = vpop.permute.xlu0 %2540
    %v2542 = vsel %vm187, %v2519, 0
    %v2544 = vsel %vm187, %v2541, 0
    %2546 = vmatpush.xpose.msra.mxu0 0.0
    %2547 = vmatpush.xpose.msra.mxu0 0.0
    %2548 = vmatpush.xpose.msra.mxu0 0.0
    %2549 = vmatpush.xpose.msra.mxu0 0.0
    %2550 = vmatpush.xpose.msra.mxu0 0.0
    %2551 = vmatpush.xpose.msra.mxu0 0.0
    %2552 = vmatpush.xpose.msra.mxu0 0.0
    %2553 = vmatpush.xpose.msra.mxu0 0.0
    %2554 = vmatpush.xpose.msra.mxu0 0.0
    %2555 = vmatpush.xpose.msra.mxu0 0.0
    %2556 = vmatpush.xpose.msra.mxu0 0.0
    %2557 = vmatpush.xpose.msra.mxu0 0.0
    %2558 = vmatpush.xpose.msra.mxu0 0.0
    %2559 = vmatpush.xpose.msra.mxu0 0.0
    %2560 = vmatpush.xpose.msra.mxu0 0.0
    %2561 = vmatpush.xpose.msra.mxu0 %v2544
    %2562 = vmatmul.f32.gmra.mxu0 %v2542
    %v2563 = vpop.f32.mrf.mxu0
    %v2564 = vadd.f32 0.0, %v2563
    %2565 = vdwg.mxu0
    %2566 = vrot.lane.b32.xlu0 %v118, 64
    %v2567 = vpop.permute.xlu0 %2566
    %v2568 = vsel %vm187, %v2520, 0
    %v2570 = vsel %vm187, %v2567, 0
    %2572 = vmatpush.xpose.msra.mxu0 0.0
    %2573 = vmatpush.xpose.msra.mxu0 0.0
    %2574 = vmatpush.xpose.msra.mxu0 0.0
    %2575 = vmatpush.xpose.msra.mxu0 0.0
    %2576 = vmatpush.xpose.msra.mxu0 0.0
    %2577 = vmatpush.xpose.msra.mxu0 0.0
    %2578 = vmatpush.xpose.msra.mxu0 0.0
    %2579 = vmatpush.xpose.msra.mxu0 0.0
    %2580 = vmatpush.xpose.msra.mxu0 0.0
    %2581 = vmatpush.xpose.msra.mxu0 0.0
    %2582 = vmatpush.xpose.msra.mxu0 0.0
    %2583 = vmatpush.xpose.msra.mxu0 0.0
    %2584 = vmatpush.xpose.msra.mxu0 0.0
    %2585 = vmatpush.xpose.msra.mxu0 0.0
    %2586 = vmatpush.xpose.msra.mxu0 0.0
    %2587 = vmatpush.xpose.msra.mxu0 %v2570
    %2588 = vmatmul.f32.gmra.mxu0 %v2568
    %v2589 = vpop.f32.mrf.mxu0
    %v2590 = vadd.f32 0.0, %v2589
    %2591 = vdwg.mxu0
    %2592 = vrot.lane.b32.xlu0 %v931, 64
    %v2593 = vpop.permute.xlu0 %2592
    %v2594 = vsel %vm187, %v2529, 0
    %v2596 = vsel %vm187, %v2593, 0
    %2598 = vmatpush.xpose.msra.mxu0 0.0
    %2599 = vmatpush.xpose.msra.mxu0 0.0
    %2600 = vmatpush.xpose.msra.mxu0 0.0
    %2601 = vmatpush.xpose.msra.mxu0 0.0
    %2602 = vmatpush.xpose.msra.mxu0 0.0
    %2603 = vmatpush.xpose.msra.mxu0 0.0
    %2604 = vmatpush.xpose.msra.mxu0 0.0
    %2605 = vmatpush.xpose.msra.mxu0 0.0
    %2606 = vmatpush.xpose.msra.mxu0 0.0
    %2607 = vmatpush.xpose.msra.mxu0 0.0
    %2608 = vmatpush.xpose.msra.mxu0 0.0
    %2609 = vmatpush.xpose.msra.mxu0 0.0
    %2610 = vmatpush.xpose.msra.mxu0 0.0
    %2611 = vmatpush.xpose.msra.mxu0 0.0
    %2612 = vmatpush.xpose.msra.mxu0 0.0
    %2613 = vmatpush.xpose.msra.mxu0 %v2596
    %2614 = vmatmul.f32.gmra.mxu0 %v2594
    %v2615 = vpop.f32.mrf.mxu0
    %v2616 = vadd.f32 0.0, %v2615
    %2617 = vdwg.mxu0
    %2618 = vrot.lane.b32.xlu0 %v933, 64
    %v2619 = vpop.permute.xlu0 %2618
    %v2620 = vsel %vm187, %v2531, 0
    %v2622 = vsel %vm187, %v2619, 0
    %2624 = vmatpush.xpose.msra.mxu0 0.0
    %2625 = vmatpush.xpose.msra.mxu0 0.0
    %2626 = vmatpush.xpose.msra.mxu0 0.0
    %2627 = vmatpush.xpose.msra.mxu0 0.0
    %2628 = vmatpush.xpose.msra.mxu0 0.0
    %2629 = vmatpush.xpose.msra.mxu0 0.0
    %2630 = vmatpush.xpose.msra.mxu0 0.0
    %2631 = vmatpush.xpose.msra.mxu0 0.0
    %2632 = vmatpush.xpose.msra.mxu0 0.0
    %2633 = vmatpush.xpose.msra.mxu0 0.0
    %2634 = vmatpush.xpose.msra.mxu0 0.0
    %2635 = vmatpush.xpose.msra.mxu0 0.0
    %2636 = vmatpush.xpose.msra.mxu0 0.0
    %2637 = vmatpush.xpose.msra.mxu0 0.0
    %2638 = vmatpush.xpose.msra.mxu0 0.0
    %2639 = vmatpush.xpose.msra.mxu0 %v2622
    %2640 = vmatmul.f32.gmra.mxu0 %v2620
    %v2641 = vpop.f32.mrf.mxu0
    %v2642 = vadd.f32 0.0, %v2641
    %2643 = vdwg.mxu0
    %2644 = vrot.lane.b32.xlu0 %v935, 64
    %v2645 = vpop.permute.xlu0 %2644
    %v2646 = vsel %vm187, %v2533, 0
    %v2648 = vsel %vm187, %v2645, 0
    %2650 = vmatpush.xpose.msra.mxu0 0.0
    %2651 = vmatpush.xpose.msra.mxu0 0.0
    %2652 = vmatpush.xpose.msra.mxu0 0.0
    %2653 = vmatpush.xpose.msra.mxu0 0.0
    %2654 = vmatpush.xpose.msra.mxu0 0.0
    %2655 = vmatpush.xpose.msra.mxu0 0.0
    %2656 = vmatpush.xpose.msra.mxu0 0.0
    %2657 = vmatpush.xpose.msra.mxu0 0.0
    %2658 = vmatpush.xpose.msra.mxu0 0.0
    %2659 = vmatpush.xpose.msra.mxu0 0.0
    %2660 = vmatpush.xpose.msra.mxu0 0.0
    %2661 = vmatpush.xpose.msra.mxu0 0.0
    %2662 = vmatpush.xpose.msra.mxu0 0.0
    %2663 = vmatpush.xpose.msra.mxu0 0.0
    %2664 = vmatpush.xpose.msra.mxu0 0.0
    %2665 = vmatpush.xpose.msra.mxu0 %v2648
    %2666 = vmatmul.f32.gmra.mxu0 %v2646
    %v2667 = vpop.f32.mrf.mxu0
    %v2668 = vadd.f32 0.0, %v2667
    %2669 = vdwg.mxu0
    %2670 = vrot.lane.b32.xlu0 %v937, 64
    %v2671 = vpop.permute.xlu0 %2670
    %v2672 = vsel %vm187, %v2535, 0
    %v2674 = vsel %vm187, %v2671, 0
    %2676 = vmatpush.xpose.msra.mxu0 0.0
    %2677 = vmatpush.xpose.msra.mxu0 0.0
    %2678 = vmatpush.xpose.msra.mxu0 0.0
    %2679 = vmatpush.xpose.msra.mxu0 0.0
    %2680 = vmatpush.xpose.msra.mxu0 0.0
    %2681 = vmatpush.xpose.msra.mxu0 0.0
    %2682 = vmatpush.xpose.msra.mxu0 0.0
    %2683 = vmatpush.xpose.msra.mxu0 0.0
    %2684 = vmatpush.xpose.msra.mxu0 0.0
    %2685 = vmatpush.xpose.msra.mxu0 0.0
    %2686 = vmatpush.xpose.msra.mxu0 0.0
    %2687 = vmatpush.xpose.msra.mxu0 0.0
    %2688 = vmatpush.xpose.msra.mxu0 0.0
    %2689 = vmatpush.xpose.msra.mxu0 0.0
    %2690 = vmatpush.xpose.msra.mxu0 0.0
    %2691 = vmatpush.xpose.msra.mxu0 %v2674
    %2692 = vmatmul.f32.gmra.mxu0 %v2672
    %v2693 = vpop.f32.mrf.mxu0
    %v2694 = vadd.f32 0.0, %v2693
    %2695 = vdwg.mxu0
    %2696 = vrot.lane.b32.xlu0 %v939, 64
    %v2697 = vpop.permute.xlu0 %2696
    %v2698 = vsel %vm187, %v2537, 0
    %v2700 = vsel %vm187, %v2697, 0
    %2702 = vmatpush.xpose.msra.mxu0 0.0
    %2703 = vmatpush.xpose.msra.mxu0 0.0
    %2704 = vmatpush.xpose.msra.mxu0 0.0
    %2705 = vmatpush.xpose.msra.mxu0 0.0
    %2706 = vmatpush.xpose.msra.mxu0 0.0
    %2707 = vmatpush.xpose.msra.mxu0 0.0
    %2708 = vmatpush.xpose.msra.mxu0 0.0
    %2709 = vmatpush.xpose.msra.mxu0 0.0
    %2710 = vmatpush.xpose.msra.mxu0 0.0
    %2711 = vmatpush.xpose.msra.mxu0 0.0
    %2712 = vmatpush.xpose.msra.mxu0 0.0
    %2713 = vmatpush.xpose.msra.mxu0 0.0
    %2714 = vmatpush.xpose.msra.mxu0 0.0
    %2715 = vmatpush.xpose.msra.mxu0 0.0
    %2716 = vmatpush.xpose.msra.mxu0 0.0
    %2717 = vmatpush.xpose.msra.mxu0 %v2700
    %2718 = vmatmul.f32.gmra.mxu0 %v2698
    %v2719 = vpop.f32.mrf.mxu0
    %v2720 = vadd.f32 0.0, %v2719
    %2721 = vdwg.mxu0
    %2722 = vrot.lane.b32.xlu0 %v941, 64
    %v2723 = vpop.permute.xlu0 %2722
    %v2724 = vsel %vm187, %v2539, 0
    %v2726 = vsel %vm187, %v2723, 0
    %2728 = vmatpush.xpose.msra.mxu0 0.0
    %2729 = vmatpush.xpose.msra.mxu0 0.0
    %2730 = vmatpush.xpose.msra.mxu0 0.0
    %2731 = vmatpush.xpose.msra.mxu0 0.0
    %2732 = vmatpush.xpose.msra.mxu0 0.0
    %2733 = vmatpush.xpose.msra.mxu0 0.0
    %2734 = vmatpush.xpose.msra.mxu0 0.0
    %2735 = vmatpush.xpose.msra.mxu0 0.0
    %2736 = vmatpush.xpose.msra.mxu0 0.0
    %2737 = vmatpush.xpose.msra.mxu0 0.0
    %2738 = vmatpush.xpose.msra.mxu0 0.0
    %2739 = vmatpush.xpose.msra.mxu0 0.0
    %2740 = vmatpush.xpose.msra.mxu0 0.0
    %2741 = vmatpush.xpose.msra.mxu0 0.0
    %2742 = vmatpush.xpose.msra.mxu0 0.0
    %2743 = vmatpush.xpose.msra.mxu0 %v2726
    %2744 = vmatmul.f32.gmra.mxu0 %v2724
    %v2745 = vpop.f32.mrf.mxu0
    %v2746 = vadd.f32 0.0, %v2745
    %2747 = vdwg.mxu0
    %v2748 = vsel %vm187, %v2564, -inf
    %2749 = vmax.xlane.f32.xlu0 %v2748
    %v2750 = vpop.xlane.xlu0 %2749
    %v2751 = vsel %vm187, %v2590, -inf
    %2752 = vmax.xlane.f32.xlu0 %v2751
    %v2753 = vpop.xlane.xlu0 %2752
    %v2754 = vsel %vm187, %v2616, -inf
    %2755 = vmax.xlane.f32.xlu0 %v2754
    %v2756 = vpop.xlane.xlu0 %2755
    %v2757 = vsel %vm187, %v2642, -inf
    %2758 = vmax.xlane.f32.xlu0 %v2757
    %v2759 = vpop.xlane.xlu0 %2758
    %v2760 = vsel %vm187, %v2668, -inf
    %2761 = vmax.xlane.f32.xlu0 %v2760
    %v2762 = vpop.xlane.xlu0 %2761
    %v2763 = vsel %vm187, %v2694, -inf
    %2764 = vmax.xlane.f32.xlu0 %v2763
    %v2765 = vpop.xlane.xlu0 %2764
    %v2766 = vsel %vm187, %v2720, -inf
    %2767 = vmax.xlane.f32.xlu0 %v2766
    %v2768 = vpop.xlane.xlu0 %2767
    %v2769 = vsel %vm187, %v2746, -inf
    %2770 = vmax.xlane.f32.xlu0 %v2769
    %v2771 = vpop.xlane.xlu0 %2770
    %v2772 = vsub.f32 %v2564, %v2750
    %v2773 = vsub.f32 %v2590, %v2753
    %v2774 = vsub.f32 %v2616, %v2756
    %v2775 = vsub.f32 %v2642, %v2759
    %v2776 = vsub.f32 %v2668, %v2762
    %v2777 = vsub.f32 %v2694, %v2765
    %v2778 = vsub.f32 %v2720, %v2768
    %v2779 = vsub.f32 %v2746, %v2771
    %v2780 = vmul.f32 %v2772, 1.442695
    %v2781 = vpow.pop %v2780
    %v2782 = vmul.f32 %v2773, 1.442695
    %v2783 = vpow.pop %v2782
    %v2784 = vmul.f32 %v2774, 1.442695
    %v2785 = vpow.pop %v2784
    %v2786 = vmul.f32 %v2775, 1.442695
    %v2787 = vpow.pop %v2786
    %v2788 = vmul.f32 %v2776, 1.442695
    %v2789 = vpow.pop %v2788
    %v2790 = vmul.f32 %v2777, 1.442695
    %v2791 = vpow.pop %v2790
    %v2792 = vmul.f32 %v2778, 1.442695
    %v2793 = vpow.pop %v2792
    %v2794 = vmul.f32 %v2779, 1.442695
    %v2795 = vpow.pop %v2794
    %v2796 = vsel %vm187, %v2781, 0.0
    %2797 = vadd.xlane.f32.xlu0 %v2796
    %v2798 = vpop.xlane.xlu0 %2797
    %v2799 = vsel %vm187, %v2783, 0.0
    %2800 = vadd.xlane.f32.xlu0 %v2799
    %v2801 = vpop.xlane.xlu0 %2800
    %v2802 = vsel %vm187, %v2785, 0.0
    %2803 = vadd.xlane.f32.xlu0 %v2802
    %v2804 = vpop.xlane.xlu0 %2803
    %v2805 = vsel %vm187, %v2787, 0.0
    %2806 = vadd.xlane.f32.xlu0 %v2805
    %v2807 = vpop.xlane.xlu0 %2806
    %v2808 = vsel %vm187, %v2789, 0.0
    %2809 = vadd.xlane.f32.xlu0 %v2808
    %v2810 = vpop.xlane.xlu0 %2809
    %v2811 = vsel %vm187, %v2791, 0.0
    %2812 = vadd.xlane.f32.xlu0 %v2811
    %v2813 = vpop.xlane.xlu0 %2812
    %v2814 = vsel %vm187, %v2793, 0.0
    %2815 = vadd.xlane.f32.xlu0 %v2814
    %v2816 = vpop.xlane.xlu0 %2815
    %v2817 = vsel %vm187, %v2795, 0.0
    %2818 = vadd.xlane.f32.xlu0 %v2817
    %v2819 = vpop.xlane.xlu0 %2818
    %v2820 = vrcp.pop %v2798
    %v2821 = vrcp.pop %v2801
    %v2822 = vrcp.pop %v2804
    %v2823 = vrcp.pop %v2807
    %v2824 = vrcp.pop %v2810
    %v2825 = vrcp.pop %v2813
    %v2826 = vrcp.pop %v2816
    %v2827 = vrcp.pop %v2819
    %v2828 = vmul.f32 %v2781, %v2820
    %v2829 = vmul.f32 %v2783, %v2821
    %v2830 = vmul.f32 %v2785, %v2822
    %v2831 = vmul.f32 %v2787, %v2823
    %v2832 = vmul.f32 %v2789, %v2824
    %v2833 = vmul.f32 %v2791, %v2825
    %v2834 = vmul.f32 %v2793, %v2826
    %v2835 = vmul.f32 %v2795, %v2827
    %2836 = vrot.lane.b32.xlu0 %v115, 32
    %v2837 = vpop.permute.xlu0 %2836
    %v2840 = vsel %vm187, %v2828, 0
    %2842 = vmatpush.msra.mxu0 0.0
    %2843 = vmatpush.msra.mxu0 0.0
    %2844 = vmatpush.msra.mxu0 0.0
    %2845 = vmatpush.msra.mxu0 0.0
    %2846 = vmatpush.msra.mxu0 0.0
    %2847 = vmatpush.msra.mxu0 0.0
    %2848 = vmatpush.msra.mxu0 0.0
    %2849 = vmatpush.msra.mxu0 0.0
    %2850 = vmatpush.msra.mxu0 0.0
    %2851 = vmatpush.msra.mxu0 0.0
    %2852 = vmatpush.msra.mxu0 0.0
    %2853 = vmatpush.msra.mxu0 0.0
    %2854 = vmatpush.msra.mxu0 0.0
    %2855 = vmatpush.msra.mxu0 0.0
    %2856 = vmatpush.msra.mxu0 0.0
    %2857 = vmatpush.msra.mxu0 %v2837
    %2858 = vmatmul.f32.gmra.mxu0 %v2840
    %v2859 = vpop.f32.mrf.mxu0
    %v2860 = vadd.f32 0.0, %v2859
    %2861 = vdwg.mxu0
    %2862 = vrot.lane.b32.xlu0 %v118, 32
    %v2863 = vpop.permute.xlu0 %2862
    %v2866 = vsel %vm187, %v2829, 0
    %2868 = vmatpush.msra.mxu0 0.0
    %2869 = vmatpush.msra.mxu0 0.0
    %2870 = vmatpush.msra.mxu0 0.0
    %2871 = vmatpush.msra.mxu0 0.0
    %2872 = vmatpush.msra.mxu0 0.0
    %2873 = vmatpush.msra.mxu0 0.0
    %2874 = vmatpush.msra.mxu0 0.0
    %2875 = vmatpush.msra.mxu0 0.0
    %2876 = vmatpush.msra.mxu0 0.0
    %2877 = vmatpush.msra.mxu0 0.0
    %2878 = vmatpush.msra.mxu0 0.0
    %2879 = vmatpush.msra.mxu0 0.0
    %2880 = vmatpush.msra.mxu0 0.0
    %2881 = vmatpush.msra.mxu0 0.0
    %2882 = vmatpush.msra.mxu0 0.0
    %2883 = vmatpush.msra.mxu0 %v2863
    %2884 = vmatmul.f32.gmra.mxu0 %v2866
    %v2885 = vpop.f32.mrf.mxu0
    %v2886 = vadd.f32 0.0, %v2885
    %2887 = vdwg.mxu0
    %2888 = vrot.lane.b32.xlu0 %v931, 32
    %v2889 = vpop.permute.xlu0 %2888
    %v2892 = vsel %vm187, %v2830, 0
    %2894 = vmatpush.msra.mxu0 0.0
    %2895 = vmatpush.msra.mxu0 0.0
    %2896 = vmatpush.msra.mxu0 0.0
    %2897 = vmatpush.msra.mxu0 0.0
    %2898 = vmatpush.msra.mxu0 0.0
    %2899 = vmatpush.msra.mxu0 0.0
    %2900 = vmatpush.msra.mxu0 0.0
    %2901 = vmatpush.msra.mxu0 0.0
    %2902 = vmatpush.msra.mxu0 0.0
    %2903 = vmatpush.msra.mxu0 0.0
    %2904 = vmatpush.msra.mxu0 0.0
    %2905 = vmatpush.msra.mxu0 0.0
    %2906 = vmatpush.msra.mxu0 0.0
    %2907 = vmatpush.msra.mxu0 0.0
    %2908 = vmatpush.msra.mxu0 0.0
    %2909 = vmatpush.msra.mxu0 %v2889
    %2910 = vmatmul.f32.gmra.mxu0 %v2892
    %v2911 = vpop.f32.mrf.mxu0
    %v2912 = vadd.f32 0.0, %v2911
    %2913 = vdwg.mxu0
    %2914 = vrot.lane.b32.xlu0 %v933, 32
    %v2915 = vpop.permute.xlu0 %2914
    %v2918 = vsel %vm187, %v2831, 0
    %2920 = vmatpush.msra.mxu0 0.0
    %2921 = vmatpush.msra.mxu0 0.0
    %2922 = vmatpush.msra.mxu0 0.0
    %2923 = vmatpush.msra.mxu0 0.0
    %2924 = vmatpush.msra.mxu0 0.0
    %2925 = vmatpush.msra.mxu0 0.0
    %2926 = vmatpush.msra.mxu0 0.0
    %2927 = vmatpush.msra.mxu0 0.0
    %2928 = vmatpush.msra.mxu0 0.0
    %2929 = vmatpush.msra.mxu0 0.0
    %2930 = vmatpush.msra.mxu0 0.0
    %2931 = vmatpush.msra.mxu0 0.0
    %2932 = vmatpush.msra.mxu0 0.0
    %2933 = vmatpush.msra.mxu0 0.0
    %2934 = vmatpush.msra.mxu0 0.0
    %2935 = vmatpush.msra.mxu0 %v2915
    %2936 = vmatmul.f32.gmra.mxu0 %v2918
    %v2937 = vpop.f32.mrf.mxu0
    %v2938 = vadd.f32 0.0, %v2937
    %2939 = vdwg.mxu0
    %2940 = vrot.lane.b32.xlu0 %v935, 32
    %v2941 = vpop.permute.xlu0 %2940
    %v2944 = vsel %vm187, %v2832, 0
    %2946 = vmatpush.msra.mxu0 0.0
    %2947 = vmatpush.msra.mxu0 0.0
    %2948 = vmatpush.msra.mxu0 0.0
    %2949 = vmatpush.msra.mxu0 0.0
    %2950 = vmatpush.msra.mxu0 0.0
    %2951 = vmatpush.msra.mxu0 0.0
    %2952 = vmatpush.msra.mxu0 0.0
    %2953 = vmatpush.msra.mxu0 0.0
    %2954 = vmatpush.msra.mxu0 0.0
    %2955 = vmatpush.msra.mxu0 0.0
    %2956 = vmatpush.msra.mxu0 0.0
    %2957 = vmatpush.msra.mxu0 0.0
    %2958 = vmatpush.msra.mxu0 0.0
    %2959 = vmatpush.msra.mxu0 0.0
    %2960 = vmatpush.msra.mxu0 0.0
    %2961 = vmatpush.msra.mxu0 %v2941
    %2962 = vmatmul.f32.gmra.mxu0 %v2944
    %v2963 = vpop.f32.mrf.mxu0
    %v2964 = vadd.f32 0.0, %v2963
    %2965 = vdwg.mxu0
    %2966 = vrot.lane.b32.xlu0 %v937, 32
    %v2967 = vpop.permute.xlu0 %2966
    %v2970 = vsel %vm187, %v2833, 0
    %2972 = vmatpush.msra.mxu0 0.0
    %2973 = vmatpush.msra.mxu0 0.0
    %2974 = vmatpush.msra.mxu0 0.0
    %2975 = vmatpush.msra.mxu0 0.0
    %2976 = vmatpush.msra.mxu0 0.0
    %2977 = vmatpush.msra.mxu0 0.0
    %2978 = vmatpush.msra.mxu0 0.0
    %2979 = vmatpush.msra.mxu0 0.0
    %2980 = vmatpush.msra.mxu0 0.0
    %2981 = vmatpush.msra.mxu0 0.0
    %2982 = vmatpush.msra.mxu0 0.0
    %2983 = vmatpush.msra.mxu0 0.0
    %2984 = vmatpush.msra.mxu0 0.0
    %2985 = vmatpush.msra.mxu0 0.0
    %2986 = vmatpush.msra.mxu0 0.0
    %2987 = vmatpush.msra.mxu0 %v2967
    %2988 = vmatmul.f32.gmra.mxu0 %v2970
    %v2989 = vpop.f32.mrf.mxu0
    %v2990 = vadd.f32 0.0, %v2989
    %2991 = vdwg.mxu0
    %2992 = vrot.lane.b32.xlu0 %v939, 32
    %v2993 = vpop.permute.xlu0 %2992
    %v2996 = vsel %vm187, %v2834, 0
    %2998 = vmatpush.msra.mxu0 0.0
    %2999 = vmatpush.msra.mxu0 0.0
    %3000 = vmatpush.msra.mxu0 0.0
    %3001 = vmatpush.msra.mxu0 0.0
    %3002 = vmatpush.msra.mxu0 0.0
    %3003 = vmatpush.msra.mxu0 0.0
    %3004 = vmatpush.msra.mxu0 0.0
    %3005 = vmatpush.msra.mxu0 0.0
    %3006 = vmatpush.msra.mxu0 0.0
    %3007 = vmatpush.msra.mxu0 0.0
    %3008 = vmatpush.msra.mxu0 0.0
    %3009 = vmatpush.msra.mxu0 0.0
    %3010 = vmatpush.msra.mxu0 0.0
    %3011 = vmatpush.msra.mxu0 0.0
    %3012 = vmatpush.msra.mxu0 0.0
    %3013 = vmatpush.msra.mxu0 %v2993
    %3014 = vmatmul.f32.gmra.mxu0 %v2996
    %v3015 = vpop.f32.mrf.mxu0
    %v3016 = vadd.f32 0.0, %v3015
    %3017 = vdwg.mxu0
    %3018 = vrot.lane.b32.xlu0 %v941, 32
    %v3019 = vpop.permute.xlu0 %3018
    %v3022 = vsel %vm187, %v2835, 0
    %3024 = vmatpush.msra.mxu0 0.0
    %3025 = vmatpush.msra.mxu0 0.0
    %3026 = vmatpush.msra.mxu0 0.0
    %3027 = vmatpush.msra.mxu0 0.0
    %3028 = vmatpush.msra.mxu0 0.0
    %3029 = vmatpush.msra.mxu0 0.0
    %3030 = vmatpush.msra.mxu0 0.0
    %3031 = vmatpush.msra.mxu0 0.0
    %3032 = vmatpush.msra.mxu0 0.0
    %3033 = vmatpush.msra.mxu0 0.0
    %3034 = vmatpush.msra.mxu0 0.0
    %3035 = vmatpush.msra.mxu0 0.0
    %3036 = vmatpush.msra.mxu0 0.0
    %3037 = vmatpush.msra.mxu0 0.0
    %3038 = vmatpush.msra.mxu0 0.0
    %3039 = vmatpush.msra.mxu0 %v3019
    %3040 = vmatmul.f32.gmra.mxu0 %v3022
    %v3041 = vpop.f32.mrf.mxu0
    %v3042 = vadd.f32 0.0, %v3041
    %3043 = vdwg.mxu0
    %v3045 = vsel %vm187, %v2912, 0
    %v3048 = vsel %vm187, %v2938, 0
    %3050 = vmatpush.msra.mxu0 0.0
    %3051 = vmatpush.msra.mxu0 0.0
    %3052 = vmatpush.msra.mxu0 0.0
    %3053 = vmatpush.msra.mxu0 0.0
    %3054 = vmatpush.msra.mxu0 0.0
    %3055 = vmatpush.msra.mxu0 0.0
    %3056 = vmatpush.msra.mxu0 0.0
    %3057 = vmatpush.msra.mxu0 0.0
    %3058 = vmatpush.msra.mxu0 0.0
    %3059 = vmatpush.msra.mxu0 0.0
    %3060 = vmatpush.msra.mxu0 0.0
    %3061 = vmatpush.msra.mxu0 0.0
    %3062 = vmatpush.msra.mxu0 0.0
    %3063 = vmatpush.msra.mxu0 0.0
    %3064 = vmatpush.msra.mxu0 0.0
    %3065 = vmatpush.msra.mxu0 %v2522
    %3066 = vmatmul.f32.gmra.mxu0 %v3045
    %v3067 = vpop.f32.mrf.mxu0
    %v3068 = vadd.f32 0.0, %v3067
    %3069 = vmatmul.f32.gmra.mxu0 %v3048
    %v3070 = vpop.f32.mrf.mxu0
    %v3071 = vadd.f32 0.0, %v3070
    %3072 = vdwg.mxu0
    %v3074 = vsel %vm187, %v2860, 0
    %v3077 = vsel %vm187, %v2886, 0
    %3079 = vmatpush.msra.mxu0 0.0
    %3080 = vmatpush.msra.mxu0 0.0
    %3081 = vmatpush.msra.mxu0 0.0
    %3082 = vmatpush.msra.mxu0 0.0
    %3083 = vmatpush.msra.mxu0 0.0
    %3084 = vmatpush.msra.mxu0 0.0
    %3085 = vmatpush.msra.mxu0 0.0
    %3086 = vmatpush.msra.mxu0 0.0
    %3087 = vmatpush.msra.mxu0 0.0
    %3088 = vmatpush.msra.mxu0 0.0
    %3089 = vmatpush.msra.mxu0 0.0
    %3090 = vmatpush.msra.mxu0 0.0
    %3091 = vmatpush.msra.mxu0 0.0
    %3092 = vmatpush.msra.mxu0 0.0
    %3093 = vmatpush.msra.mxu0 0.0
    %3094 = vmatpush.msra.mxu0 %v2521
    %3095 = vmatmul.f32.gmra.mxu0 %v3074
    %v3096 = vpop.f32.mrf.mxu0
    %v3097 = vadd.f32 %v3068, %v3096
    %3098 = vmatmul.f32.gmra.mxu0 %v3077
    %v3099 = vpop.f32.mrf.mxu0
    %v3100 = vadd.f32 %v3071, %v3099
    %3101 = vdwg.mxu0
    %v3103 = vsel %vm187, %v2964, 0
    %v3106 = vsel %vm187, %v2990, 0
    %3108 = vmatpush.msra.mxu0 0.0
    %3109 = vmatpush.msra.mxu0 0.0
    %3110 = vmatpush.msra.mxu0 0.0
    %3111 = vmatpush.msra.mxu0 0.0
    %3112 = vmatpush.msra.mxu0 0.0
    %3113 = vmatpush.msra.mxu0 0.0
    %3114 = vmatpush.msra.mxu0 0.0
    %3115 = vmatpush.msra.mxu0 0.0
    %3116 = vmatpush.msra.mxu0 0.0
    %3117 = vmatpush.msra.mxu0 0.0
    %3118 = vmatpush.msra.mxu0 0.0
    %3119 = vmatpush.msra.mxu0 0.0
    %3120 = vmatpush.msra.mxu0 0.0
    %3121 = vmatpush.msra.mxu0 0.0
    %3122 = vmatpush.msra.mxu0 0.0
    %3123 = vmatpush.msra.mxu0 %v2523
    %3124 = vmatmul.f32.gmra.mxu0 %v3103
    %v3125 = vpop.f32.mrf.mxu0
    %v3126 = vadd.f32 0.0, %v3125
    %3127 = vmatmul.f32.gmra.mxu0 %v3106
    %v3128 = vpop.f32.mrf.mxu0
    %v3129 = vadd.f32 0.0, %v3128
    %3130 = vdwg.mxu0
    %v3131 = vadd.f32 %v3097, %v3126
    %v3132 = vadd.f32 %v3100, %v3129
    %v3134 = vsel %vm187, %v3016, 0
    %v3137 = vsel %vm187, %v3042, 0
    %3139 = vmatpush.msra.mxu0 0.0
    %3140 = vmatpush.msra.mxu0 0.0
    %3141 = vmatpush.msra.mxu0 0.0
    %3142 = vmatpush.msra.mxu0 0.0
    %3143 = vmatpush.msra.mxu0 0.0
    %3144 = vmatpush.msra.mxu0 0.0
    %3145 = vmatpush.msra.mxu0 0.0
    %3146 = vmatpush.msra.mxu0 0.0
    %3147 = vmatpush.msra.mxu0 0.0
    %3148 = vmatpush.msra.mxu0 0.0
    %3149 = vmatpush.msra.mxu0 0.0
    %3150 = vmatpush.msra.mxu0 0.0
    %3151 = vmatpush.msra.mxu0 0.0
    %3152 = vmatpush.msra.mxu0 0.0
    %3153 = vmatpush.msra.mxu0 0.0
    %3154 = vmatpush.msra.mxu0 %v2524
    %3155 = vmatmul.f32.gmra.mxu0 %v3134
    %v3156 = vpop.f32.mrf.mxu0
    %v3157 = vadd.f32 0.0, %v3156
    %3158 = vmatmul.f32.gmra.mxu0 %v3137
    %v3159 = vpop.f32.mrf.mxu0
    %v3160 = vadd.f32 0.0, %v3159
    %3161 = vdwg.mxu0
    %v3162 = vadd.f32 %v3131, %v3157
    %v3163 = vadd.f32 %v3132, %v3160
    %v3164 = vperm.slane %v2525, 0
    %v3165 = vadd.f32 %v3162, %v3164
    %v3166 = vadd.f32 %v3163, %v3164
    %v3167 = vadd.f32 %v2482, %v3165
    %v3168 = vadd.f32 %v2483, %v3166
    %v3169 = vsel %vm90, %v3167, 0.0
    %3170 = vadd.xlane.f32.xlu0 %v3169
    %v3171 = vpop.xlane.xlu0 %3170
    %v3172 = vsel %vm90, %v3168, 0.0
    %3173 = vadd.xlane.f32.xlu0 %v3172
    %v3174 = vpop.xlane.xlu0 %3173
    %v3175 = vmul.f32 %v3171, %v827
    %v3176 = vmul.f32 %v3174, %v827
    %v3177 = vsub.f32 %v3167, %v3175
    %v3178 = vsub.f32 %v3168, %v3176
    %v3179 = vmul.f32 %v3177, %v3177
    %v3180 = vmul.f32 %v3178, %v3178
    %v3181 = vsel %vm90, %v3179, 0.0
    %3182 = vadd.xlane.f32.xlu0 %v3181
    %v3183 = vpop.xlane.xlu0 %3182
    %v3184 = vsel %vm90, %v3180, 0.0
    %3185 = vadd.xlane.f32.xlu0 %v3184
    %v3186 = vpop.xlane.xlu0 %3185
    %v3187 = vmul.f32 %v3183, %v827
    %v3188 = vmul.f32 %v3186, %v827
    %v3189 = vadd.f32 %v3187, 1e-05
    %v3190 = vadd.f32 %v3188, 1e-05
    %v3191 = vrsqrt.pop %v3189
    %v3192 = vmul.f32 %v3191, %v3189
    %v3193 = vmul.f32 %v3192, %v3191
    %v3194 = vmul.f32 0.5, %v3193
    %v3195 = vsub.f32 1.5, %v3194
    %v3196 = vmul.f32 %v3191, %v3195
    %vm3197 = vweird.f32 %v3189
    %vm3198 = vweird.f32 %v3191
    %vm3199 = vmor %vm3197, %vm3198
    %v3200 = vsel %vm3199, %v3191, %v3196
    %v3201 = vrsqrt.pop %v3190
    %v3202 = vmul.f32 %v3201, %v3190
    %v3203 = vmul.f32 %v3202, %v3201
    %v3204 = vmul.f32 0.5, %v3203
    %v3205 = vsub.f32 1.5, %v3204
    %v3206 = vmul.f32 %v3201, %v3205
    %vm3207 = vweird.f32 %v3190
    %vm3208 = vweird.f32 %v3201
    %vm3209 = vmor %vm3207, %vm3208
    %v3210 = vsel %vm3209, %v3201, %v3206
    %v3211 = vmul.f32 %v3177, %v3200
    %v3212 = vmul.f32 %v3178, %v3210
    %v3213 = vperm.slane %v1734, 2
    %v3214 = vmul.f32 %v3211, %v3213
    %v3215 = vmul.f32 %v3212, %v3213
    %v3216 = vperm.slane %v1734, 3
    %v3217 = vadd.f32 %v3214, %v3216
    %v3218 = vadd.f32 %v3215, %v3216
    %v3219 = vld [vmem:[#allocation2 + $0x250] sm:$0xff]
    %v3220 = vld [vmem:[#allocation2 + $0x258] sm:$0xff]
    %v3221 = vld [vmem:[#allocation2 + $0x260] sm:$0xff]
    %v3222 = vld [vmem:[#allocation2 + $0x268] sm:$0xff]
    %v3223 = vld [vmem:[#allocation2 + $0x270] sm:$0x1]
    %v3224 = vperm.slane %v3223, 0
    %v3227 = vrot.slane %v3217, 7
    %v3228 = vrot.slane %v3218, 6
    %vm3229 = vcmask 1041409
    %v3230 = vsel %vm3229, %v3228, %v3227
    %v3231 = vsel %vm90, %v3230, 0
    %3233 = vmatpush.msra.mxu0 0.0
    %3234 = vmatpush.msra.mxu0 0.0
    %3235 = vmatpush.msra.mxu0 0.0
    %3236 = vmatpush.msra.mxu0 0.0
    %3237 = vmatpush.msra.mxu0 0.0
    %3238 = vmatpush.msra.mxu0 0.0
    %3239 = vmatpush.msra.mxu0 0.0
    %3240 = vmatpush.msra.mxu0 0.0
    %3241 = vmatpush.msra.mxu0 0.0
    %3242 = vmatpush.msra.mxu0 0.0
    %3243 = vmatpush.msra.mxu0 0.0
    %3244 = vmatpush.msra.mxu0 0.0
    %3245 = vmatpush.msra.mxu0 %v3222
    %3246 = vmatpush.msra.mxu0 %v3221
    %3247 = vmatpush.msra.mxu0 %v3220
    %3248 = vmatpush.msra.mxu0 %v3219
    %3249 = vmatmul.f32.gmra.mxu0 %v3231
    %v3250 = vpop.f32.mrf.mxu0
    %v3251 = vadd.f32 %v3224, %v3250
    %3252 = vdwg.mxu0
    %v3253 = vmax.f32 %v3251, 0.0
    %v3254 = vld [vmem:[#allocation2 + $0x278] sm:$0xff]
    %v3255 = vld [vmem:[#allocation2 + $0x280] sm:$0xff]
    %v3256 = vld [vmem:[#allocation2 + $0x288] sm:$0xff]
    %v3257 = vld [vmem:[#allocation2 + $0x290] sm:$0xff]
    %v3258 = vld [vmem:[#allocation2 + $0x298] sm:$0xff]
    %v3259 = vld [vmem:[#allocation2 + $0x2a0] sm:$0xff]
    %v3260 = vld [vmem:[#allocation2 + $0x2a8] sm:$0xff]
    %v3261 = vld [vmem:[#allocation2 + $0x2b0] sm:$0xff]
    %v3262 = vld [vmem:[#allocation2 + $0x2b8] sm:$0x1]
    %v3263 = vperm.slane %v3262, 0
    %v3265 = vsel %vm1652, %v3253, 0
    %3267 = vmatpush.msra.mxu0 0.0
    %3268 = vmatpush.msra.mxu0 0.0
    %3269 = vmatpush.msra.mxu0 0.0
    %3270 = vmatpush.msra.mxu0 0.0
    %3271 = vmatpush.msra.mxu0 0.0
    %3272 = vmatpush.msra.mxu0 0.0
    %3273 = vmatpush.msra.mxu0 0.0
    %3274 = vmatpush.msra.mxu0 0.0
    %3275 = vmatpush.msra.mxu0 %v3261
    %3276 = vmatpush.msra.mxu0 %v3260
    %3277 = vmatpush.msra.mxu0 %v3259
    %3278 = vmatpush.msra.mxu0 %v3258
    %3279 = vmatpush.msra.mxu0 %v3257
    %3280 = vmatpush.msra.mxu0 %v3256
    %3281 = vmatpush.msra.mxu0 %v3255
    %3282 = vmatpush.msra.mxu0 %v3254
    %3283 = vmatmul.f32.gmra.mxu0 %v3265
    %v3284 = vpop.f32.mrf.mxu0
    %v3285 = vadd.f32 %v3263, %v3284
    %3286 = vdwg.mxu0
    %v3288 = vrot.slane %v3285, 1
    %v3289 = vrot.slane %v3285, 2
    %v3292 = vadd.f32 %v3217, %v3288
    %v3293 = vadd.f32 %v3218, %v3289
    %v3296 = vrot.slane %v3293, 7
    %vm3299 = vcmask 261127
    %v3300 = vsel %vm3299, %v3292, 0.0
    %3301 = vadd.xlane.f32.xlu0 %v3300
    %v3302 = vpop.xlane.xlu0 %3301
    %vm3303 = vcmask 253952
    %v3304 = vsel %vm3303, %v3296, 0.0
    %3305 = vadd.xlane.f32.xlu0 %v3304
    %v3306 = vpop.xlane.xlu0 %3305
    %v3307 = vmul.f32 %v3302, %v827
    %v3308 = vmul.f32 %v3306, %v827
    %v3311 = vrot.slane %v3308, 1
    %v3314 = vsub.f32 %v3292, %v3307
    %v3315 = vsub.f32 %v3293, %v3311
    %v3316 = vmul.f32 %v3314, %v3314
    %v3317 = vmul.f32 %v3315, %v3315
    %v3320 = vrot.slane %v3317, 7
    %v3323 = vsel %vm3299, %v3316, 0.0
    %3324 = vadd.xlane.f32.xlu0 %v3323
    %v3325 = vpop.xlane.xlu0 %3324
    %v3326 = vsel %vm3303, %v3320, 0.0
    %3327 = vadd.xlane.f32.xlu0 %v3326
    %v3328 = vpop.xlane.xlu0 %3327
    %v3329 = vmul.f32 %v3325, %v827
    %v3330 = vmul.f32 %v3328, %v827
    %v3331 = vadd.f32 %v3329, 1e-05
    %v3332 = vadd.f32 %v3330, 1e-05
    %v3333 = vrsqrt.pop %v3331
    %v3334 = vmul.f32 %v3333, %v3331
    %v3335 = vmul.f32 %v3334, %v3333
    %v3336 = vmul.f32 0.5, %v3335
    %v3337 = vsub.f32 1.5, %v3336
    %v3338 = vmul.f32 %v3333, %v3337
    %vm3339 = vweird.f32 %v3331
    %vm3340 = vweird.f32 %v3333
    %vm3341 = vmor %vm3339, %vm3340
    %v3342 = vsel %vm3341, %v3333, %v3338
    %v3343 = vrsqrt.pop %v3332
    %v3344 = vmul.f32 %v3343, %v3332
    %v3345 = vmul.f32 %v3344, %v3343
    %v3346 = vmul.f32 0.5, %v3345
    %v3347 = vsub.f32 1.5, %v3346
    %v3348 = vmul.f32 %v3343, %v3347
    %vm3349 = vweird.f32 %v3332
    %vm3350 = vweird.f32 %v3343
    %vm3351 = vmor %vm3349, %vm3350
    %v3352 = vsel %vm3351, %v3343, %v3348
    %v3355 = vrot.slane %v3352, 1
    %v3358 = vmul.f32 %v3314, %v3342
    %v3359 = vmul.f32 %v3315, %v3355
    %v3360 = vperm.slane %v1734, 4
    %v3361 = vmul.f32 %v3358, %v3360
    %v3362 = vmul.f32 %v3359, %v3360
    %v3363 = vperm.slane %v1734, 5
    %v3364 = vadd.f32 %v3361, %v3363
    %v3365 = vadd.f32 %v3362, %v3363
    %v3366 = vld [vmem:[#allocation2 + $0x40] sm:$0xff]
    %v3367 = vld [vmem:[#allocation2 + $0x48] sm:$0xff]
    %v3368 = vld [vmem:[#allocation2 + $0x50] sm:$0xff]
    %v3369 = vld [vmem:[#allocation2 + $0x58] sm:$0xff]
    %v3370 = vld [vmem:[#allocation2 + $0x60] sm:$0x1]
    %v3371 = vperm.slane %v3370, 0
    %v3374 = vrot.slane %v3364, 7
    %v3375 = vrot.slane %v3365, 6
    %v3376 = vsel %vm3229, %v3375, %v3374
    %v3377 = vsel %vm90, %v3376, 0
    %3379 = vmatpush.msra.mxu0 0.0
    %3380 = vmatpush.msra.mxu0 0.0
    %3381 = vmatpush.msra.mxu0 0.0
    %3382 = vmatpush.msra.mxu0 0.0
    %3383 = vmatpush.msra.mxu0 0.0
    %3384 = vmatpush.msra.mxu0 0.0
    %3385 = vmatpush.msra.mxu0 0.0
    %3386 = vmatpush.msra.mxu0 0.0
    %3387 = vmatpush.msra.mxu0 0.0
    %3388 = vmatpush.msra.mxu0 0.0
    %3389 = vmatpush.msra.mxu0 0.0
    %3390 = vmatpush.msra.mxu0 0.0
    %3391 = vmatpush.msra.mxu0 %v3369
    %3392 = vmatpush.msra.mxu0 %v3368
    %3393 = vmatpush.msra.mxu0 %v3367
    %3394 = vmatpush.msra.mxu0 %v3366
    %3395 = vmatmul.f32.gmra.mxu0 %v3377
    %v3396 = vpop.f32.mrf.mxu0
    %v3397 = vadd.f32 %v3371, %v3396
    %3398 = vdwg.mxu0
    %3399 = vst [vmem:[#allocation5] sm:$0x3] %v3397
    // Predicated region
    $region14: #{mr_teddy_td_forward.1} parent=1 // pred_check
      _
    $region15: #{mr_teddy_td_forward.1} parent=1 // pred_check_branch
      %3401 = sbr.rel (0) target = $region17
    $region16: #{mr_teddy_td_forward.1} parent=1 // pred_region
      %3403 = vsyncadd [#allocation4], 0
      %s3405 = sshll.u32 [#allocation5], 4
      %s3406 = int_to_ptr.vmem [resolvable:$true] %s3405
      %s3407 = sshll.u32 %s2, 4
      %s3408 = int_to_ptr.hbm [resolvable:$true] %s3407
      %3410 = dma.vmem_to_hbm [thread:$0]  %s3406, 32, %s3408, [#allocation4]
    $region17: #{mr_teddy_td_forward.1} parent=1 // pred_fallthru
      _
    // Predicated region
    $region18: #{mr_teddy_td_forward.1} parent=1 // pred_check
      _
    $region19: #{mr_teddy_td_forward.1} parent=1 // pred_check_branch
      %3412 = sbr.rel (0) target = $region21
    $region20: #{mr_teddy_td_forward.1} parent=1 // pred_region
      %3414 = dma.done [#allocation4], 32
    $region21: #{mr_teddy_td_forward.1} parent=1 // pred_fallthru
      _
    %3415 = vsyncpa [#allocation3], 1
    %3416 = vsyncpa [#allocation4], 1

</llo_original>
